<compile_context>
chip_gen: v5e
topology: v5e:2x2
jax: 0.10.0
libtpu: 0.0.40
codegen_flags: <defaults>
</compile_context>

<pallas_src>
import functools

import jax
import jax.numpy as jnp
from jax import lax
from jax.experimental import pallas as pl
from jax.experimental.pallas import tpu as pltpu

# --------------------------------------------------------------------------- constants
_BN_EVAL_SCALE = 1.0 / (1.0 + 1e-3) ** 0.5   # BatchNorm1d(eps=1e-3), eval @ init
_LOG2PI = 1.8378770664093453
_OUT_LANES = 128                              # lane-dense output slab width

# --------------------------------------------------------------------------- lgamma
_LANCZOS_G = 7.0
_LANCZOS_C0 = 0.99999999999980993
_LANCZOS_C = (676.5203681218851, -1259.1392167224028, 771.32342877765313,
              -176.61502916214059, 12.507343278686905, -0.13857109526572012,
              9.9843695780195716e-6, 1.5056327351493116e-7)


def _poly_mul(a, b):
    out = [0.0] * (len(a) + len(b) - 1)
    for i, ai in enumerate(a):
        for j, bj in enumerate(b):
            out[i + j] += ai * bj
    return out


def _build_lanczos_rational():
    # A(u) = c0 + sum_i c_i/(u+i)  ==  P(u)/Q(u),  Q(u) = prod_i (u+i).
    q = [1.0]
    for i in range(1, len(_LANCZOS_C) + 1):
        q = _poly_mul(q, [float(i), 1.0])
    p = [_LANCZOS_C0 * c for c in q]
    for i, ci in enumerate(_LANCZOS_C, start=1):
        term = [1.0]
        for j in range(1, len(_LANCZOS_C) + 1):
            if j != i:
                term = _poly_mul(term, [float(j), 1.0])
        for k, t in enumerate(term):
            p[k] += ci * t
    return tuple(p), tuple(q)


_LANCZOS_P, _LANCZOS_Q = _build_lanczos_rational()


def _lgamma(z):
    """log Gamma(z) for strictly positive z (Lanczos g=7, one rational P/Q).
    TODO(synk): add a Stirling branch for very large count values (z >> 30)."""
    u = z - 1.0
    p = jnp.full_like(u, _LANCZOS_P[-1])
    q = jnp.full_like(u, _LANCZOS_Q[-1])
    for cp, cq in zip(_LANCZOS_P[-2::-1], _LANCZOS_Q[-2::-1]):
        p = p * u + cp
        q = q * u + cq
    t = u + (_LANCZOS_G + 0.5)
    return 0.9189385332046727 + (u + 0.5) * jnp.log(t) - t + jnp.log(p / q)


def _softplus(z):
    return jnp.maximum(z, 0.0) + jnp.log(1.0 + jnp.exp(-jnp.abs(z)))


def _normal_logprob(v, m, var):
    return -0.5 * (_LOG2PI + jnp.log(var)) - (v - m) * (v - m) / (2.0 * var)


def _sum2(m):
    # total sum as a (1,1) array (lane reduce then sublane reduce)
    return jnp.sum(jnp.sum(m, axis=-1, keepdims=True), axis=0, keepdims=True)


def _imq_mmd(X, Y, h_dim):
    """imq_kernel(X, Y, h_dim) from the reference, incl. its quirks
    (norms_y = X.sum(1), scalar (1,1) 'prods').  Row broadcasts via tiny NT
    matmuls (no sub-tile transposes); exact divides (C+dists may be small)."""
    f32 = jnp.float32
    B = X.shape[0]
    nt = (((1,), (1,)), ((), ()))
    x2, y2 = X * X, Y * Y
    p2x_col = jnp.sum(x2, axis=-1, keepdims=True)                         # (B,1)
    p2y_col = jnp.sum(y2, axis=-1, keepdims=True)
    p2x_row = lax.dot_general(jnp.ones(X.shape, f32), x2, nt,
                              preferred_element_type=f32)                 # (B,B): [i,j]=p2x[j]
    p2y_row = lax.dot_general(jnp.ones(Y.shape, f32), y2, nt,
                              preferred_element_type=f32)
    sx = jnp.sum(X, axis=-1, keepdims=True)            # norms_x (== norms_y in the reference)
    s = _sum2(sx * sx)                                  # prods_x == prods_y == dot_prd  (1,1)
    dists_x = p2x_col + p2x_row - 2.0 * s
    dists_y = p2y_col + p2y_row - 2.0 * s
    dists_c = p2y_col + p2x_row - 2.0 * s
    ri = lax.broadcasted_iota(jnp.int32, (B, B), 0)
    ci = lax.broadcasted_iota(jnp.int32, (B, B), 1)
    off_diag = (ri != ci).astype(f32)
    stats = jnp.zeros((1, 1), f32)
    for scale in (0.1, 0.2, 0.5, 1.0, 2.0, 5.0, 10.0):
        Cc = 2.0 * h_dim * 1.0 * scale
        res1 = off_diag * (Cc / (Cc + dists_x) + Cc / (Cc + dists_y))
        res2 = Cc / (Cc + dists_c)
        stats = stats + _sum2(res1) * (1.0 / (B - 1)) - _sum2(res2) * (2.0 / B)
    return stats


# --------------------------------------------------------------------------- slab layout
def _round8(n):
    return -(-n // 8) * 8


def _slab_layout(H, L, C):
    """Row layout of the packed small-parameter slab (SLAB_W = 2H lanes)."""
    entries = [
        ("enc_fc_b",    1,      2 * H),
        ("enc_head_w",  2 * H,  2 * L + 2),
        ("enc_head_b",  1,      2 * L + 2),
        ("lat_fc_w",    L,      2 * H),
        ("lat_fc_b",    1,      2 * H),
        ("cls_out_w",   H,      C),
        ("cls_out_b",   1,      C),
        ("e21_fc_wz",   L,      H),
        ("e21_fc_b",    1,      H),
        ("e21_wy",      C,      H),
        ("e21_mv_w",    H,      2 * L),
        ("e21_mv_b",    1,      2 * L),
        ("d12_fc_wz",   L,      H),
        ("d12_fc_b",    1,      H),
        ("d12_wy",      C,      H),
        ("d12_mv_w",    H,      2 * L),
        ("d12_mv_b",    1,      2 * L),
        ("log_y_prior", 1,      C),
    ]
    layout, row = {}, 0
    for name, nr, nc in entries:
        layout[name] = (row, nr, nc)
        row += _round8(nr)
    return layout, _round8(row), 2 * H


# --------------------------------------------------------------------------- fused kernel
def _scanvi_fused_kernel(x_ref, aux_ref, epsz2_ref, zfake_ref, slab_ref,
                         enc_w_ref, dec_w_ref, dec_b_ref, zc_ref,
                         out_ref, z1_scr,
                         *, mode, layout, dims, tb, nb):
    H, L, C, G = dims
    f32, bf16 = jnp.float32, jnp.bfloat16

    def P(name):                       # static slice of the packed slab
        r0, nr, nc = layout[name]
        return slab_ref[r0:r0 + nr, 0:nc]

    def Pb(name):                      # bf16 view of a slab weight for the MXU
        return P(name).astype(bf16)

    def mm(a, b_bf16):                 # bf16 MXU operands, f32 accumulate
        return jnp.dot(a.astype(bf16), b_bf16, preferred_element_type=f32)

    i = pl.program_id(0)
    x = x_ref[...]                                      # (TB, G)
    xl = jnp.log(1.0 + x)                               # log_variational

    aux = aux_ref[...]                                  # (TB, L+3)
    eps_z = aux[:, 0:L]
    eps_l = aux[:, L:L + 1]
    llm = aux[:, L + 1:L + 2]
    llv = aux[:, L + 2:L + 3]

    # ---- fused z / library encoders: one (TB,G)x(G,2H) matmul + block-diag heads
    enc_h = jnp.maximum((mm(xl, enc_w_ref[...]) + P("enc_fc_b")) * _BN_EVAL_SCALE, 0.0)
    mv = mm(enc_h, Pb("enc_head_w")) + P("enc_head_b")  # (TB, 2L+2)
    qz1_m = mv[:, 0:L]
    qz1_v = jnp.exp(mv[:, L:2 * L]) + 1e-4
    ql_m = mv[:, 2 * L:2 * L + 1]
    ql_v = jnp.exp(mv[:, 2 * L + 1:2 * L + 2]) + 1e-4
    z1 = qz1_m + jnp.sqrt(qz1_v) * eps_z                # Normal(qz_m, sqrt(qz_v)).rsample()
    library = ql_m + jnp.sqrt(ql_v) * eps_l

    # ---- fused DecoderSCVI-FC / Classifier-FC on z1 ----------------------------
    lat_h = jnp.maximum((mm(z1, Pb("lat_fc_w")) + P("lat_fc_b")) * _BN_EVAL_SCALE, 0.0)
    h_d = lat_h[:, 0:H]
    h_c = lat_h[:, H:2 * H]

    # classifier probabilities (exact softmax; tiny (TB, C))
    logits_c = mm(h_c, Pb("cls_out_w")) + P("cls_out_b")
    mc = jnp.max(logits_c, axis=-1, keepdims=True)
    ec = jnp.exp(logits_c - mc)
    probs = ec / jnp.sum(ec, axis=-1, keepdims=True)    # (TB, C)

    # ---- decoder heads: one (TB,H)x(H,2G) matmul (scale-logits | dropout-logits)
    dec_out = mm(h_d, dec_w_ref[...]) + dec_b_ref[...]  # (TB, 2G)
    sc_logit = dec_out[:, 0:G]
    pi = dec_out[:, G:2 * G]

    # ---- ZINB reconstruction loss (log-softmax formulation, hoisted constants)
    eps = 1e-8
    theta = zc_ref[0:1, :]                              # exp(px_r)
    log_theta_eps = zc_ref[1:2, :]
    lg_theta = zc_ref[2:3, :]
    ms = jnp.max(sc_logit, axis=-1, keepdims=True)
    lse = ms + jnp.log(jnp.sum(jnp.exp(sc_logit - ms), axis=-1, keepdims=True))
    log_rate = library + (sc_logit - lse)               # log(px_rate)  (eps dropped vs ref)
    px_rate = jnp.exp(log_rate)
    softplus_pi = _softplus(-pi)
    log_theta_mu_eps = jnp.log(theta + px_rate + eps)
    pi_theta_log = -pi + theta * (log_theta_eps - log_theta_mu_eps)
    case_zero = _softplus(pi_theta_log) - softplus_pi
    case_non_zero = (-softplus_pi + pi_theta_log
                     + x * (log_rate - log_theta_mu_eps)
                     + _lgamma(x + theta) - lg_theta - _lgamma(x + 1.0))
    res = jnp.where(x < eps, case_zero, case_non_zero)
    reconst = -jnp.sum(res, axis=-1, keepdims=True)     # (TB, 1)

    # ---- batched label marginalisation (M = C*TB rows, single matmuls) ---------
    base21 = mm(z1, Pb("e21_fc_wz")) + P("e21_fc_b")    # (TB, H)
    wy21 = P("e21_wy")                                  # (C, H)  one-hot label rows
    wy12 = P("d12_wy")

    def per_label_rows(w_rows):                         # (C,H) -> (C*TB, H)
        return jnp.concatenate(
            [jnp.broadcast_to(w_rows[c:c + 1, :], (tb, w_rows.shape[1]))
             for c in range(C)], axis=0)

    base21_big = jnp.concatenate([base21] * C, axis=0)  # (C*TB, H)
    wy21_big = per_label_rows(wy21)
    wy12_big = per_label_rows(wy12)
    eps2 = jnp.concatenate([epsz2_ref[c] for c in range(C)], axis=0)   # (C*TB, L)

    h21 = jnp.maximum((base21_big + wy21_big) * _BN_EVAL_SCALE, 0.0)
    mv2 = mm(h21, Pb("e21_mv_w")) + P("e21_mv_b")       # (C*TB, 2L)
    qz2_m = mv2[:, 0:L]
    qz2_v = jnp.exp(mv2[:, L:2 * L]) + 1e-4
    z2 = qz2_m + jnp.sqrt(qz2_v) * eps2

    h12 = jnp.maximum((mm(z2, Pb("d12_fc_wz")) + P("d12_fc_b") + wy12_big)
                      * _BN_EVAL_SCALE, 0.0)
    mv1 = mm(h12, Pb("d12_mv_w")) + P("d12_mv_b")
    pz1_m = mv1[:, 0:L]
    pz1_v = jnp.exp(mv1[:, L:2 * L])                    # NOTE: no +1e-4 floor (matches reference)

    z1_big = jnp.concatenate([z1] * C, axis=0)
    unweight = -jnp.sum(_normal_logprob(z1_big, pz1_m, pz1_v), axis=-1, keepdims=True)
    klz2 = jnp.sum(-0.5 * jnp.log(qz2_v) + 0.5 * (qz2_v + qz2_m * qz2_m) - 0.5,
                   axis=-1, keepdims=True)              # (C*TB, 1)

    acc_u = jnp.zeros((tb, 1), f32)
    acc_k = jnp.zeros((tb, 1), f32)
    for c in range(C):                                  # static sublane slices
        p_c = probs[:, c:c + 1]
        acc_u = acc_u + p_c * unweight[c * tb:(c + 1) * tb, :]
        acc_k = acc_k + p_c * klz2[c * tb:(c + 1) * tb, :]

    loss_z1_weight = jnp.sum(_normal_logprob(z1, qz1_m, qz1_v), axis=-1, keepdims=True)
    reconst_total = reconst + loss_z1_weight + acc_u     # (TB, 1)

    # ---- mode branch + lane-dense output slab ----------------------------------
    lane = lax.broadcasted_iota(jnp.int32, out_ref.shape, 1)
    if mode == "scanvi":
        kl_l = (0.5 * jnp.log(llv / ql_v)
                + (ql_v + (ql_m - llm) ** 2) / (2.0 * llv) - 0.5)          # (TB,1)
        kl_cat = jnp.sum(probs * (jnp.log(probs) - P("log_y_prior")),
                         axis=-1, keepdims=True)                           # KL(Cat||Cat)
        kl_col = acc_k + kl_cat + kl_l
        out_ref[...] = jnp.where(lane == 0, reconst_total,
                                 jnp.where(lane == 1, kl_col, 0.0))
    else:  # 'dgm4sca': whole-batch IMQ-MMD on the last grid step
        out_ref[...] = jnp.where(lane == 0, reconst_total, 0.0)
        row0 = pl.multiple_of(i * tb, tb)
        z1_scr[pl.ds(row0, tb), :] = z1                  # accumulate z1 across tiles

        @pl.when(i == nb - 1)
        def _():
            mmd = _imq_mmd(z1_scr[...], zfake_ref[...], h_dim=10)          # (1,1)
            out_ref[...] = jnp.where(lane == 1, mmd, out_ref[...])


# --------------------------------------------------------------------------- wrapper
def scanvi_forward(packed, x, local_l_mean, local_l_var, noise, mode="dgm4sca",
                   batch_tile=8):
    """SCANVI.forward (y=None branch). Returns (reconst_loss, kl_divergence, 0.0)."""
    if mode not in ("scanvi", "dgm4sca"):
        raise ValueError("mode must be 'scanvi' or 'dgm4sca'")
    H, L, C = packed["dims"]
    B, G = x.shape
    TB = batch_tile if (B % batch_tile == 0 and batch_tile % 8 == 0) else B
    NB = B // TB

    aux = jnp.concatenate([noise["eps_z"], noise["eps_l"],
                           local_l_mean, local_l_var], axis=1)              # (B, L+3)
    eps_z2_3d = noise["eps_z2"].reshape(C, B, L)                            # label-major
    z_fake = noise["z_fake"]
    slab = packed["slab"]
    enc_w = packed["enc_fc_w"]
    dec_w = packed["dec_out_w"]
    dec_b = packed["dec_out_b"]
    zc = packed["zinb_const"]

    kernel = functools.partial(_scanvi_fused_kernel, mode=mode,
                               layout=packed["layout"], dims=(H, L, C, G),
                               tb=TB, nb=NB)
    out = pl.pallas_call(
        kernel,
        out_shape=jax.ShapeDtypeStruct((B, _OUT_LANES), jnp.float32),
        grid=(NB,),
        in_specs=[
            pl.BlockSpec((TB, G), lambda i: (i, 0)),          # x          (batch-tiled)
            pl.BlockSpec((TB, L + 3), lambda i: (i, 0)),      # aux        (batch-tiled)
            pl.BlockSpec((C, TB, L), lambda i: (0, i, 0)),    # eps_z2     (batch-tiled)
            pl.BlockSpec(z_fake.shape, lambda i: (0, 0)),     # z_fake     (whole batch)
            pl.BlockSpec(slab.shape, lambda i: (0, 0)),       # packed small params
            pl.BlockSpec(enc_w.shape, lambda i: (0, 0)),      # (G, 2H) bf16
            pl.BlockSpec(dec_w.shape, lambda i: (0, 0)),      # (H, 2G) bf16
            pl.BlockSpec(dec_b.shape, lambda i: (0, 0)),      # (1, 2G) f32
            pl.BlockSpec(zc.shape, lambda i: (0, 0)),         # (3, G) ZINB constants
        ],
        out_specs=pl.BlockSpec((TB, _OUT_LANES), lambda i: (i, 0)),
        scratch_shapes=[pltpu.VMEM((B, L), jnp.float32)],     # z1 accumulator (dgm4sca)
        compiler_params=pltpu.CompilerParams(
            dimension_semantics=(("parallel",) if mode == "scanvi" else ("arbitrary",)),
            vmem_limit_bytes=48 * 1024 * 1024),
    )(x, aux, eps_z2_3d, z_fake, slab, enc_w, dec_w, dec_b, zc)

    reconst = out[:, 0]
    kl = out[:, 1] if mode == "scanvi" else out[B - 1, 1]
    return reconst, kl, 0.0


# --------------------------------------------------------------------------- params
def init_params(key, n_input, n_hidden, n_latent, n_labels):
    keys = iter(jax.random.split(key, 64))
    params = {}

    def add_linear(name, din, dout):
        bound = 1.0 / float(din) ** 0.5
        params[name + "_w"] = jax.random.uniform(next(keys), (din, dout), jnp.float32, -bound, bound)
        params[name + "_b"] = jax.random.uniform(next(keys), (1, dout), jnp.float32, -bound, bound)

    add_linear("ze_fc", n_input, n_hidden)                 # z_encoder FCLayers
    add_linear("ze_m", n_hidden, n_latent)
    add_linear("ze_v", n_hidden, n_latent)
    add_linear("le_fc", n_input, n_hidden)                 # l_encoder FCLayers
    add_linear("le_m", n_hidden, 1)
    add_linear("le_v", n_hidden, 1)
    add_linear("dec_fc", n_latent, n_hidden)               # DecoderSCVI FCLayers (n_batch=0)
    add_linear("dec_scale", n_hidden, n_input)
    add_linear("dec_drop", n_hidden, n_input)
    add_linear("cls_fc", n_latent, n_hidden)               # Classifier
    add_linear("cls_out", n_hidden, n_labels)
    add_linear("e21_fc", n_latent + n_labels, n_hidden)    # encoder_z2_z1 (one-hot appended)
    add_linear("e21_m", n_hidden, n_latent)
    add_linear("e21_v", n_hidden, n_latent)
    add_linear("d12_fc", n_latent + n_labels, n_hidden)    # decoder_z1_z2
    add_linear("d12_m", n_hidden, n_latent)
    add_linear("d12_v", n_hidden, n_latent)
    params["px_r"] = jax.random.normal(next(keys), (1, n_input), jnp.float32)
    params["y_prior"] = jnp.full((1, n_labels), 1.0 / n_labels, jnp.float32)
    return params


def pack_for_kernel(params, n_hidden, n_latent, n_labels):
    """Host-side packing: fuse paired weights, build the small-parameter slab,
    ship big weights in bf16, precompute per-gene ZINB constants."""
    H, L, C = n_hidden, n_latent, n_labels
    f32 = jnp.float32
    layout, slab_rows, slab_w = _slab_layout(H, L, C)

    pieces = {}
    pieces["enc_fc_b"] = jnp.concatenate([params["ze_fc_b"], params["le_fc_b"]], axis=1)
    eh = jnp.zeros((2 * H, 2 * L + 2), f32)                # block-diag (ze_m|ze_v ; le_m|le_v)
    eh = eh.at[:H, :2 * L].set(jnp.concatenate([params["ze_m_w"], params["ze_v_w"]], axis=1))
    eh = eh.at[H:, 2 * L:].set(jnp.concatenate([params["le_m_w"], params["le_v_w"]], axis=1))
    pieces["enc_head_w"] = eh
    pieces["enc_head_b"] = jnp.concatenate(
        [params["ze_m_b"], params["ze_v_b"], params["le_m_b"], params["le_v_b"]], axis=1)
    pieces["lat_fc_w"] = jnp.concatenate([params["dec_fc_w"], params["cls_fc_w"]], axis=1)
    pieces["lat_fc_b"] = jnp.concatenate([params["dec_fc_b"], params["cls_fc_b"]], axis=1)
    pieces["cls_out_w"] = params["cls_out_w"]
    pieces["cls_out_b"] = params["cls_out_b"]
    pieces["e21_fc_wz"] = params["e21_fc_w"][:L]
    pieces["e21_wy"] = params["e21_fc_w"][L:]
    pieces["e21_fc_b"] = params["e21_fc_b"]
    pieces["e21_mv_w"] = jnp.concatenate([params["e21_m_w"], params["e21_v_w"]], axis=1)
    pieces["e21_mv_b"] = jnp.concatenate([params["e21_m_b"], params["e21_v_b"]], axis=1)
    pieces["d12_fc_wz"] = params["d12_fc_w"][:L]
    pieces["d12_wy"] = params["d12_fc_w"][L:]
    pieces["d12_fc_b"] = params["d12_fc_b"]
    pieces["d12_mv_w"] = jnp.concatenate([params["d12_m_w"], params["d12_v_w"]], axis=1)
    pieces["d12_mv_b"] = jnp.concatenate([params["d12_m_b"], params["d12_v_b"]], axis=1)
    pieces["log_y_prior"] = jnp.log(params["y_prior"])

    slab = jnp.zeros((slab_rows, slab_w), f32)
    for name, (r0, nr, nc) in layout.items():
        slab = slab.at[r0:r0 + nr, :nc].set(pieces[name].astype(f32))

    enc_fc_w = jnp.concatenate([params["ze_fc_w"], params["le_fc_w"]],
                               axis=1).astype(jnp.bfloat16)                # (G, 2H)
    dec_out_w = jnp.concatenate([params["dec_scale_w"], params["dec_drop_w"]],
                                axis=1).astype(jnp.bfloat16)               # (H, 2G)
    dec_out_b = jnp.concatenate([params["dec_scale_b"], params["dec_drop_b"]], axis=1)
    theta = jnp.exp(params["px_r"])                                        # dispersion='gene'
    zinb_const = jnp.concatenate([theta, jnp.log(theta + 1e-8), lax.lgamma(theta)],
                                 axis=0)                                   # (3, G)
    return dict(slab=slab, enc_fc_w=enc_fc_w, dec_out_w=dec_out_w,
                dec_out_b=dec_out_b, zinb_const=zinb_const,
                layout=layout, dims=(H, L, C))


# --------------------------------------------------------------------------- pure-JAX reference
def _log_zinb_ref(x, mu, theta, pi, eps=1e-8):
    softplus_pi = _softplus(-pi)
    log_theta_eps = jnp.log(theta + eps)
    log_theta_mu_eps = jnp.log(theta + mu + eps)
    pi_theta_log = -pi + theta * (log_theta_eps - log_theta_mu_eps)
    case_zero = _softplus(pi_theta_log) - softplus_pi
    case_non_zero = (-softplus_pi + pi_theta_log
                     + x * (jnp.log(mu + eps) - log_theta_mu_eps)
                     + lax.lgamma(x + theta) - lax.lgamma(theta) - lax.lgamma(x + 1.0))
    return ((x < eps).astype(jnp.float32) * case_zero
            + (x > eps).astype(jnp.float32) * case_non_zero)


def _imq_ref(X, Y, h_dim):
    B = X.shape[0]
    p2x = jnp.sum(X * X, axis=1)[None, :]
    nx = jnp.sum(X, axis=1)[None, :]
    prods_x = nx @ nx.T
    dists_x = p2x + p2x.T - 2.0 * prods_x
    p2y = jnp.sum(Y * Y, axis=1)[None, :]
    ny = nx                                    # reference quirk: norms_y = X.sum(1)
    prods_y = ny @ ny.T
    dists_y = p2y + p2y.T - 2.0 * prods_y
    dot_prd = nx @ ny.T
    dists_c = p2x + p2y.T - 2.0 * dot_prd
    stats = 0.0
    eye = jnp.eye(B, dtype=jnp.float32)
    for scale in (0.1, 0.2, 0.5, 1.0, 2.0, 5.0, 10.0):
        C = 2.0 * h_dim * 1.0 * scale
        res1 = ((1.0 - eye) * (C / (C + dists_x) + C / (C + dists_y))).sum() / (B - 1)
        res2 = (C / (C + dists_c)).sum() * 2.0 / B
        stats = stats + res1 - res2
    return stats


def _scanvi_forward_ref(params, x, llm, llv, noise, mode):
    bf16, f32 = jnp.bfloat16, jnp.float32
    B = x.shape[0]
    C = params["y_prior"].shape[1]

    def lin(h, name):
        return (jnp.dot(h.astype(bf16), params[name + "_w"].astype(bf16),
                        preferred_element_type=f32) + params[name + "_b"])

    def fc(h, name):
        return jnp.maximum(lin(h, name) * _BN_EVAL_SCALE, 0.0)

    xl = jnp.log(1.0 + x)
    h_z = fc(xl, "ze_fc")
    qz1_m = lin(h_z, "ze_m")
    qz1_v = jnp.exp(lin(h_z, "ze_v")) + 1e-4
    z1 = qz1_m + jnp.sqrt(qz1_v) * noise["eps_z"]
    h_l = fc(xl, "le_fc")
    ql_m = lin(h_l, "le_m")
    ql_v = jnp.exp(lin(h_l, "le_v")) + 1e-4
    library = ql_m + jnp.sqrt(ql_v) * noise["eps_l"]
    h_d = fc(z1, "dec_fc")
    px_scale = jax.nn.softmax(lin(h_d, "dec_scale"), axis=-1)
    px_dropout = lin(h_d, "dec_drop")
    px_rate = jnp.exp(library) * px_scale
    theta = jnp.exp(params["px_r"])
    reconst = -jnp.sum(_log_zinb_ref(x, px_rate, theta, px_dropout), axis=-1)

    ys = jax.nn.one_hot(jnp.repeat(jnp.arange(C), B), C, dtype=f32)
    z1s = jnp.tile(z1, (C, 1))
    h21 = fc(jnp.concatenate([z1s, ys], axis=-1), "e21_fc")
    qz2_m = lin(h21, "e21_m")
    qz2_v = jnp.exp(lin(h21, "e21_v")) + 1e-4
    z2 = qz2_m + jnp.sqrt(qz2_v) * noise["eps_z2"]
    h12 = fc(jnp.concatenate([z2, ys], axis=-1), "d12_fc")
    pz1_m = lin(h12, "d12_m")
    pz1_v = jnp.exp(lin(h12, "d12_v"))

    def nlogprob(v, m, var):
        return -0.5 * (_LOG2PI + jnp.log(var)) - (v - m) ** 2 / (2.0 * var)

    kl_z2 = jnp.sum(-0.5 * jnp.log(qz2_v) + 0.5 * (qz2_v + qz2_m ** 2) - 0.5, axis=1)
    loss_z1_unweight = -jnp.sum(nlogprob(z1s, pz1_m, pz1_v), axis=-1)
    loss_z1_weight = jnp.sum(nlogprob(z1, qz1_m, qz1_v), axis=-1)
    kl_l = jnp.sum(0.5 * jnp.log(llv / ql_v) + (ql_v + (ql_m - llm) ** 2) / (2.0 * llv) - 0.5,
                   axis=1)
    h_c = fc(z1, "cls_fc")
    probs = jax.nn.softmax(lin(h_c, "cls_out"), axis=-1)
    reconst = reconst + loss_z1_weight + jnp.sum(loss_z1_unweight.reshape(C, B).T * probs, axis=1)
    if mode == "scanvi":
        kl = jnp.sum(kl_z2.reshape(C, B).T * probs, axis=1)
        kl = kl + jnp.sum(probs * (jnp.log(probs) - jnp.log(params["y_prior"])), axis=-1)
        kl = kl + kl_l
    else:
        kl = _imq_ref(z1, noise["z_fake"], 10)
    return reconst, kl


# ---------------------------------------------------------------------------
if __name__ == "__main__":
    B, G, H, L, C = 16, 256, 128, 10, 4      # batch, n_input, n_hidden, n_latent, n_labels
    key = jax.random.PRNGKey(0)
    kx, kp, k1, k2, k3, k4 = jax.random.split(key, 6)

    x = jnp.floor(jax.random.uniform(kx, (B, G), jnp.float32) * 10.0)   # integer counts
    local_l_mean = jnp.full((B, 1), jnp.log(4.5 * G), jnp.float32)
    local_l_var = jnp.full((B, 1), 1.0, jnp.float32)

    params = init_params(kp, G, H, L, C)
    packed = pack_for_kernel(params, n_hidden=H, n_latent=L, n_labels=C)
    noise = dict(
        eps_z=jax.random.normal(k1, (B, L), jnp.float32),
        eps_l=jax.random.normal(k2, (B, 1), jnp.float32),
        eps_z2=jax.random.normal(k3, (C * B, L), jnp.float32),
        z_fake=jax.random.normal(k4, (B, 10), jnp.float32),
    )

    reconst_d, kl_d, _ = scanvi_forward(packed, x, local_l_mean, local_l_var, noise,
                                        mode="dgm4sca", batch_tile=8)
    reconst_s, kl_s, _ = scanvi_forward(packed, x, local_l_mean, local_l_var, noise,
                                        mode="scanvi", batch_tile=8)
    jax.block_until_ready((reconst_d, kl_d, reconst_s, kl_s))

    # pure-JAX reference (same bf16 matmuls, exact softmax/divides, lax.lgamma)
    ref_rd, ref_kd = _scanvi_forward_ref(params, x, local_l_mean, local_l_var, noise, "dgm4sca")
    ref_rs, ref_ks = _scanvi_forward_ref(params, x, local_l_mean, local_l_var, noise, "scanvi")

    assert reconst_d.shape == (B,) and kl_d.shape == ()
    assert reconst_s.shape == (B,) and kl_s.shape == (B,)
    assert bool(jnp.all(jnp.isfinite(reconst_d))) and bool(jnp.isfinite(kl_d))
    assert bool(jnp.all(jnp.isfinite(reconst_s))) and bool(jnp.all(jnp.isfinite(kl_s)))

    def nerr(a, b):
        a = jnp.asarray(a, jnp.float32)
        b = jnp.asarray(b, jnp.float32)
        return float(jnp.max(jnp.abs(a - b)) / (1.0 + jnp.max(jnp.abs(b))))

    assert nerr(reconst_d, ref_rd) < 5e-2
    assert nerr(reconst_s, ref_rs) < 5e-2
    assert nerr(kl_s, ref_ks) < 5e-2
    assert nerr(kl_d, ref_kd) < 1e-1    # IMQ-MMD: quirky scalar-prods term amplifies tiny diffs

    print("KERNEL_OK")
</pallas_src>

<mosaic_0001>
module attributes {stable_mosaic.version = 11 : i64} {
  func.func @_scanvi_fused_kernel(%arg0: i32, %arg1: memref<8x256xf32, #tpu.memory_space<vmem>>, %arg2: memref<8x13xf32, #tpu.memory_space<vmem>>, %arg3: memref<4x8x10xf32, #tpu.memory_space<vmem>>, %arg4: memref<16x10xf32, #tpu.memory_space<vmem>>, %arg5: memref<776x256xf32, #tpu.memory_space<vmem>>, %arg6: memref<256x256xbf16, #tpu.memory_space<vmem>>, %arg7: memref<128x512xbf16, #tpu.memory_space<vmem>>, %arg8: memref<1x512xf32, #tpu.memory_space<vmem>>, %arg9: memref<3x256xf32, #tpu.memory_space<vmem>>, %arg10: memref<8x128xf32, #tpu.memory_space<vmem>>, %arg11: memref<16x10xf32, #tpu.memory_space<vmem>>) attributes {dimension_semantics = [#tpu.dimension_semantics<arbitrary>], iteration_bounds = array<i64: 2>, scalar_prefetch = 0 : i64, scratch_operands = 1 : i64, tpu.core_type = #tpu.core_type<tc>, window_params = [{transform_indices = @transform_0, window_bounds = array<i64: 8, 256>}, {transform_indices = @transform_1, window_bounds = array<i64: 8, 13>}, {transform_indices = @transform_2, window_bounds = array<i64: 4, 8, 10>}, {pipeline_mode = #tpu.pipeline_mode<synchronous>, transform_indices = @transform_3, window_bounds = array<i64: 16, 10>}, {pipeline_mode = #tpu.pipeline_mode<synchronous>, transform_indices = @transform_4, window_bounds = array<i64: 776, 256>}, {pipeline_mode = #tpu.pipeline_mode<synchronous>, transform_indices = @transform_5, window_bounds = array<i64: 256, 256>}, {pipeline_mode = #tpu.pipeline_mode<synchronous>, transform_indices = @transform_6, window_bounds = array<i64: 128, 512>}, {pipeline_mode = #tpu.pipeline_mode<synchronous>, transform_indices = @transform_7, window_bounds = array<i64: 1, 512>}, {pipeline_mode = #tpu.pipeline_mode<synchronous>, transform_indices = @transform_8, window_bounds = array<i64: 3, 256>}, {transform_indices = @transform_9, window_bounds = array<i64: 8, 128>}]} {
    %c0 = arith.constant 0 : index
    %c0_0 = arith.constant 0 : index
    %0 = vector.load %arg1[%c0, %c0_0] : memref<8x256xf32, #tpu.memory_space<vmem>>, vector<8x256xf32>
    %cst = arith.constant 1.000000e+00 : f32
    %1 = vector.broadcast %cst : f32 to vector<8x256xf32>
    %2 = arith.addf %1, %0 : vector<8x256xf32>
    %3 = math.log %2 : vector<8x256xf32>
    %c0_1 = arith.constant 0 : index
    %c0_2 = arith.constant 0 : index
    %4 = vector.load %arg2[%c0_1, %c0_2] : memref<8x13xf32, #tpu.memory_space<vmem>>, vector<8x13xf32>
    %5 = vector.extract_strided_slice %4 {offsets = [0, 0], sizes = [8, 10], strides = [1, 1]} : vector<8x13xf32> to vector<8x10xf32>
    %6 = vector.extract_strided_slice %4 {offsets = [0, 10], sizes = [8, 1], strides = [1, 1]} : vector<8x13xf32> to vector<8x1xf32>
    %c0_3 = arith.constant 0 : index
    %c0_4 = arith.constant 0 : index
    %7 = vector.load %arg6[%c0_3, %c0_4] : memref<256x256xbf16, #tpu.memory_space<vmem>>, vector<256x256xbf16>
    %8 = arith.truncf %3 : vector<8x256xf32> to vector<8x256xbf16>
    %cst_5 = arith.constant dense<0.000000e+00> : vector<8x256xf32>
    %9 = tpu.matmul %8, %7, %cst_5 {dimension_numbers = #tpu.dot_dimension_numbers<[1], [0], [0], [1], [0, 0, 1, 1], [], []>} : vector<8x256xbf16>, vector<256x256xbf16>, vector<8x256xf32> -> vector<8x256xf32>
    %c0_6 = arith.constant 0 : index
    %c0_7 = arith.constant 0 : index
    %10 = vector.load %arg5[%c0_6, %c0_7] : memref<776x256xf32, #tpu.memory_space<vmem>>, vector<1x256xf32>
    %11 = vector.broadcast %10 : vector<1x256xf32> to vector<8x256xf32>
    %12 = arith.addf %9, %11 : vector<8x256xf32>
    %cst_8 = arith.constant 0.999500393 : f32
    %13 = vector.broadcast %cst_8 : f32 to vector<8x256xf32>
    %14 = arith.mulf %12, %13 : vector<8x256xf32>
    %cst_9 = arith.constant 0.000000e+00 : f32
    %15 = vector.broadcast %cst_9 : f32 to vector<8x256xf32>
    %16 = arith.maximumf %14, %15 : vector<8x256xf32>
    %c8 = arith.constant 8 : index
    %c0_10 = arith.constant 0 : index
    %17 = vector.load %arg5[%c8, %c0_10] : memref<776x256xf32, #tpu.memory_space<vmem>>, vector<256x22xf32>
    %18 = arith.truncf %17 : vector<256x22xf32> to vector<256x22xbf16>
    %19 = arith.truncf %16 : vector<8x256xf32> to vector<8x256xbf16>
    %cst_11 = arith.constant dense<0.000000e+00> : vector<8x22xf32>
    %20 = tpu.matmul %19, %18, %cst_11 {dimension_numbers = #tpu.dot_dimension_numbers<[1], [0], [0], [1], [0, 0, 1, 1], [], []>} : vector<8x256xbf16>, vector<256x22xbf16>, vector<8x22xf32> -> vector<8x22xf32>
    %c264 = arith.constant 264 : index
    %c0_12 = arith.constant 0 : index
    %21 = vector.load %arg5[%c264, %c0_12] : memref<776x256xf32, #tpu.memory_space<vmem>>, vector<1x22xf32>
    %22 = vector.broadcast %21 : vector<1x22xf32> to vector<8x22xf32>
    %23 = arith.addf %20, %22 : vector<8x22xf32>
    %24 = vector.extract_strided_slice %23 {offsets = [0, 0], sizes = [8, 10], strides = [1, 1]} : vector<8x22xf32> to vector<8x10xf32>
    %25 = vector.extract_strided_slice %23 {offsets = [0, 10], sizes = [8, 10], strides = [1, 1]} : vector<8x22xf32> to vector<8x10xf32>
    %26 = math.exp %25 : vector<8x10xf32>
    %cst_13 = arith.constant 9.99999974E-5 : f32
    %27 = vector.broadcast %cst_13 : f32 to vector<8x10xf32>
    %28 = arith.addf %26, %27 : vector<8x10xf32>
    %29 = vector.extract_strided_slice %23 {offsets = [0, 20], sizes = [8, 1], strides = [1, 1]} : vector<8x22xf32> to vector<8x1xf32>
    %30 = vector.extract_strided_slice %23 {offsets = [0, 21], sizes = [8, 1], strides = [1, 1]} : vector<8x22xf32> to vector<8x1xf32>
    %31 = math.exp %30 : vector<8x1xf32>
    %cst_14 = arith.constant 9.99999974E-5 : f32
    %32 = vector.broadcast %cst_14 : f32 to vector<8x1xf32>
    %33 = arith.addf %31, %32 : vector<8x1xf32>
    %34 = math.sqrt %28 : vector<8x10xf32>
    %35 = arith.mulf %34, %5 : vector<8x10xf32>
    %36 = arith.addf %24, %35 : vector<8x10xf32>
    %37 = math.sqrt %33 : vector<8x1xf32>
    %38 = arith.mulf %37, %6 : vector<8x1xf32>
    %39 = arith.addf %29, %38 : vector<8x1xf32>
    %c272 = arith.constant 272 : index
    %c0_15 = arith.constant 0 : index
    %40 = vector.load %arg5[%c272, %c0_15] : memref<776x256xf32, #tpu.memory_space<vmem>>, vector<10x256xf32>
    %41 = arith.truncf %40 : vector<10x256xf32> to vector<10x256xbf16>
    %42 = arith.truncf %36 : vector<8x10xf32> to vector<8x10xbf16>
    %cst_16 = arith.constant dense<0.000000e+00> : vector<8x256xf32>
    %43 = tpu.matmul %42, %41, %cst_16 {dimension_numbers = #tpu.dot_dimension_numbers<[1], [0], [0], [1], [0, 0, 1, 1], [], []>} : vector<8x10xbf16>, vector<10x256xbf16>, vector<8x256xf32> -> vector<8x256xf32>
    %c288 = arith.constant 288 : index
    %c0_17 = arith.constant 0 : index
    %44 = vector.load %arg5[%c288, %c0_17] : memref<776x256xf32, #tpu.memory_space<vmem>>, vector<1x256xf32>
    %45 = vector.broadcast %44 : vector<1x256xf32> to vector<8x256xf32>
    %46 = arith.addf %43, %45 : vector<8x256xf32>
    %cst_18 = arith.constant 0.999500393 : f32
    %47 = vector.broadcast %cst_18 : f32 to vector<8x256xf32>
    %48 = arith.mulf %46, %47 : vector<8x256xf32>
    %cst_19 = arith.constant 0.000000e+00 : f32
    %49 = vector.broadcast %cst_19 : f32 to vector<8x256xf32>
    %50 = arith.maximumf %48, %49 : vector<8x256xf32>
    %51 = vector.extract_strided_slice %50 {offsets = [0, 0], sizes = [8, 128], strides = [1, 1]} : vector<8x256xf32> to vector<8x128xf32>
    %52 = vector.extract_strided_slice %50 {offsets = [0, 128], sizes = [8, 128], strides = [1, 1]} : vector<8x256xf32> to vector<8x128xf32>
    %c296 = arith.constant 296 : index
    %c0_20 = arith.constant 0 : index
    %53 = vector.load %arg5[%c296, %c0_20] : memref<776x256xf32, #tpu.memory_space<vmem>>, vector<128x4xf32>
    %54 = arith.truncf %53 : vector<128x4xf32> to vector<128x4xbf16>
    %55 = arith.truncf %52 : vector<8x128xf32> to vector<8x128xbf16>
    %cst_21 = arith.constant dense<0.000000e+00> : vector<8x4xf32>
    %56 = tpu.matmul %55, %54, %cst_21 {dimension_numbers = #tpu.dot_dimension_numbers<[1], [0], [0], [1], [0, 0, 1, 1], [], []>} : vector<8x128xbf16>, vector<128x4xbf16>, vector<8x4xf32> -> vector<8x4xf32>
    %c424 = arith.constant 424 : index
    %c0_22 = arith.constant 0 : index
    %57 = vector.load %arg5[%c424, %c0_22] : memref<776x256xf32, #tpu.memory_space<vmem>>, vector<1x4xf32>
    %58 = vector.broadcast %57 : vector<1x4xf32> to vector<8x4xf32>
    %59 = arith.addf %56, %58 : vector<8x4xf32>
    %cst_23 = arith.constant dense<0xFF800000> : vector<8xf32>
    %60 = vector.multi_reduction <maximumf>, %59, %cst_23 [1] : vector<8x4xf32> to vector<8xf32>
    %61 = vector.shape_cast %60 : vector<8xf32> to vector<8x1xf32>
    %62 = vector.broadcast %61 : vector<8x1xf32> to vector<8x4xf32>
    %63 = arith.subf %59, %62 : vector<8x4xf32>
    %64 = math.exp %63 : vector<8x4xf32>
    %cst_24 = arith.constant dense<0.000000e+00> : vector<8xf32>
    %65 = vector.multi_reduction <add>, %64, %cst_24 [1] : vector<8x4xf32> to vector<8xf32>
    %66 = vector.shape_cast %65 : vector<8xf32> to vector<8x1xf32>
    %67 = vector.broadcast %66 : vector<8x1xf32> to vector<8x4xf32>
    %68 = arith.divf %64, %67 : vector<8x4xf32>
    %c0_25 = arith.constant 0 : index
    %c0_26 = arith.constant 0 : index
    %69 = vector.load %arg7[%c0_25, %c0_26] : memref<128x512xbf16, #tpu.memory_space<vmem>>, vector<128x512xbf16>
    %70 = arith.truncf %51 : vector<8x128xf32> to vector<8x128xbf16>
    %cst_27 = arith.constant dense<0.000000e+00> : vector<8x512xf32>
    %71 = tpu.matmul %70, %69, %cst_27 {dimension_numbers = #tpu.dot_dimension_numbers<[1], [0], [0], [1], [0, 0, 1, 1], [], []>} : vector<8x128xbf16>, vector<128x512xbf16>, vector<8x512xf32> -> vector<8x512xf32>
    %c0_28 = arith.constant 0 : index
    %c0_29 = arith.constant 0 : index
    %72 = vector.load %arg8[%c0_28, %c0_29] : memref<1x512xf32, #tpu.memory_space<vmem>>, vector<1x512xf32>
    %73 = vector.broadcast %72 : vector<1x512xf32> to vector<8x512xf32>
    %74 = arith.addf %71, %73 : vector<8x512xf32>
    %75 = vector.extract_strided_slice %74 {offsets = [0, 0], sizes = [8, 256], strides = [1, 1]} : vector<8x512xf32> to vector<8x256xf32>
    %76 = vector.extract_strided_slice %74 {offsets = [0, 256], sizes = [8, 256], strides = [1, 1]} : vector<8x512xf32> to vector<8x256xf32>
    %c0_30 = arith.constant 0 : index
    %c0_31 = arith.constant 0 : index
    %77 = vector.load %arg9[%c0_30, %c0_31] : memref<3x256xf32, #tpu.memory_space<vmem>>, vector<1x256xf32>
    %c1 = arith.constant 1 : index
    %c0_32 = arith.constant 0 : index
    %78 = vector.load %arg9[%c1, %c0_32] : memref<3x256xf32, #tpu.memory_space<vmem>>, vector<1x256xf32>
    %c2 = arith.constant 2 : index
    %c0_33 = arith.constant 0 : index
    %79 = vector.load %arg9[%c2, %c0_33] : memref<3x256xf32, #tpu.memory_space<vmem>>, vector<1x256xf32>
    %cst_34 = arith.constant dense<0xFF800000> : vector<8xf32>
    %80 = vector.multi_reduction <maximumf>, %75, %cst_34 [1] : vector<8x256xf32> to vector<8xf32>
    %81 = vector.shape_cast %80 : vector<8xf32> to vector<8x1xf32>
    %82 = vector.broadcast %81 : vector<8x1xf32> to vector<8x256xf32>
    %83 = arith.subf %75, %82 : vector<8x256xf32>
    %84 = math.exp %83 : vector<8x256xf32>
    %cst_35 = arith.constant dense<0.000000e+00> : vector<8xf32>
    %85 = vector.multi_reduction <add>, %84, %cst_35 [1] : vector<8x256xf32> to vector<8xf32>
    %86 = vector.shape_cast %85 : vector<8xf32> to vector<8x1xf32>
    %87 = math.log %86 : vector<8x1xf32>
    %88 = arith.addf %81, %87 : vector<8x1xf32>
    %89 = vector.broadcast %88 : vector<8x1xf32> to vector<8x256xf32>
    %90 = arith.subf %75, %89 : vector<8x256xf32>
    %91 = vector.broadcast %39 : vector<8x1xf32> to vector<8x256xf32>
    %92 = arith.addf %91, %90 : vector<8x256xf32>
    %93 = math.exp %92 : vector<8x256xf32>
    %cst_36 = arith.constant 0.000000e+00 : f32
    %94 = vector.broadcast %cst_36 : f32 to vector<8x256xf32>
    %95 = arith.subf %94, %76 : vector<8x256xf32>
    %cst_37 = arith.constant 0.000000e+00 : f32
    %96 = vector.broadcast %cst_37 : f32 to vector<8x256xf32>
    %97 = arith.maximumf %95, %96 : vector<8x256xf32>
    %98 = math.absf %95 : vector<8x256xf32>
    %cst_38 = arith.constant 0.000000e+00 : f32
    %99 = vector.broadcast %cst_38 : f32 to vector<8x256xf32>
    %100 = arith.subf %99, %98 : vector<8x256xf32>
    %101 = math.exp %100 : vector<8x256xf32>
    %cst_39 = arith.constant 1.000000e+00 : f32
    %102 = vector.broadcast %cst_39 : f32 to vector<8x256xf32>
    %103 = arith.addf %102, %101 : vector<8x256xf32>
    %104 = math.log %103 : vector<8x256xf32>
    %105 = arith.addf %97, %104 : vector<8x256xf32>
    %106 = vector.broadcast %77 : vector<1x256xf32> to vector<8x256xf32>
    %107 = arith.addf %106, %93 : vector<8x256xf32>
    %cst_40 = arith.constant 9.99999993E-9 : f32
    %108 = vector.broadcast %cst_40 : f32 to vector<8x256xf32>
    %109 = arith.addf %107, %108 : vector<8x256xf32>
    %110 = math.log %109 : vector<8x256xf32>
    %cst_41 = arith.constant 0.000000e+00 : f32
    %111 = vector.broadcast %cst_41 : f32 to vector<8x256xf32>
    %112 = arith.subf %111, %76 : vector<8x256xf32>
    %113 = vector.broadcast %78 : vector<1x256xf32> to vector<8x256xf32>
    %114 = arith.subf %113, %110 : vector<8x256xf32>
    %115 = vector.broadcast %77 : vector<1x256xf32> to vector<8x256xf32>
    %116 = arith.mulf %115, %114 : vector<8x256xf32>
    %117 = arith.addf %112, %116 : vector<8x256xf32>
    %cst_42 = arith.constant 0.000000e+00 : f32
    %118 = vector.broadcast %cst_42 : f32 to vector<8x256xf32>
    %119 = arith.maximumf %117, %118 : vector<8x256xf32>
    %120 = math.absf %117 : vector<8x256xf32>
    %cst_43 = arith.constant 0.000000e+00 : f32
    %121 = vector.broadcast %cst_43 : f32 to vector<8x256xf32>
    %122 = arith.subf %121, %120 : vector<8x256xf32>
    %123 = math.exp %122 : vector<8x256xf32>
    %cst_44 = arith.constant 1.000000e+00 : f32
    %124 = vector.broadcast %cst_44 : f32 to vector<8x256xf32>
    %125 = arith.addf %124, %123 : vector<8x256xf32>
    %126 = math.log %125 : vector<8x256xf32>
    %127 = arith.addf %119, %126 : vector<8x256xf32>
    %128 = arith.subf %127, %105 : vector<8x256xf32>
    %cst_45 = arith.constant 0.000000e+00 : f32
    %129 = vector.broadcast %cst_45 : f32 to vector<8x256xf32>
    %130 = arith.subf %129, %105 : vector<8x256xf32>
    %131 = arith.addf %130, %117 : vector<8x256xf32>
    %132 = arith.subf %92, %110 : vector<8x256xf32>
    %133 = arith.mulf %0, %132 : vector<8x256xf32>
    %134 = arith.addf %131, %133 : vector<8x256xf32>
    %135 = vector.broadcast %77 : vector<1x256xf32> to vector<8x256xf32>
    %136 = arith.addf %0, %135 : vector<8x256xf32>
    %cst_46 = arith.constant 1.000000e+00 : f32
    %137 = vector.broadcast %cst_46 : f32 to vector<8x256xf32>
    %138 = arith.subf %136, %137 : vector<8x256xf32>
    %cst_47 = arith.constant 1.000000e+00 : f32
    %139 = vector.broadcast %cst_47 : f32 to vector<8x256xf32>
    %cst_48 = arith.constant 1.000000e+00 : f32
    %140 = vector.broadcast %cst_48 : f32 to vector<8x256xf32>
    %141 = arith.mulf %139, %138 : vector<8x256xf32>
    %cst_49 = arith.constant 60.4583321 : f32
    %142 = vector.broadcast %cst_49 : f32 to vector<8x256xf32>
    %143 = arith.addf %141, %142 : vector<8x256xf32>
    %144 = arith.mulf %140, %138 : vector<8x256xf32>
    %cst_50 = arith.constant 3.600000e+01 : f32
    %145 = vector.broadcast %cst_50 : f32 to vector<8x256xf32>
    %146 = arith.addf %144, %145 : vector<8x256xf32>
    %147 = arith.mulf %143, %138 : vector<8x256xf32>
    %cst_51 = arith.constant 1599.04248 : f32
    %148 = vector.broadcast %cst_51 : f32 to vector<8x256xf32>
    %149 = arith.addf %147, %148 : vector<8x256xf32>
    %150 = arith.mulf %146, %138 : vector<8x256xf32>
    %cst_52 = arith.constant 5.460000e+02 : f32
    %151 = vector.broadcast %cst_52 : f32 to vector<8x256xf32>
    %152 = arith.addf %150, %151 : vector<8x256xf32>
    %153 = arith.mulf %149, %138 : vector<8x256xf32>
    %cst_53 = arith.constant 24165.5098 : f32
    %154 = vector.broadcast %cst_53 : f32 to vector<8x256xf32>
    %155 = arith.addf %153, %154 : vector<8x256xf32>
    %156 = arith.mulf %152, %138 : vector<8x256xf32>
    %cst_54 = arith.constant 4.536000e+03 : f32
    %157 = vector.broadcast %cst_54 : f32 to vector<8x256xf32>
    %158 = arith.addf %156, %157 : vector<8x256xf32>
    %159 = arith.mulf %155, %138 : vector<8x256xf32>
    %cst_55 = arith.constant 228235.219 : f32
    %160 = vector.broadcast %cst_55 : f32 to vector<8x256xf32>
    %161 = arith.addf %159, %160 : vector<8x256xf32>
    %162 = arith.mulf %158, %138 : vector<8x256xf32>
    %cst_56 = arith.constant 2.244900e+04 : f32
    %163 = vector.broadcast %cst_56 : f32 to vector<8x256xf32>
    %164 = arith.addf %162, %163 : vector<8x256xf32>
    %165 = arith.mulf %161, %138 : vector<8x256xf32>
    %cst_57 = arith.constant 1379496.25 : f32
    %166 = vector.broadcast %cst_57 : f32 to vector<8x256xf32>
    %167 = arith.addf %165, %166 : vector<8x256xf32>
    %168 = arith.mulf %164, %138 : vector<8x256xf32>
    %cst_58 = arith.constant 6.728400e+04 : f32
    %169 = vector.broadcast %cst_58 : f32 to vector<8x256xf32>
    %170 = arith.addf %168, %169 : vector<8x256xf32>
    %171 = arith.mulf %167, %138 : vector<8x256xf32>
    %cst_59 = arith.constant 0x4A9F05EA : f32
    %172 = vector.broadcast %cst_59 : f32 to vector<8x256xf32>
    %173 = arith.addf %171, %172 : vector<8x256xf32>
    %174 = arith.mulf %170, %138 : vector<8x256xf32>
    %cst_60 = arith.constant 1.181240e+05 : f32
    %175 = vector.broadcast %cst_60 : f32 to vector<8x256xf32>
    %176 = arith.addf %174, %175 : vector<8x256xf32>
    %177 = arith.mulf %173, %138 : vector<8x256xf32>
    %cst_61 = arith.constant 0x4B2B9D51 : f32
    %178 = vector.broadcast %cst_61 : f32 to vector<8x256xf32>
    %179 = arith.addf %177, %178 : vector<8x256xf32>
    %180 = arith.mulf %176, %138 : vector<8x256xf32>
    %cst_62 = arith.constant 1.095840e+05 : f32
    %181 = vector.broadcast %cst_62 : f32 to vector<8x256xf32>
    %182 = arith.addf %180, %181 : vector<8x256xf32>
    %183 = arith.mulf %179, %138 : vector<8x256xf32>
    %cst_63 = arith.constant 0x4B220ADA : f32
    %184 = vector.broadcast %cst_63 : f32 to vector<8x256xf32>
    %185 = arith.addf %183, %184 : vector<8x256xf32>
    %186 = arith.mulf %182, %138 : vector<8x256xf32>
    %cst_64 = arith.constant 4.032000e+04 : f32
    %187 = vector.broadcast %cst_64 : f32 to vector<8x256xf32>
    %188 = arith.addf %186, %187 : vector<8x256xf32>
    %cst_65 = arith.constant 7.500000e+00 : f32
    %189 = vector.broadcast %cst_65 : f32 to vector<8x256xf32>
    %190 = arith.addf %138, %189 : vector<8x256xf32>
    %cst_66 = arith.constant 5.000000e-01 : f32
    %191 = vector.broadcast %cst_66 : f32 to vector<8x256xf32>
    %192 = arith.addf %138, %191 : vector<8x256xf32>
    %193 = math.log %190 : vector<8x256xf32>
    %194 = arith.mulf %192, %193 : vector<8x256xf32>
    %cst_67 = arith.constant 0.918938517 : f32
    %195 = vector.broadcast %cst_67 : f32 to vector<8x256xf32>
    %196 = arith.addf %195, %194 : vector<8x256xf32>
    %197 = arith.subf %196, %190 : vector<8x256xf32>
    %198 = arith.divf %185, %188 : vector<8x256xf32>
    %199 = math.log %198 : vector<8x256xf32>
    %200 = arith.addf %197, %199 : vector<8x256xf32>
    %201 = arith.addf %134, %200 : vector<8x256xf32>
    %202 = vector.broadcast %79 : vector<1x256xf32> to vector<8x256xf32>
    %203 = arith.subf %201, %202 : vector<8x256xf32>
    %cst_68 = arith.constant 1.000000e+00 : f32
    %204 = vector.broadcast %cst_68 : f32 to vector<8x256xf32>
    %205 = arith.addf %0, %204 : vector<8x256xf32>
    %cst_69 = arith.constant 1.000000e+00 : f32
    %206 = vector.broadcast %cst_69 : f32 to vector<8x256xf32>
    %207 = arith.subf %205, %206 : vector<8x256xf32>
    %cst_70 = arith.constant 1.000000e+00 : f32
    %208 = vector.broadcast %cst_70 : f32 to vector<8x256xf32>
    %cst_71 = arith.constant 1.000000e+00 : f32
    %209 = vector.broadcast %cst_71 : f32 to vector<8x256xf32>
    %210 = arith.mulf %208, %207 : vector<8x256xf32>
    %cst_72 = arith.constant 60.4583321 : f32
    %211 = vector.broadcast %cst_72 : f32 to vector<8x256xf32>
    %212 = arith.addf %210, %211 : vector<8x256xf32>
    %213 = arith.mulf %209, %207 : vector<8x256xf32>
    %cst_73 = arith.constant 3.600000e+01 : f32
    %214 = vector.broadcast %cst_73 : f32 to vector<8x256xf32>
    %215 = arith.addf %213, %214 : vector<8x256xf32>
    %216 = arith.mulf %212, %207 : vector<8x256xf32>
    %cst_74 = arith.constant 1599.04248 : f32
    %217 = vector.broadcast %cst_74 : f32 to vector<8x256xf32>
    %218 = arith.addf %216, %217 : vector<8x256xf32>
    %219 = arith.mulf %215, %207 : vector<8x256xf32>
    %cst_75 = arith.constant 5.460000e+02 : f32
    %220 = vector.broadcast %cst_75 : f32 to vector<8x256xf32>
    %221 = arith.addf %219, %220 : vector<8x256xf32>
    %222 = arith.mulf %218, %207 : vector<8x256xf32>
    %cst_76 = arith.constant 24165.5098 : f32
    %223 = vector.broadcast %cst_76 : f32 to vector<8x256xf32>
    %224 = arith.addf %222, %223 : vector<8x256xf32>
    %225 = arith.mulf %221, %207 : vector<8x256xf32>
    %cst_77 = arith.constant 4.536000e+03 : f32
    %226 = vector.broadcast %cst_77 : f32 to vector<8x256xf32>
    %227 = arith.addf %225, %226 : vector<8x256xf32>
    %228 = arith.mulf %224, %207 : vector<8x256xf32>
    %cst_78 = arith.constant 228235.219 : f32
    %229 = vector.broadcast %cst_78 : f32 to vector<8x256xf32>
    %230 = arith.addf %228, %229 : vector<8x256xf32>
    %231 = arith.mulf %227, %207 : vector<8x256xf32>
    %cst_79 = arith.constant 2.244900e+04 : f32
    %232 = vector.broadcast %cst_79 : f32 to vector<8x256xf32>
    %233 = arith.addf %231, %232 : vector<8x256xf32>
    %234 = arith.mulf %230, %207 : vector<8x256xf32>
    %cst_80 = arith.constant 1379496.25 : f32
    %235 = vector.broadcast %cst_80 : f32 to vector<8x256xf32>
    %236 = arith.addf %234, %235 : vector<8x256xf32>
    %237 = arith.mulf %233, %207 : vector<8x256xf32>
    %cst_81 = arith.constant 6.728400e+04 : f32
    %238 = vector.broadcast %cst_81 : f32 to vector<8x256xf32>
    %239 = arith.addf %237, %238 : vector<8x256xf32>
    %240 = arith.mulf %236, %207 : vector<8x256xf32>
    %cst_82 = arith.constant 0x4A9F05EA : f32
    %241 = vector.broadcast %cst_82 : f32 to vector<8x256xf32>
    %242 = arith.addf %240, %241 : vector<8x256xf32>
    %243 = arith.mulf %239, %207 : vector<8x256xf32>
    %cst_83 = arith.constant 1.181240e+05 : f32
    %244 = vector.broadcast %cst_83 : f32 to vector<8x256xf32>
    %245 = arith.addf %243, %244 : vector<8x256xf32>
    %246 = arith.mulf %242, %207 : vector<8x256xf32>
    %cst_84 = arith.constant 0x4B2B9D51 : f32
    %247 = vector.broadcast %cst_84 : f32 to vector<8x256xf32>
    %248 = arith.addf %246, %247 : vector<8x256xf32>
    %249 = arith.mulf %245, %207 : vector<8x256xf32>
    %cst_85 = arith.constant 1.095840e+05 : f32
    %250 = vector.broadcast %cst_85 : f32 to vector<8x256xf32>
    %251 = arith.addf %249, %250 : vector<8x256xf32>
    %252 = arith.mulf %248, %207 : vector<8x256xf32>
    %cst_86 = arith.constant 0x4B220ADA : f32
    %253 = vector.broadcast %cst_86 : f32 to vector<8x256xf32>
    %254 = arith.addf %252, %253 : vector<8x256xf32>
    %255 = arith.mulf %251, %207 : vector<8x256xf32>
    %cst_87 = arith.constant 4.032000e+04 : f32
    %256 = vector.broadcast %cst_87 : f32 to vector<8x256xf32>
    %257 = arith.addf %255, %256 : vector<8x256xf32>
    %cst_88 = arith.constant 7.500000e+00 : f32
    %258 = vector.broadcast %cst_88 : f32 to vector<8x256xf32>
    %259 = arith.addf %207, %258 : vector<8x256xf32>
    %cst_89 = arith.constant 5.000000e-01 : f32
    %260 = vector.broadcast %cst_89 : f32 to vector<8x256xf32>
    %261 = arith.addf %207, %260 : vector<8x256xf32>
    %262 = math.log %259 : vector<8x256xf32>
    %263 = arith.mulf %261, %262 : vector<8x256xf32>
    %cst_90 = arith.constant 0.918938517 : f32
    %264 = vector.broadcast %cst_90 : f32 to vector<8x256xf32>
    %265 = arith.addf %264, %263 : vector<8x256xf32>
    %266 = arith.subf %265, %259 : vector<8x256xf32>
    %267 = arith.divf %254, %257 : vector<8x256xf32>
    %268 = math.log %267 : vector<8x256xf32>
    %269 = arith.addf %266, %268 : vector<8x256xf32>
    %270 = arith.subf %203, %269 : vector<8x256xf32>
    %cst_91 = arith.constant 9.99999993E-9 : f32
    %271 = vector.broadcast %cst_91 : f32 to vector<8x256xf32>
    %272 = arith.cmpf olt, %0, %271 : vector<8x256xf32>
    %273 = arith.select %272, %128, %270 : vector<8x256xi1>, vector<8x256xf32>
    %cst_92 = arith.constant dense<0.000000e+00> : vector<8xf32>
    %274 = vector.multi_reduction <add>, %273, %cst_92 [1] : vector<8x256xf32> to vector<8xf32>
    %275 = vector.shape_cast %274 : vector<8xf32> to vector<8x1xf32>
    %cst_93 = arith.constant 0.000000e+00 : f32
    %276 = vector.broadcast %cst_93 : f32 to vector<8x1xf32>
    %277 = arith.subf %276, %275 : vector<8x1xf32>
    %c432 = arith.constant 432 : index
    %c0_94 = arith.constant 0 : index
    %278 = vector.load %arg5[%c432, %c0_94] : memref<776x256xf32, #tpu.memory_space<vmem>>, vector<10x128xf32>
    %279 = arith.truncf %278 : vector<10x128xf32> to vector<10x128xbf16>
    %280 = arith.truncf %36 : vector<8x10xf32> to vector<8x10xbf16>
    %cst_95 = arith.constant dense<0.000000e+00> : vector<8x128xf32>
    %281 = tpu.matmul %280, %279, %cst_95 {dimension_numbers = #tpu.dot_dimension_numbers<[1], [0], [0], [1], [0, 0, 1, 1], [], []>} : vector<8x10xbf16>, vector<10x128xbf16>, vector<8x128xf32> -> vector<8x128xf32>
    %c448 = arith.constant 448 : index
    %c0_96 = arith.constant 0 : index
    %282 = vector.load %arg5[%c448, %c0_96] : memref<776x256xf32, #tpu.memory_space<vmem>>, vector<1x128xf32>
    %283 = vector.broadcast %282 : vector<1x128xf32> to vector<8x128xf32>
    %284 = arith.addf %281, %283 : vector<8x128xf32>
    %c456 = arith.constant 456 : index
    %c0_97 = arith.constant 0 : index
    %285 = vector.load %arg5[%c456, %c0_97] : memref<776x256xf32, #tpu.memory_space<vmem>>, vector<4x128xf32>
    %c624 = arith.constant 624 : index
    %c0_98 = arith.constant 0 : index
    %286 = vector.load %arg5[%c624, %c0_98] : memref<776x256xf32, #tpu.memory_space<vmem>>, vector<4x128xf32>
    %287 = tpu.concatenate %284, %284, %284, %284 in 0 : vector<8x128xf32>, vector<8x128xf32>, vector<8x128xf32>, vector<8x128xf32> -> vector<32x128xf32>
    %288 = vector.extract_strided_slice %285 {offsets = [0, 0], sizes = [1, 128], strides = [1, 1]} : vector<4x128xf32> to vector<1x128xf32>
    %289 = vector.shape_cast %288 : vector<1x128xf32> to vector<1x128xf32>
    %290 = vector.broadcast %289 : vector<1x128xf32> to vector<8x128xf32>
    %291 = vector.extract_strided_slice %285 {offsets = [1, 0], sizes = [1, 128], strides = [1, 1]} : vector<4x128xf32> to vector<1x128xf32>
    %292 = vector.shape_cast %291 : vector<1x128xf32> to vector<1x128xf32>
    %293 = vector.broadcast %292 : vector<1x128xf32> to vector<8x128xf32>
    %294 = vector.extract_strided_slice %285 {offsets = [2, 0], sizes = [1, 128], strides = [1, 1]} : vector<4x128xf32> to vector<1x128xf32>
    %295 = vector.shape_cast %294 : vector<1x128xf32> to vector<1x128xf32>
    %296 = vector.broadcast %295 : vector<1x128xf32> to vector<8x128xf32>
    %297 = vector.extract_strided_slice %285 {offsets = [3, 0], sizes = [1, 128], strides = [1, 1]} : vector<4x128xf32> to vector<1x128xf32>
    %298 = vector.shape_cast %297 : vector<1x128xf32> to vector<1x128xf32>
    %299 = vector.broadcast %298 : vector<1x128xf32> to vector<8x128xf32>
    %300 = tpu.concatenate %290, %293, %296, %299 in 0 : vector<8x128xf32>, vector<8x128xf32>, vector<8x128xf32>, vector<8x128xf32> -> vector<32x128xf32>
    %301 = vector.extract_strided_slice %286 {offsets = [0, 0], sizes = [1, 128], strides = [1, 1]} : vector<4x128xf32> to vector<1x128xf32>
    %302 = vector.shape_cast %301 : vector<1x128xf32> to vector<1x128xf32>
    %303 = vector.broadcast %302 : vector<1x128xf32> to vector<8x128xf32>
    %304 = vector.extract_strided_slice %286 {offsets = [1, 0], sizes = [1, 128], strides = [1, 1]} : vector<4x128xf32> to vector<1x128xf32>
    %305 = vector.shape_cast %304 : vector<1x128xf32> to vector<1x128xf32>
    %306 = vector.broadcast %305 : vector<1x128xf32> to vector<8x128xf32>
    %307 = vector.extract_strided_slice %286 {offsets = [2, 0], sizes = [1, 128], strides = [1, 1]} : vector<4x128xf32> to vector<1x128xf32>
    %308 = vector.shape_cast %307 : vector<1x128xf32> to vector<1x128xf32>
    %309 = vector.broadcast %308 : vector<1x128xf32> to vector<8x128xf32>
    %310 = vector.extract_strided_slice %286 {offsets = [3, 0], sizes = [1, 128], strides = [1, 1]} : vector<4x128xf32> to vector<1x128xf32>
    %311 = vector.shape_cast %310 : vector<1x128xf32> to vector<1x128xf32>
    %312 = vector.broadcast %311 : vector<1x128xf32> to vector<8x128xf32>
    %313 = tpu.concatenate %303, %306, %309, %312 in 0 : vector<8x128xf32>, vector<8x128xf32>, vector<8x128xf32>, vector<8x128xf32> -> vector<32x128xf32>
    %c0_99 = arith.constant 0 : index
    %c0_100 = arith.constant 0 : index
    %c0_101 = arith.constant 0 : index
    %314 = vector.load %arg3[%c0_99, %c0_100, %c0_101] : memref<4x8x10xf32, #tpu.memory_space<vmem>>, vector<1x8x10xf32>
    %315 = vector.shape_cast %314 : vector<1x8x10xf32> to vector<8x10xf32>
    %c1_102 = arith.constant 1 : index
    %c0_103 = arith.constant 0 : index
    %c0_104 = arith.constant 0 : index
    %316 = vector.load %arg3[%c1_102, %c0_103, %c0_104] : memref<4x8x10xf32, #tpu.memory_space<vmem>>, vector<1x8x10xf32>
    %317 = vector.shape_cast %316 : vector<1x8x10xf32> to vector<8x10xf32>
    %c2_105 = arith.constant 2 : index
    %c0_106 = arith.constant 0 : index
    %c0_107 = arith.constant 0 : index
    %318 = vector.load %arg3[%c2_105, %c0_106, %c0_107] : memref<4x8x10xf32, #tpu.memory_space<vmem>>, vector<1x8x10xf32>
    %319 = vector.shape_cast %318 : vector<1x8x10xf32> to vector<8x10xf32>
    %c3 = arith.constant 3 : index
    %c0_108 = arith.constant 0 : index
    %c0_109 = arith.constant 0 : index
    %320 = vector.load %arg3[%c3, %c0_108, %c0_109] : memref<4x8x10xf32, #tpu.memory_space<vmem>>, vector<1x8x10xf32>
    %321 = vector.shape_cast %320 : vector<1x8x10xf32> to vector<8x10xf32>
    %322 = tpu.concatenate %315, %317, %319, %321 in 0 : vector<8x10xf32>, vector<8x10xf32>, vector<8x10xf32>, vector<8x10xf32> -> vector<32x10xf32>
    %323 = arith.addf %287, %300 : vector<32x128xf32>
    %cst_110 = arith.constant 0.999500393 : f32
    %324 = vector.broadcast %cst_110 : f32 to vector<32x128xf32>
    %325 = arith.mulf %323, %324 : vector<32x128xf32>
    %cst_111 = arith.constant 0.000000e+00 : f32
    %326 = vector.broadcast %cst_111 : f32 to vector<32x128xf32>
    %327 = arith.maximumf %325, %326 : vector<32x128xf32>
    %c464 = arith.constant 464 : index
    %c0_112 = arith.constant 0 : index
    %328 = vector.load %arg5[%c464, %c0_112] : memref<776x256xf32, #tpu.memory_space<vmem>>, vector<128x20xf32>
    %329 = arith.truncf %328 : vector<128x20xf32> to vector<128x20xbf16>
    %330 = arith.truncf %327 : vector<32x128xf32> to vector<32x128xbf16>
    %cst_113 = arith.constant dense<0.000000e+00> : vector<32x20xf32>
    %331 = tpu.matmul %330, %329, %cst_113 {dimension_numbers = #tpu.dot_dimension_numbers<[1], [0], [0], [1], [0, 0, 1, 1], [], []>} : vector<32x128xbf16>, vector<128x20xbf16>, vector<32x20xf32> -> vector<32x20xf32>
    %c592 = arith.constant 592 : index
    %c0_114 = arith.constant 0 : index
    %332 = vector.load %arg5[%c592, %c0_114] : memref<776x256xf32, #tpu.memory_space<vmem>>, vector<1x20xf32>
    %333 = vector.broadcast %332 : vector<1x20xf32> to vector<32x20xf32>
    %334 = arith.addf %331, %333 : vector<32x20xf32>
    %335 = vector.extract_strided_slice %334 {offsets = [0, 0], sizes = [32, 10], strides = [1, 1]} : vector<32x20xf32> to vector<32x10xf32>
    %336 = vector.extract_strided_slice %334 {offsets = [0, 10], sizes = [32, 10], strides = [1, 1]} : vector<32x20xf32> to vector<32x10xf32>
    %337 = math.exp %336 : vector<32x10xf32>
    %cst_115 = arith.constant 9.99999974E-5 : f32
    %338 = vector.broadcast %cst_115 : f32 to vector<32x10xf32>
    %339 = arith.addf %337, %338 : vector<32x10xf32>
    %340 = math.sqrt %339 : vector<32x10xf32>
    %341 = arith.mulf %340, %322 : vector<32x10xf32>
    %342 = arith.addf %335, %341 : vector<32x10xf32>
    %c600 = arith.constant 600 : index
    %c0_116 = arith.constant 0 : index
    %343 = vector.load %arg5[%c600, %c0_116] : memref<776x256xf32, #tpu.memory_space<vmem>>, vector<10x128xf32>
    %344 = arith.truncf %343 : vector<10x128xf32> to vector<10x128xbf16>
    %345 = arith.truncf %342 : vector<32x10xf32> to vector<32x10xbf16>
    %cst_117 = arith.constant dense<0.000000e+00> : vector<32x128xf32>
    %346 = tpu.matmul %345, %344, %cst_117 {dimension_numbers = #tpu.dot_dimension_numbers<[1], [0], [0], [1], [0, 0, 1, 1], [], []>} : vector<32x10xbf16>, vector<10x128xbf16>, vector<32x128xf32> -> vector<32x128xf32>
    %c616 = arith.constant 616 : index
    %c0_118 = arith.constant 0 : index
    %347 = vector.load %arg5[%c616, %c0_118] : memref<776x256xf32, #tpu.memory_space<vmem>>, vector<1x128xf32>
    %348 = vector.broadcast %347 : vector<1x128xf32> to vector<32x128xf32>
    %349 = arith.addf %346, %348 : vector<32x128xf32>
    %350 = arith.addf %349, %313 : vector<32x128xf32>
    %cst_119 = arith.constant 0.999500393 : f32
    %351 = vector.broadcast %cst_119 : f32 to vector<32x128xf32>
    %352 = arith.mulf %350, %351 : vector<32x128xf32>
    %cst_120 = arith.constant 0.000000e+00 : f32
    %353 = vector.broadcast %cst_120 : f32 to vector<32x128xf32>
    %354 = arith.maximumf %352, %353 : vector<32x128xf32>
    %c632 = arith.constant 632 : index
    %c0_121 = arith.constant 0 : index
    %355 = vector.load %arg5[%c632, %c0_121] : memref<776x256xf32, #tpu.memory_space<vmem>>, vector<128x20xf32>
    %356 = arith.truncf %355 : vector<128x20xf32> to vector<128x20xbf16>
    %357 = arith.truncf %354 : vector<32x128xf32> to vector<32x128xbf16>
    %cst_122 = arith.constant dense<0.000000e+00> : vector<32x20xf32>
    %358 = tpu.matmul %357, %356, %cst_122 {dimension_numbers = #tpu.dot_dimension_numbers<[1], [0], [0], [1], [0, 0, 1, 1], [], []>} : vector<32x128xbf16>, vector<128x20xbf16>, vector<32x20xf32> -> vector<32x20xf32>
    %c760 = arith.constant 760 : index
    %c0_123 = arith.constant 0 : index
    %359 = vector.load %arg5[%c760, %c0_123] : memref<776x256xf32, #tpu.memory_space<vmem>>, vector<1x20xf32>
    %360 = vector.broadcast %359 : vector<1x20xf32> to vector<32x20xf32>
    %361 = arith.addf %358, %360 : vector<32x20xf32>
    %362 = vector.extract_strided_slice %361 {offsets = [0, 0], sizes = [32, 10], strides = [1, 1]} : vector<32x20xf32> to vector<32x10xf32>
    %363 = vector.extract_strided_slice %361 {offsets = [0, 10], sizes = [32, 10], strides = [1, 1]} : vector<32x20xf32> to vector<32x10xf32>
    %364 = math.exp %363 : vector<32x10xf32>
    %365 = tpu.concatenate %36, %36, %36, %36 in 0 : vector<8x10xf32>, vector<8x10xf32>, vector<8x10xf32>, vector<8x10xf32> -> vector<32x10xf32>
    %366 = math.log %364 : vector<32x10xf32>
    %cst_124 = arith.constant 1.83787704 : f32
    %367 = vector.broadcast %cst_124 : f32 to vector<32x10xf32>
    %368 = arith.addf %367, %366 : vector<32x10xf32>
    %cst_125 = arith.constant -5.000000e-01 : f32
    %369 = vector.broadcast %cst_125 : f32 to vector<32x10xf32>
    %370 = arith.mulf %369, %368 : vector<32x10xf32>
    %371 = arith.subf %365, %362 : vector<32x10xf32>
    %372 = arith.subf %365, %362 : vector<32x10xf32>
    %373 = arith.mulf %371, %372 : vector<32x10xf32>
    %cst_126 = arith.constant 2.000000e+00 : f32
    %374 = vector.broadcast %cst_126 : f32 to vector<32x10xf32>
    %375 = arith.mulf %374, %364 : vector<32x10xf32>
    %376 = arith.divf %373, %375 : vector<32x10xf32>
    %377 = arith.subf %370, %376 : vector<32x10xf32>
    %cst_127 = arith.constant dense<0.000000e+00> : vector<32xf32>
    %378 = vector.multi_reduction <add>, %377, %cst_127 [1] : vector<32x10xf32> to vector<32xf32>
    %379 = vector.shape_cast %378 : vector<32xf32> to vector<32x1xf32>
    %cst_128 = arith.constant 0.000000e+00 : f32
    %380 = vector.broadcast %cst_128 : f32 to vector<32x1xf32>
    %381 = arith.subf %380, %379 : vector<32x1xf32>
    %cst_129 = arith.constant 0.000000e+00 : f32
    %382 = vector.broadcast %cst_129 : f32 to vector<8x1xf32>
    %383 = vector.extract_strided_slice %68 {offsets = [0, 0], sizes = [8, 1], strides = [1, 1]} : vector<8x4xf32> to vector<8x1xf32>
    %384 = vector.extract_strided_slice %381 {offsets = [0, 0], sizes = [8, 1], strides = [1, 1]} : vector<32x1xf32> to vector<8x1xf32>
    %385 = arith.mulf %383, %384 : vector<8x1xf32>
    %386 = arith.addf %382, %385 : vector<8x1xf32>
    %387 = vector.extract_strided_slice %68 {offsets = [0, 1], sizes = [8, 1], strides = [1, 1]} : vector<8x4xf32> to vector<8x1xf32>
    %388 = vector.extract_strided_slice %381 {offsets = [8, 0], sizes = [8, 1], strides = [1, 1]} : vector<32x1xf32> to vector<8x1xf32>
    %389 = arith.mulf %387, %388 : vector<8x1xf32>
    %390 = arith.addf %386, %389 : vector<8x1xf32>
    %391 = vector.extract_strided_slice %68 {offsets = [0, 2], sizes = [8, 1], strides = [1, 1]} : vector<8x4xf32> to vector<8x1xf32>
    %392 = vector.extract_strided_slice %381 {offsets = [16, 0], sizes = [8, 1], strides = [1, 1]} : vector<32x1xf32> to vector<8x1xf32>
    %393 = arith.mulf %391, %392 : vector<8x1xf32>
    %394 = arith.addf %390, %393 : vector<8x1xf32>
    %395 = vector.extract_strided_slice %68 {offsets = [0, 3], sizes = [8, 1], strides = [1, 1]} : vector<8x4xf32> to vector<8x1xf32>
    %396 = vector.extract_strided_slice %381 {offsets = [24, 0], sizes = [8, 1], strides = [1, 1]} : vector<32x1xf32> to vector<8x1xf32>
    %397 = arith.mulf %395, %396 : vector<8x1xf32>
    %398 = arith.addf %394, %397 : vector<8x1xf32>
    %399 = math.log %28 : vector<8x10xf32>
    %cst_130 = arith.constant 1.83787704 : f32
    %400 = vector.broadcast %cst_130 : f32 to vector<8x10xf32>
    %401 = arith.addf %400, %399 : vector<8x10xf32>
    %cst_131 = arith.constant -5.000000e-01 : f32
    %402 = vector.broadcast %cst_131 : f32 to vector<8x10xf32>
    %403 = arith.mulf %402, %401 : vector<8x10xf32>
    %404 = arith.subf %36, %24 : vector<8x10xf32>
    %405 = arith.subf %36, %24 : vector<8x10xf32>
    %406 = arith.mulf %404, %405 : vector<8x10xf32>
    %cst_132 = arith.constant 2.000000e+00 : f32
    %407 = vector.broadcast %cst_132 : f32 to vector<8x10xf32>
    %408 = arith.mulf %407, %28 : vector<8x10xf32>
    %409 = arith.divf %406, %408 : vector<8x10xf32>
    %410 = arith.subf %403, %409 : vector<8x10xf32>
    %cst_133 = arith.constant dense<0.000000e+00> : vector<8xf32>
    %411 = vector.multi_reduction <add>, %410, %cst_133 [1] : vector<8x10xf32> to vector<8xf32>
    %412 = vector.shape_cast %411 : vector<8xf32> to vector<8x1xf32>
    %413 = arith.addf %277, %412 : vector<8x1xf32>
    %414 = arith.addf %413, %398 : vector<8x1xf32>
    %415 = tpu.iota {dimensions = array<i32: 1>} : vector<8x128xi32>
    %c0_i32 = arith.constant 0 : i32
    %416 = vector.broadcast %c0_i32 : i32 to vector<8x128xi32>
    %417 = arith.cmpi eq, %415, %416 : vector<8x128xi32>
    %cst_134 = arith.constant 0.000000e+00 : f32
    %418 = vector.shape_cast %414 : vector<8x1xf32> to vector<8x1xf32>
    %419 = vector.broadcast %418 : vector<8x1xf32> to vector<8x128xf32>
    %420 = vector.broadcast %cst_134 : f32 to vector<8x128xf32>
    %421 = arith.select %417, %419, %420 : vector<8x128xi1>, vector<8x128xf32>
    %c0_135 = arith.constant 0 : index
    %c0_136 = arith.constant 0 : index
    %422 = vector.load %arg10[%c0_135, %c0_136] : memref<8x128xf32, #tpu.memory_space<vmem>>, vector<8x128xf32>
    tpu.vector_store %arg10[%c0_135, %c0_136], %421 {strides = array<i32>} : memref<8x128xf32, #tpu.memory_space<vmem>>, vector<8x128xf32>,
    %c8_i32 = arith.constant 8 : i32
    %423 = arith.muli %arg0, %c8_i32 : i32
    %424 = tpu.assume_multiple %423, 8 : i32
    %425 = arith.index_cast %424 : i32 to index
    %c0_137 = arith.constant 0 : index
    %426 = vector.load %arg11[%425, %c0_137] : memref<16x10xf32, #tpu.memory_space<vmem>>, vector<8x10xf32>
    tpu.vector_store %arg11[%425, %c0_137], %36 {strides = array<i32>} : memref<16x10xf32, #tpu.memory_space<vmem>>, vector<8x10xf32>,
    %c1_i32 = arith.constant 1 : i32
    %427 = arith.cmpi eq, %arg0, %c1_i32 : i32
    %428 = arith.extui %427 : i1 to i32
    %c0_i32_138 = arith.constant 0 : i32
    %429 = arith.cmpi ne, %428, %c0_i32_138 : i32
    scf.if %429 {
      %c0_139 = arith.constant 0 : index
      %c0_140 = arith.constant 0 : index
      %430 = vector.load %arg11[%c0_139, %c0_140] : memref<16x10xf32, #tpu.memory_space<vmem>>, vector<16x10xf32>
      %c0_141 = arith.constant 0 : index
      %c0_142 = arith.constant 0 : index
      %431 = vector.load %arg4[%c0_141, %c0_142] : memref<16x10xf32, #tpu.memory_space<vmem>>, vector<16x10xf32>
      %432 = arith.mulf %430, %430 : vector<16x10xf32>
      %433 = arith.mulf %431, %431 : vector<16x10xf32>
      %cst_143 = arith.constant dense<0.000000e+00> : vector<16xf32>
      %434 = vector.multi_reduction <add>, %432, %cst_143 [1] : vector<16x10xf32> to vector<16xf32>
      %435 = vector.shape_cast %434 : vector<16xf32> to vector<16x1xf32>
      %cst_144 = arith.constant dense<0.000000e+00> : vector<16xf32>
      %436 = vector.multi_reduction <add>, %433, %cst_144 [1] : vector<16x10xf32> to vector<16xf32>
      %437 = vector.shape_cast %436 : vector<16xf32> to vector<16x1xf32>
      %cst_145 = arith.constant 1.000000e+00 : f32
      %438 = vector.broadcast %cst_145 : f32 to vector<16x10xf32>
      %cst_146 = arith.constant dense<0.000000e+00> : vector<16x16xf32>
      %439 = tpu.matmul %438, %432, %cst_146 {dimension_numbers = #tpu.dot_dimension_numbers<[1], [1], [0], [0], [0, 0, 1, 0], [], []>} : vector<16x10xf32>, vector<16x10xf32>, vector<16x16xf32> -> vector<16x16xf32>
      %cst_147 = arith.constant 1.000000e+00 : f32
      %440 = vector.broadcast %cst_147 : f32 to vector<16x10xf32>
      %cst_148 = arith.constant dense<0.000000e+00> : vector<16x16xf32>
      %441 = tpu.matmul %440, %433, %cst_148 {dimension_numbers = #tpu.dot_dimension_numbers<[1], [1], [0], [0], [0, 0, 1, 0], [], []>} : vector<16x10xf32>, vector<16x10xf32>, vector<16x16xf32> -> vector<16x16xf32>
      %cst_149 = arith.constant dense<0.000000e+00> : vector<16xf32>
      %442 = vector.multi_reduction <add>, %430, %cst_149 [1] : vector<16x10xf32> to vector<16xf32>
      %443 = vector.shape_cast %442 : vector<16xf32> to vector<16x1xf32>
      %444 = arith.mulf %443, %443 : vector<16x1xf32>
      %cst_150 = arith.constant dense<0.000000e+00> : vector<16xf32>
      %445 = vector.multi_reduction <add>, %444, %cst_150 [1] : vector<16x1xf32> to vector<16xf32>
      %446 = vector.shape_cast %445 : vector<16xf32> to vector<16x1xf32>
      %cst_151 = arith.constant dense<0.000000e+00> : vector<1xf32>
      %447 = vector.multi_reduction <add>, %446, %cst_151 [0] : vector<16x1xf32> to vector<1xf32>
      %448 = vector.shape_cast %447 : vector<1xf32> to vector<1x1xf32>
      %449 = vector.broadcast %435 : vector<16x1xf32> to vector<16x16xf32>
      %450 = arith.addf %449, %439 : vector<16x16xf32>
      %cst_152 = arith.constant 2.000000e+00 : f32
      %451 = vector.broadcast %cst_152 : f32 to vector<1x1xf32>
      %452 = arith.mulf %451, %448 : vector<1x1xf32>
      %453 = vector.broadcast %452 : vector<1x1xf32> to vector<16x16xf32>
      %454 = arith.subf %450, %453 : vector<16x16xf32>
      %455 = vector.broadcast %437 : vector<16x1xf32> to vector<16x16xf32>
      %456 = arith.addf %455, %441 : vector<16x16xf32>
      %cst_153 = arith.constant 2.000000e+00 : f32
      %457 = vector.broadcast %cst_153 : f32 to vector<1x1xf32>
      %458 = arith.mulf %457, %448 : vector<1x1xf32>
      %459 = vector.broadcast %458 : vector<1x1xf32> to vector<16x16xf32>
      %460 = arith.subf %456, %459 : vector<16x16xf32>
      %461 = vector.broadcast %437 : vector<16x1xf32> to vector<16x16xf32>
      %462 = arith.addf %461, %439 : vector<16x16xf32>
      %cst_154 = arith.constant 2.000000e+00 : f32
      %463 = vector.broadcast %cst_154 : f32 to vector<1x1xf32>
      %464 = arith.mulf %463, %448 : vector<1x1xf32>
      %465 = vector.broadcast %464 : vector<1x1xf32> to vector<16x16xf32>
      %466 = arith.subf %462, %465 : vector<16x16xf32>
      %467 = tpu.iota {dimensions = array<i32: 0>} : vector<16x16xi32>
      %468 = tpu.iota {dimensions = array<i32: 1>} : vector<16x16xi32>
      %469 = arith.cmpi ne, %467, %468 : vector<16x16xi32>
      %470 = arith.extui %469 : vector<16x16xi1> to vector<16x16xi32>
      %471 = arith.sitofp %470 : vector<16x16xi32> to vector<16x16xf32>
      %cst_155 = arith.constant 0.000000e+00 : f32
      %472 = vector.broadcast %cst_155 : f32 to vector<1x1xf32>
      %cst_156 = arith.constant 2.000000e+00 : f32
      %473 = vector.broadcast %cst_156 : f32 to vector<16x16xf32>
      %474 = arith.addf %473, %454 : vector<16x16xf32>
      %cst_157 = arith.constant 2.000000e+00 : f32
      %475 = vector.broadcast %cst_157 : f32 to vector<16x16xf32>
      %476 = arith.divf %475, %474 : vector<16x16xf32>
      %cst_158 = arith.constant 2.000000e+00 : f32
      %477 = vector.broadcast %cst_158 : f32 to vector<16x16xf32>
      %478 = arith.addf %477, %460 : vector<16x16xf32>
      %cst_159 = arith.constant 2.000000e+00 : f32
      %479 = vector.broadcast %cst_159 : f32 to vector<16x16xf32>
      %480 = arith.divf %479, %478 : vector<16x16xf32>
      %481 = arith.addf %476, %480 : vector<16x16xf32>
      %482 = arith.mulf %471, %481 : vector<16x16xf32>
      %cst_160 = arith.constant 2.000000e+00 : f32
      %483 = vector.broadcast %cst_160 : f32 to vector<16x16xf32>
      %484 = arith.addf %483, %466 : vector<16x16xf32>
      %cst_161 = arith.constant 2.000000e+00 : f32
      %485 = vector.broadcast %cst_161 : f32 to vector<16x16xf32>
      %486 = arith.divf %485, %484 : vector<16x16xf32>
      %cst_162 = arith.constant dense<0.000000e+00> : vector<16xf32>
      %487 = vector.multi_reduction <add>, %482, %cst_162 [1] : vector<16x16xf32> to vector<16xf32>
      %488 = vector.shape_cast %487 : vector<16xf32> to vector<16x1xf32>
      %cst_163 = arith.constant dense<0.000000e+00> : vector<1xf32>
      %489 = vector.multi_reduction <add>, %488, %cst_163 [0] : vector<16x1xf32> to vector<1xf32>
      %490 = vector.shape_cast %489 : vector<1xf32> to vector<1x1xf32>
      %cst_164 = arith.constant 0.0666666701 : f32
      %491 = vector.broadcast %cst_164 : f32 to vector<1x1xf32>
      %492 = arith.mulf %490, %491 : vector<1x1xf32>
      %493 = arith.addf %472, %492 : vector<1x1xf32>
      %cst_165 = arith.constant dense<0.000000e+00> : vector<16xf32>
      %494 = vector.multi_reduction <add>, %486, %cst_165 [1] : vector<16x16xf32> to vector<16xf32>
      %495 = vector.shape_cast %494 : vector<16xf32> to vector<16x1xf32>
      %cst_166 = arith.constant dense<0.000000e+00> : vector<1xf32>
      %496 = vector.multi_reduction <add>, %495, %cst_166 [0] : vector<16x1xf32> to vector<1xf32>
      %497 = vector.shape_cast %496 : vector<1xf32> to vector<1x1xf32>
      %cst_167 = arith.constant 1.250000e-01 : f32
      %498 = vector.broadcast %cst_167 : f32 to vector<1x1xf32>
      %499 = arith.mulf %497, %498 : vector<1x1xf32>
      %500 = arith.subf %493, %499 : vector<1x1xf32>
      %cst_168 = arith.constant 4.000000e+00 : f32
      %501 = vector.broadcast %cst_168 : f32 to vector<16x16xf32>
      %502 = arith.addf %501, %454 : vector<16x16xf32>
      %cst_169 = arith.constant 4.000000e+00 : f32
      %503 = vector.broadcast %cst_169 : f32 to vector<16x16xf32>
      %504 = arith.divf %503, %502 : vector<16x16xf32>
      %cst_170 = arith.constant 4.000000e+00 : f32
      %505 = vector.broadcast %cst_170 : f32 to vector<16x16xf32>
      %506 = arith.addf %505, %460 : vector<16x16xf32>
      %cst_171 = arith.constant 4.000000e+00 : f32
      %507 = vector.broadcast %cst_171 : f32 to vector<16x16xf32>
      %508 = arith.divf %507, %506 : vector<16x16xf32>
      %509 = arith.addf %504, %508 : vector<16x16xf32>
      %510 = arith.mulf %471, %509 : vector<16x16xf32>
      %cst_172 = arith.constant 4.000000e+00 : f32
      %511 = vector.broadcast %cst_172 : f32 to vector<16x16xf32>
      %512 = arith.addf %511, %466 : vector<16x16xf32>
      %cst_173 = arith.constant 4.000000e+00 : f32
      %513 = vector.broadcast %cst_173 : f32 to vector<16x16xf32>
      %514 = arith.divf %513, %512 : vector<16x16xf32>
      %cst_174 = arith.constant dense<0.000000e+00> : vector<16xf32>
      %515 = vector.multi_reduction <add>, %510, %cst_174 [1] : vector<16x16xf32> to vector<16xf32>
      %516 = vector.shape_cast %515 : vector<16xf32> to vector<16x1xf32>
      %cst_175 = arith.constant dense<0.000000e+00> : vector<1xf32>
      %517 = vector.multi_reduction <add>, %516, %cst_175 [0] : vector<16x1xf32> to vector<1xf32>
      %518 = vector.shape_cast %517 : vector<1xf32> to vector<1x1xf32>
      %cst_176 = arith.constant 0.0666666701 : f32
      %519 = vector.broadcast %cst_176 : f32 to vector<1x1xf32>
      %520 = arith.mulf %518, %519 : vector<1x1xf32>
      %521 = arith.addf %500, %520 : vector<1x1xf32>
      %cst_177 = arith.constant dense<0.000000e+00> : vector<16xf32>
      %522 = vector.multi_reduction <add>, %514, %cst_177 [1] : vector<16x16xf32> to vector<16xf32>
      %523 = vector.shape_cast %522 : vector<16xf32> to vector<16x1xf32>
      %cst_178 = arith.constant dense<0.000000e+00> : vector<1xf32>
      %524 = vector.multi_reduction <add>, %523, %cst_178 [0] : vector<16x1xf32> to vector<1xf32>
      %525 = vector.shape_cast %524 : vector<1xf32> to vector<1x1xf32>
      %cst_179 = arith.constant 1.250000e-01 : f32
      %526 = vector.broadcast %cst_179 : f32 to vector<1x1xf32>
      %527 = arith.mulf %525, %526 : vector<1x1xf32>
      %528 = arith.subf %521, %527 : vector<1x1xf32>
      %cst_180 = arith.constant 1.000000e+01 : f32
      %529 = vector.broadcast %cst_180 : f32 to vector<16x16xf32>
      %530 = arith.addf %529, %454 : vector<16x16xf32>
      %cst_181 = arith.constant 1.000000e+01 : f32
      %531 = vector.broadcast %cst_181 : f32 to vector<16x16xf32>
      %532 = arith.divf %531, %530 : vector<16x16xf32>
      %cst_182 = arith.constant 1.000000e+01 : f32
      %533 = vector.broadcast %cst_182 : f32 to vector<16x16xf32>
      %534 = arith.addf %533, %460 : vector<16x16xf32>
      %cst_183 = arith.constant 1.000000e+01 : f32
      %535 = vector.broadcast %cst_183 : f32 to vector<16x16xf32>
      %536 = arith.divf %535, %534 : vector<16x16xf32>
      %537 = arith.addf %532, %536 : vector<16x16xf32>
      %538 = arith.mulf %471, %537 : vector<16x16xf32>
      %cst_184 = arith.constant 1.000000e+01 : f32
      %539 = vector.broadcast %cst_184 : f32 to vector<16x16xf32>
      %540 = arith.addf %539, %466 : vector<16x16xf32>
      %cst_185 = arith.constant 1.000000e+01 : f32
      %541 = vector.broadcast %cst_185 : f32 to vector<16x16xf32>
      %542 = arith.divf %541, %540 : vector<16x16xf32>
      %cst_186 = arith.constant dense<0.000000e+00> : vector<16xf32>
      %543 = vector.multi_reduction <add>, %538, %cst_186 [1] : vector<16x16xf32> to vector<16xf32>
      %544 = vector.shape_cast %543 : vector<16xf32> to vector<16x1xf32>
      %cst_187 = arith.constant dense<0.000000e+00> : vector<1xf32>
      %545 = vector.multi_reduction <add>, %544, %cst_187 [0] : vector<16x1xf32> to vector<1xf32>
      %546 = vector.shape_cast %545 : vector<1xf32> to vector<1x1xf32>
      %cst_188 = arith.constant 0.0666666701 : f32
      %547 = vector.broadcast %cst_188 : f32 to vector<1x1xf32>
      %548 = arith.mulf %546, %547 : vector<1x1xf32>
      %549 = arith.addf %528, %548 : vector<1x1xf32>
      %cst_189 = arith.constant dense<0.000000e+00> : vector<16xf32>
      %550 = vector.multi_reduction <add>, %542, %cst_189 [1] : vector<16x16xf32> to vector<16xf32>
      %551 = vector.shape_cast %550 : vector<16xf32> to vector<16x1xf32>
      %cst_190 = arith.constant dense<0.000000e+00> : vector<1xf32>
      %552 = vector.multi_reduction <add>, %551, %cst_190 [0] : vector<16x1xf32> to vector<1xf32>
      %553 = vector.shape_cast %552 : vector<1xf32> to vector<1x1xf32>
      %cst_191 = arith.constant 1.250000e-01 : f32
      %554 = vector.broadcast %cst_191 : f32 to vector<1x1xf32>
      %555 = arith.mulf %553, %554 : vector<1x1xf32>
      %556 = arith.subf %549, %555 : vector<1x1xf32>
      %cst_192 = arith.constant 2.000000e+01 : f32
      %557 = vector.broadcast %cst_192 : f32 to vector<16x16xf32>
      %558 = arith.addf %557, %454 : vector<16x16xf32>
      %cst_193 = arith.constant 2.000000e+01 : f32
      %559 = vector.broadcast %cst_193 : f32 to vector<16x16xf32>
      %560 = arith.divf %559, %558 : vector<16x16xf32>
      %cst_194 = arith.constant 2.000000e+01 : f32
      %561 = vector.broadcast %cst_194 : f32 to vector<16x16xf32>
      %562 = arith.addf %561, %460 : vector<16x16xf32>
      %cst_195 = arith.constant 2.000000e+01 : f32
      %563 = vector.broadcast %cst_195 : f32 to vector<16x16xf32>
      %564 = arith.divf %563, %562 : vector<16x16xf32>
      %565 = arith.addf %560, %564 : vector<16x16xf32>
      %566 = arith.mulf %471, %565 : vector<16x16xf32>
      %cst_196 = arith.constant 2.000000e+01 : f32
      %567 = vector.broadcast %cst_196 : f32 to vector<16x16xf32>
      %568 = arith.addf %567, %466 : vector<16x16xf32>
      %cst_197 = arith.constant 2.000000e+01 : f32
      %569 = vector.broadcast %cst_197 : f32 to vector<16x16xf32>
      %570 = arith.divf %569, %568 : vector<16x16xf32>
      %cst_198 = arith.constant dense<0.000000e+00> : vector<16xf32>
      %571 = vector.multi_reduction <add>, %566, %cst_198 [1] : vector<16x16xf32> to vector<16xf32>
      %572 = vector.shape_cast %571 : vector<16xf32> to vector<16x1xf32>
      %cst_199 = arith.constant dense<0.000000e+00> : vector<1xf32>
      %573 = vector.multi_reduction <add>, %572, %cst_199 [0] : vector<16x1xf32> to vector<1xf32>
      %574 = vector.shape_cast %573 : vector<1xf32> to vector<1x1xf32>
      %cst_200 = arith.constant 0.0666666701 : f32
      %575 = vector.broadcast %cst_200 : f32 to vector<1x1xf32>
      %576 = arith.mulf %574, %575 : vector<1x1xf32>
      %577 = arith.addf %556, %576 : vector<1x1xf32>
      %cst_201 = arith.constant dense<0.000000e+00> : vector<16xf32>
      %578 = vector.multi_reduction <add>, %570, %cst_201 [1] : vector<16x16xf32> to vector<16xf32>
      %579 = vector.shape_cast %578 : vector<16xf32> to vector<16x1xf32>
      %cst_202 = arith.constant dense<0.000000e+00> : vector<1xf32>
      %580 = vector.multi_reduction <add>, %579, %cst_202 [0] : vector<16x1xf32> to vector<1xf32>
      %581 = vector.shape_cast %580 : vector<1xf32> to vector<1x1xf32>
      %cst_203 = arith.constant 1.250000e-01 : f32
      %582 = vector.broadcast %cst_203 : f32 to vector<1x1xf32>
      %583 = arith.mulf %581, %582 : vector<1x1xf32>
      %584 = arith.subf %577, %583 : vector<1x1xf32>
      %cst_204 = arith.constant 4.000000e+01 : f32
      %585 = vector.broadcast %cst_204 : f32 to vector<16x16xf32>
      %586 = arith.addf %585, %454 : vector<16x16xf32>
      %cst_205 = arith.constant 4.000000e+01 : f32
      %587 = vector.broadcast %cst_205 : f32 to vector<16x16xf32>
      %588 = arith.divf %587, %586 : vector<16x16xf32>
      %cst_206 = arith.constant 4.000000e+01 : f32
      %589 = vector.broadcast %cst_206 : f32 to vector<16x16xf32>
      %590 = arith.addf %589, %460 : vector<16x16xf32>
      %cst_207 = arith.constant 4.000000e+01 : f32
      %591 = vector.broadcast %cst_207 : f32 to vector<16x16xf32>
      %592 = arith.divf %591, %590 : vector<16x16xf32>
      %593 = arith.addf %588, %592 : vector<16x16xf32>
      %594 = arith.mulf %471, %593 : vector<16x16xf32>
      %cst_208 = arith.constant 4.000000e+01 : f32
      %595 = vector.broadcast %cst_208 : f32 to vector<16x16xf32>
      %596 = arith.addf %595, %466 : vector<16x16xf32>
      %cst_209 = arith.constant 4.000000e+01 : f32
      %597 = vector.broadcast %cst_209 : f32 to vector<16x16xf32>
      %598 = arith.divf %597, %596 : vector<16x16xf32>
      %cst_210 = arith.constant dense<0.000000e+00> : vector<16xf32>
      %599 = vector.multi_reduction <add>, %594, %cst_210 [1] : vector<16x16xf32> to vector<16xf32>
      %600 = vector.shape_cast %599 : vector<16xf32> to vector<16x1xf32>
      %cst_211 = arith.constant dense<0.000000e+00> : vector<1xf32>
      %601 = vector.multi_reduction <add>, %600, %cst_211 [0] : vector<16x1xf32> to vector<1xf32>
      %602 = vector.shape_cast %601 : vector<1xf32> to vector<1x1xf32>
      %cst_212 = arith.constant 0.0666666701 : f32
      %603 = vector.broadcast %cst_212 : f32 to vector<1x1xf32>
      %604 = arith.mulf %602, %603 : vector<1x1xf32>
      %605 = arith.addf %584, %604 : vector<1x1xf32>
      %cst_213 = arith.constant dense<0.000000e+00> : vector<16xf32>
      %606 = vector.multi_reduction <add>, %598, %cst_213 [1] : vector<16x16xf32> to vector<16xf32>
      %607 = vector.shape_cast %606 : vector<16xf32> to vector<16x1xf32>
      %cst_214 = arith.constant dense<0.000000e+00> : vector<1xf32>
      %608 = vector.multi_reduction <add>, %607, %cst_214 [0] : vector<16x1xf32> to vector<1xf32>
      %609 = vector.shape_cast %608 : vector<1xf32> to vector<1x1xf32>
      %cst_215 = arith.constant 1.250000e-01 : f32
      %610 = vector.broadcast %cst_215 : f32 to vector<1x1xf32>
      %611 = arith.mulf %609, %610 : vector<1x1xf32>
      %612 = arith.subf %605, %611 : vector<1x1xf32>
      %cst_216 = arith.constant 1.000000e+02 : f32
      %613 = vector.broadcast %cst_216 : f32 to vector<16x16xf32>
      %614 = arith.addf %613, %454 : vector<16x16xf32>
      %cst_217 = arith.constant 1.000000e+02 : f32
      %615 = vector.broadcast %cst_217 : f32 to vector<16x16xf32>
      %616 = arith.divf %615, %614 : vector<16x16xf32>
      %cst_218 = arith.constant 1.000000e+02 : f32
      %617 = vector.broadcast %cst_218 : f32 to vector<16x16xf32>
      %618 = arith.addf %617, %460 : vector<16x16xf32>
      %cst_219 = arith.constant 1.000000e+02 : f32
      %619 = vector.broadcast %cst_219 : f32 to vector<16x16xf32>
      %620 = arith.divf %619, %618 : vector<16x16xf32>
      %621 = arith.addf %616, %620 : vector<16x16xf32>
      %622 = arith.mulf %471, %621 : vector<16x16xf32>
      %cst_220 = arith.constant 1.000000e+02 : f32
      %623 = vector.broadcast %cst_220 : f32 to vector<16x16xf32>
      %624 = arith.addf %623, %466 : vector<16x16xf32>
      %cst_221 = arith.constant 1.000000e+02 : f32
      %625 = vector.broadcast %cst_221 : f32 to vector<16x16xf32>
      %626 = arith.divf %625, %624 : vector<16x16xf32>
      %cst_222 = arith.constant dense<0.000000e+00> : vector<16xf32>
      %627 = vector.multi_reduction <add>, %622, %cst_222 [1] : vector<16x16xf32> to vector<16xf32>
      %628 = vector.shape_cast %627 : vector<16xf32> to vector<16x1xf32>
      %cst_223 = arith.constant dense<0.000000e+00> : vector<1xf32>
      %629 = vector.multi_reduction <add>, %628, %cst_223 [0] : vector<16x1xf32> to vector<1xf32>
      %630 = vector.shape_cast %629 : vector<1xf32> to vector<1x1xf32>
      %cst_224 = arith.constant 0.0666666701 : f32
      %631 = vector.broadcast %cst_224 : f32 to vector<1x1xf32>
      %632 = arith.mulf %630, %631 : vector<1x1xf32>
      %633 = arith.addf %612, %632 : vector<1x1xf32>
      %cst_225 = arith.constant dense<0.000000e+00> : vector<16xf32>
      %634 = vector.multi_reduction <add>, %626, %cst_225 [1] : vector<16x16xf32> to vector<16xf32>
      %635 = vector.shape_cast %634 : vector<16xf32> to vector<16x1xf32>
      %cst_226 = arith.constant dense<0.000000e+00> : vector<1xf32>
      %636 = vector.multi_reduction <add>, %635, %cst_226 [0] : vector<16x1xf32> to vector<1xf32>
      %637 = vector.shape_cast %636 : vector<1xf32> to vector<1x1xf32>
      %cst_227 = arith.constant 1.250000e-01 : f32
      %638 = vector.broadcast %cst_227 : f32 to vector<1x1xf32>
      %639 = arith.mulf %637, %638 : vector<1x1xf32>
      %640 = arith.subf %633, %639 : vector<1x1xf32>
      %cst_228 = arith.constant 2.000000e+02 : f32
      %641 = vector.broadcast %cst_228 : f32 to vector<16x16xf32>
      %642 = arith.addf %641, %454 : vector<16x16xf32>
      %cst_229 = arith.constant 2.000000e+02 : f32
      %643 = vector.broadcast %cst_229 : f32 to vector<16x16xf32>
      %644 = arith.divf %643, %642 : vector<16x16xf32>
      %cst_230 = arith.constant 2.000000e+02 : f32
      %645 = vector.broadcast %cst_230 : f32 to vector<16x16xf32>
      %646 = arith.addf %645, %460 : vector<16x16xf32>
      %cst_231 = arith.constant 2.000000e+02 : f32
      %647 = vector.broadcast %cst_231 : f32 to vector<16x16xf32>
      %648 = arith.divf %647, %646 : vector<16x16xf32>
      %649 = arith.addf %644, %648 : vector<16x16xf32>
      %650 = arith.mulf %471, %649 : vector<16x16xf32>
      %cst_232 = arith.constant 2.000000e+02 : f32
      %651 = vector.broadcast %cst_232 : f32 to vector<16x16xf32>
      %652 = arith.addf %651, %466 : vector<16x16xf32>
      %cst_233 = arith.constant 2.000000e+02 : f32
      %653 = vector.broadcast %cst_233 : f32 to vector<16x16xf32>
      %654 = arith.divf %653, %652 : vector<16x16xf32>
      %cst_234 = arith.constant dense<0.000000e+00> : vector<16xf32>
      %655 = vector.multi_reduction <add>, %650, %cst_234 [1] : vector<16x16xf32> to vector<16xf32>
      %656 = vector.shape_cast %655 : vector<16xf32> to vector<16x1xf32>
      %cst_235 = arith.constant dense<0.000000e+00> : vector<1xf32>
      %657 = vector.multi_reduction <add>, %656, %cst_235 [0] : vector<16x1xf32> to vector<1xf32>
      %658 = vector.shape_cast %657 : vector<1xf32> to vector<1x1xf32>
      %cst_236 = arith.constant 0.0666666701 : f32
      %659 = vector.broadcast %cst_236 : f32 to vector<1x1xf32>
      %660 = arith.mulf %658, %659 : vector<1x1xf32>
      %661 = arith.addf %640, %660 : vector<1x1xf32>
      %cst_237 = arith.constant dense<0.000000e+00> : vector<16xf32>
      %662 = vector.multi_reduction <add>, %654, %cst_237 [1] : vector<16x16xf32> to vector<16xf32>
      %663 = vector.shape_cast %662 : vector<16xf32> to vector<16x1xf32>
      %cst_238 = arith.constant dense<0.000000e+00> : vector<1xf32>
      %664 = vector.multi_reduction <add>, %663, %cst_238 [0] : vector<16x1xf32> to vector<1xf32>
      %665 = vector.shape_cast %664 : vector<1xf32> to vector<1x1xf32>
      %cst_239 = arith.constant 1.250000e-01 : f32
      %666 = vector.broadcast %cst_239 : f32 to vector<1x1xf32>
      %667 = arith.mulf %665, %666 : vector<1x1xf32>
      %668 = arith.subf %661, %667 : vector<1x1xf32>
      %c1_i32_240 = arith.constant 1 : i32
      %669 = vector.broadcast %c1_i32_240 : i32 to vector<8x128xi32>
      %670 = arith.cmpi eq, %415, %669 : vector<8x128xi32>
      %c0_241 = arith.constant 0 : index
      %c0_242 = arith.constant 0 : index
      %671 = vector.load %arg10[%c0_241, %c0_242] : memref<8x128xf32, #tpu.memory_space<vmem>>, vector<8x128xf32>
      %672 = vector.shape_cast %668 : vector<1x1xf32> to vector<1x1xf32>
      %673 = vector.broadcast %672 : vector<1x1xf32> to vector<8x128xf32>
      %674 = arith.select %670, %673, %671 : vector<8x128xi1>, vector<8x128xf32>
      %c0_243 = arith.constant 0 : index
      %c0_244 = arith.constant 0 : index
      %675 = vector.load %arg10[%c0_243, %c0_244] : memref<8x128xf32, #tpu.memory_space<vmem>>, vector<8x128xf32>
      tpu.vector_store %arg10[%c0_243, %c0_244], %674 {strides = array<i32>} : memref<8x128xf32, #tpu.memory_space<vmem>>, vector<8x128xf32>,
    } else {
    }
    return
  }
  func.func @transform_0(%arg0: i32) -> (i32, i32) {
    %c0_i32 = arith.constant 0 : i32
    %c0_i32_0 = arith.constant 0 : i32
    return %arg0, %c0_i32 : i32, i32
  }
  func.func @transform_1(%arg0: i32) -> (i32, i32) {
    %c0_i32 = arith.constant 0 : i32
    %c0_i32_0 = arith.constant 0 : i32
    return %arg0, %c0_i32 : i32, i32
  }
  func.func @transform_2(%arg0: i32) -> (i32, i32, i32) {
    %c0_i32 = arith.constant 0 : i32
    %c0_i32_0 = arith.constant 0 : i32
    %c0_i32_1 = arith.constant 0 : i32
    return %c0_i32, %arg0, %c0_i32_0 : i32, i32, i32
  }
  func.func @transform_3(%arg0: i32) -> (i32, i32) {
    %c0_i32 = arith.constant 0 : i32
    %c0_i32_0 = arith.constant 0 : i32
    %c0_i32_1 = arith.constant 0 : i32
    return %c0_i32, %c0_i32_0 : i32, i32
  }
  func.func @transform_4(%arg0: i32) -> (i32, i32) {
    %c0_i32 = arith.constant 0 : i32
    %c0_i32_0 = arith.constant 0 : i32
    %c0_i32_1 = arith.constant 0 : i32
    return %c0_i32, %c0_i32_0 : i32, i32
  }
  func.func @transform_5(%arg0: i32) -> (i32, i32) {
    %c0_i32 = arith.constant 0 : i32
    %c0_i32_0 = arith.constant 0 : i32
    %c0_i32_1 = arith.constant 0 : i32
    return %c0_i32, %c0_i32_0 : i32, i32
  }
  func.func @transform_6(%arg0: i32) -> (i32, i32) {
    %c0_i32 = arith.constant 0 : i32
    %c0_i32_0 = arith.constant 0 : i32
    %c0_i32_1 = arith.constant 0 : i32
    return %c0_i32, %c0_i32_0 : i32, i32
  }
  func.func @transform_7(%arg0: i32) -> (i32, i32) {
    %c0_i32 = arith.constant 0 : i32
    %c0_i32_0 = arith.constant 0 : i32
    %c0_i32_1 = arith.constant 0 : i32
    return %c0_i32, %c0_i32_0 : i32, i32
  }
  func.func @transform_8(%arg0: i32) -> (i32, i32) {
    %c0_i32 = arith.constant 0 : i32
    %c0_i32_0 = arith.constant 0 : i32
    %c0_i32_1 = arith.constant 0 : i32
    return %c0_i32, %c0_i32_0 : i32, i32
  }
  func.func @transform_9(%arg0: i32) -> (i32, i32) {
    %c0_i32 = arith.constant 0 : i32
    %c0_i32_0 = arith.constant 0 : i32
    return %arg0, %c0_i32 : i32, i32
  }
}

</mosaic_0001>

<llo_original>
// kernel: tpu_custom_call.1
$region0: #{tpu_custom_call.1}
  #allocation0 [shape = 'u32[]', space=smem, size = 0x4, offset = 0x4, fixed_abs, tag = 'smem constant byte address 0x4 - core index']
  #allocation1 [shape = 'u32[72,128]{1,0:T(1,128)}', space=vmem, size = 0x9000, scoped, tag = 'internal scratch']
  #allocation2 [shape = 'f32[16,10]{1,0:T(8,128)}', space=vmem, size = 0x2000, scoped, tag = 'scratch operand']
  %s0 = inlined_call_operand.vmem [shape: f32[16,256], index: 0, kind: input, shape index: {}]
  %s1 = inlined_call_operand.vmem [shape: f32[16,13], index: 1, kind: input, shape index: {}]
  %s2 = inlined_call_operand.vmem [shape: f32[4,16,10], index: 2, kind: input, shape index: {}]
  %s3 = inlined_call_operand.vmem [shape: f32[16,10], index: 3, kind: input, shape index: {}]
  %s4 = inlined_call_operand.hbm [shape: f32[776,256], index: 4, kind: input, shape index: {}]
  %s5 = inlined_call_operand.hbm [shape: bf16[256,256], index: 5, kind: input, shape index: {}]
  %s6 = inlined_call_operand.hbm [shape: bf16[128,512], index: 6, kind: input, shape index: {}]
  %s7 = inlined_call_operand.vmem [shape: f32[1,512], index: 7, kind: input, shape index: {}]
  %s8 = inlined_call_operand.vmem [shape: f32[3,256], index: 8, kind: input, shape index: {}]
  %s9 = inlined_call_operand.hbm [shape: f32[16,128], index: 9, kind: output, shape index: {}]
  %s10 = sld [smem:[#allocation0]]
  $region123: #{tpu_custom_call.1} parent=0
    _
  %s12 = ssub.s32 1, %s10
  %s13 = scalar_select 0, %s12, %s10
  $region1: #{tpu_custom_call.1} parent=0
    #allocation3 [shape = 'u8[32768]{0}', space=vmem, size = 0x8000, scoped, tag = 'input window, operand 2']
    #allocation4 [shape = 'u8[794624]{0}', space=vmem, size = 0xc2000, scoped, tag = 'input window, operand 4, single buffered']
    #allocation5 [shape = 's32[2]{0}', space=sflag, size = 0x8, scoped, tag = 'scoped memory for tpu_custom_call.1']
    #allocation6 [shape = 's32[2]{0}', space=sflag, size = 0x8, scoped, tag = 'scoped memory for tpu_custom_call.1']
    #allocation7 [shape = 'u8[131072]{0}', space=vmem, size = 0x20000, scoped, tag = 'input window, operand 5, single buffered']
    #allocation8 [shape = 's32[1]{0}', space=sflag, size = 0x4, scoped, tag = 'scoped memory for tpu_custom_call.1']
    #allocation9 [shape = 'u8[131072]{0}', space=vmem, size = 0x20000, scoped, tag = 'input window, operand 6, single buffered']
    #allocation10 [shape = 'u8[8192]{0}', space=vmem, size = 0x2000, scoped, tag = 'output window, operand 0']
    %14 = vsyncpa [#allocation5], 0
    %15 = vsyncpa [#allocation8], 0
    %16 = vsyncpa [#allocation6], 0
    %s17 = scalar_lea.sflag [#allocation6], 1
    %18 = vsyncpa %s17, 0
    loop: start=0, step=1, limit=4
    $region2: #{tpu_custom_call.1} parent=1 // loop_pre_header
      _
    $region3: #{tpu_custom_call.1} parent=1 // loop_header
      %s20 = sphi 0, %s24
      %p21 = scmp.ge.s32.totalorder %s20, 4
      %s30 = sphi 0, %s32
      %s33 = sphi 0, %s30
      %s34 = sphi 0, %s33
      %s50 = sphi 0, %s34
      %s56 = sphi 0, %s58
      %s59 = sphi 0, %s56
      %s60 = sphi 0, %s59
      %s76 = sphi 0, %s60
      %s82 = sphi 0, %s84
      %s85 = sphi 0, %s82
      %s86 = sphi 0, %s85
      %s102 = sphi 0, %s86
      %s106 = sphi 0, %s106
      %s108 = sphi 0, %s106
      %s109 = sphi 0, %s108
      %s123 = sphi 0, %s109
      %s127 = sphi 0, %s127
      %s129 = sphi 0, %s127
      %s130 = sphi 0, %s129
      %s144 = sphi 0, %s130
      %s148 = sphi 0, %s148
      %s150 = sphi 0, %s148
      %s151 = sphi 0, %s150
      %s165 = sphi 0, %s151
      %s169 = sphi 0, %s169
      %s171 = sphi 0, %s169
      %s172 = sphi 0, %s171
      %s186 = sphi 0, %s172
      %s190 = sphi 0, %s190
      %s192 = sphi 0, %s190
      %s193 = sphi 0, %s192
      %s207 = sphi 0, %s193
      %s211 = sphi 0, %s211
      %s213 = sphi 0, %s211
      %s214 = sphi 0, %s213
      %s228 = sphi 0, %s214
      %s234 = sphi 0, %s236
      %s237 = sphi 0, %s234
      %s238 = sphi 0, %s237
      %s254 = sphi 0, %s238
    $region4: #{tpu_custom_call.1} parent=1 // loop_header_branch
      %23 = sbr.rel (%p21) target = $region8
    $region5: #{tpu_custom_call.1} parent=1 // loop_body
      %s25 = ssub.s32 %s20, 1
      %s26 = ssub.s32 %s20, 2
      %s27 = sadd.s32 %s20, 1
      %s28 = ssub.s32 %s20, %s27
      %p29 = scmp.eq.s32.totalorder %s28, 0
      %s31 = sadd.s32 %s30, 1
      %s32 = scalar_select %p29, %s30, %s31
      %p35 = pneg %p29
      %p36 = scmp.eq.s32.totalorder %s20, 1
      %p37 = por %p35, %p36
      %p38 = scmp.ne.s32.totalorder %s30, %s33
      %p39 = scmp.eq.s32.totalorder %s20, 0
      %p40 = por %p38, %p39
      %p41 = scmp.ne.s32.totalorder %s30, %s33
      %p42 = scmp.eq.s32.totalorder %s25, 1
      %p43 = por %p41, %p42
      %p44 = scmp.ne.s32.totalorder %s33, %s34
      %p45 = scmp.eq.s32.totalorder %s25, 0
      %p46 = por %p44, %p45
      %p47 = scmp.ne.s32.totalorder %s33, %s34
      %p48 = scmp.eq.s32.totalorder %s26, 1
      %p49 = por %p47, %p48
      %p51 = scmp.ne.s32.totalorder %s34, %s50
      %p52 = scmp.eq.s32.totalorder %s26, 0
      %p53 = por %p51, %p52
      %s54 = ssub.s32 %s20, %s27
      %p55 = scmp.eq.s32.totalorder %s54, 0
      %s57 = sadd.s32 %s56, 1
      %s58 = scalar_select %p55, %s56, %s57
      %p61 = pneg %p55
      %p62 = scmp.eq.s32.totalorder %s20, 1
      %p63 = por %p61, %p62
      %p64 = scmp.ne.s32.totalorder %s56, %s59
      %p65 = scmp.eq.s32.totalorder %s20, 0
      %p66 = por %p64, %p65
      %p67 = scmp.ne.s32.totalorder %s56, %s59
      %p68 = scmp.eq.s32.totalorder %s25, 1
      %p69 = por %p67, %p68
      %p70 = scmp.ne.s32.totalorder %s59, %s60
      %p71 = scmp.eq.s32.totalorder %s25, 0
      %p72 = por %p70, %p71
      %p73 = scmp.ne.s32.totalorder %s59, %s60
      %p74 = scmp.eq.s32.totalorder %s26, 1
      %p75 = por %p73, %p74
      %p77 = scmp.ne.s32.totalorder %s60, %s76
      %p78 = scmp.eq.s32.totalorder %s26, 0
      %p79 = por %p77, %p78
      %s80 = ssub.s32 %s20, %s27
      %p81 = scmp.eq.s32.totalorder %s80, 0
      %s83 = sadd.s32 %s82, 1
      %s84 = scalar_select %p81, %s82, %s83
      %p87 = pneg %p81
      %p88 = scmp.eq.s32.totalorder %s20, 1
      %p89 = por %p87, %p88
      %p90 = scmp.ne.s32.totalorder %s82, %s85
      %p91 = scmp.eq.s32.totalorder %s20, 0
      %p92 = por %p90, %p91
      %p93 = scmp.ne.s32.totalorder %s82, %s85
      %p94 = scmp.eq.s32.totalorder %s25, 1
      %p95 = por %p93, %p94
      %p96 = scmp.ne.s32.totalorder %s85, %s86
      %p97 = scmp.eq.s32.totalorder %s25, 0
      %p98 = por %p96, %p97
      %p99 = scmp.ne.s32.totalorder %s85, %s86
      %p100 = scmp.eq.s32.totalorder %s26, 1
      %p101 = por %p99, %p100
      %p103 = scmp.ne.s32.totalorder %s86, %s102
      %p104 = scmp.eq.s32.totalorder %s26, 0
      %p105 = por %p103, %p104
      %s107 = sadd.s32 %s106, 1
      %p110 = scmp.eq.s32.totalorder %s20, 1
      %p111 = scmp.ne.s32.totalorder %s106, %s108
      %p112 = scmp.eq.s32.totalorder %s20, 0
      %p113 = por %p111, %p112
      %p114 = scmp.ne.s32.totalorder %s106, %s108
      %p115 = scmp.eq.s32.totalorder %s25, 1
      %p116 = por %p114, %p115
      %p117 = scmp.ne.s32.totalorder %s108, %s109
      %p118 = scmp.eq.s32.totalorder %s25, 0
      %p119 = por %p117, %p118
      %p120 = scmp.ne.s32.totalorder %s108, %s109
      %p121 = scmp.eq.s32.totalorder %s26, 1
      %p122 = por %p120, %p121
      %p124 = scmp.ne.s32.totalorder %s109, %s123
      %p125 = scmp.eq.s32.totalorder %s26, 0
      %p126 = por %p124, %p125
      %s128 = sadd.s32 %s127, 1
      %p131 = scmp.eq.s32.totalorder %s20, 1
      %p132 = scmp.ne.s32.totalorder %s127, %s129
      %p133 = scmp.eq.s32.totalorder %s20, 0
      %p134 = por %p132, %p133
      %p135 = scmp.ne.s32.totalorder %s127, %s129
      %p136 = scmp.eq.s32.totalorder %s25, 1
      %p137 = por %p135, %p136
      %p138 = scmp.ne.s32.totalorder %s129, %s130
      %p139 = scmp.eq.s32.totalorder %s25, 0
      %p140 = por %p138, %p139
      %p141 = scmp.ne.s32.totalorder %s129, %s130
      %p142 = scmp.eq.s32.totalorder %s26, 1
      %p143 = por %p141, %p142
      %p145 = scmp.ne.s32.totalorder %s130, %s144
      %p146 = scmp.eq.s32.totalorder %s26, 0
      %p147 = por %p145, %p146
      %s149 = sadd.s32 %s148, 1
      %p152 = scmp.eq.s32.totalorder %s20, 1
      %p153 = scmp.ne.s32.totalorder %s148, %s150
      %p154 = scmp.eq.s32.totalorder %s20, 0
      %p155 = por %p153, %p154
      %p156 = scmp.ne.s32.totalorder %s148, %s150
      %p157 = scmp.eq.s32.totalorder %s25, 1
      %p158 = por %p156, %p157
      %p159 = scmp.ne.s32.totalorder %s150, %s151
      %p160 = scmp.eq.s32.totalorder %s25, 0
      %p161 = por %p159, %p160
      %p162 = scmp.ne.s32.totalorder %s150, %s151
      %p163 = scmp.eq.s32.totalorder %s26, 1
      %p164 = por %p162, %p163
      %p166 = scmp.ne.s32.totalorder %s151, %s165
      %p167 = scmp.eq.s32.totalorder %s26, 0
      %p168 = por %p166, %p167
      %s170 = sadd.s32 %s169, 1
      %p173 = scmp.eq.s32.totalorder %s20, 1
      %p174 = scmp.ne.s32.totalorder %s169, %s171
      %p175 = scmp.eq.s32.totalorder %s20, 0
      %p176 = por %p174, %p175
      %p177 = scmp.ne.s32.totalorder %s169, %s171
      %p178 = scmp.eq.s32.totalorder %s25, 1
      %p179 = por %p177, %p178
      %p180 = scmp.ne.s32.totalorder %s171, %s172
      %p181 = scmp.eq.s32.totalorder %s25, 0
      %p182 = por %p180, %p181
      %p183 = scmp.ne.s32.totalorder %s171, %s172
      %p184 = scmp.eq.s32.totalorder %s26, 1
      %p185 = por %p183, %p184
      %p187 = scmp.ne.s32.totalorder %s172, %s186
      %p188 = scmp.eq.s32.totalorder %s26, 0
      %p189 = por %p187, %p188
      %s191 = sadd.s32 %s190, 1
      %p194 = scmp.eq.s32.totalorder %s20, 1
      %p195 = scmp.ne.s32.totalorder %s190, %s192
      %p196 = scmp.eq.s32.totalorder %s20, 0
      %p197 = por %p195, %p196
      %p198 = scmp.ne.s32.totalorder %s190, %s192
      %p199 = scmp.eq.s32.totalorder %s25, 1
      %p200 = por %p198, %p199
      %p201 = scmp.ne.s32.totalorder %s192, %s193
      %p202 = scmp.eq.s32.totalorder %s25, 0
      %p203 = por %p201, %p202
      %p204 = scmp.ne.s32.totalorder %s192, %s193
      %p205 = scmp.eq.s32.totalorder %s26, 1
      %p206 = por %p204, %p205
      %p208 = scmp.ne.s32.totalorder %s193, %s207
      %p209 = scmp.eq.s32.totalorder %s26, 0
      %p210 = por %p208, %p209
      %s212 = sadd.s32 %s211, 1
      %p215 = scmp.eq.s32.totalorder %s20, 1
      %p216 = scmp.ne.s32.totalorder %s211, %s213
      %p217 = scmp.eq.s32.totalorder %s20, 0
      %p218 = por %p216, %p217
      %p219 = scmp.ne.s32.totalorder %s211, %s213
      %p220 = scmp.eq.s32.totalorder %s25, 1
      %p221 = por %p219, %p220
      %p222 = scmp.ne.s32.totalorder %s213, %s214
      %p223 = scmp.eq.s32.totalorder %s25, 0
      %p224 = por %p222, %p223
      %p225 = scmp.ne.s32.totalorder %s213, %s214
      %p226 = scmp.eq.s32.totalorder %s26, 1
      %p227 = por %p225, %p226
      %p229 = scmp.ne.s32.totalorder %s214, %s228
      %p230 = scmp.eq.s32.totalorder %s26, 0
      %p231 = por %p229, %p230
      %s232 = ssub.s32 %s20, %s27
      %p233 = scmp.eq.s32.totalorder %s232, 0
      %s235 = sadd.s32 %s234, 1
      %s236 = scalar_select %p233, %s234, %s235
      %p239 = pneg %p233
      %p240 = scmp.eq.s32.totalorder %s20, 1
      %p241 = por %p239, %p240
      %p242 = scmp.ne.s32.totalorder %s234, %s237
      %p243 = scmp.eq.s32.totalorder %s20, 0
      %p244 = por %p242, %p243
      %p245 = scmp.ne.s32.totalorder %s234, %s237
      %p246 = scmp.eq.s32.totalorder %s25, 1
      %p247 = por %p245, %p246
      %p248 = scmp.ne.s32.totalorder %s237, %s238
      %p249 = scmp.eq.s32.totalorder %s25, 0
      %p250 = por %p248, %p249
      %p251 = scmp.ne.s32.totalorder %s237, %s238
      %p252 = scmp.eq.s32.totalorder %s26, 1
      %p253 = por %p251, %p252
      %p255 = scmp.ne.s32.totalorder %s238, %s254
      %p256 = scmp.eq.s32.totalorder %s26, 0
      %p257 = por %p255, %p256
      %p258 = scmp.le.s32.totalorder 1, %s20
      %p259 = scmp.lt.s32.totalorder %s20, 3
      %p260 = pnand %p258, %p259
      %p261 = pneg %p260
      // Predicated region
      $region9: #{tpu_custom_call.1} parent=5 // pred_check
        _
      $region10: #{tpu_custom_call.1} parent=5 // pred_check_branch
        %263 = sbr.rel (%p260) target = $region12
      $region11: #{tpu_custom_call.1} parent=5 // pred_region
        %s264 = ssub.s32 %s20, 1
        // Predicated region
        $region13: #{tpu_custom_call.1} parent=11 // pred_check
          %p265 = pneg %p119
        $region14: #{tpu_custom_call.1} parent=11 // pred_check_branch
          %267 = sbr.rel (%p265) target = $region16
        $region15: #{tpu_custom_call.1} parent=11 // pred_region
          _
        $region16: #{tpu_custom_call.1} parent=11 // pred_fallthru
          _
        // Predicated region
        $region17: #{tpu_custom_call.1} parent=11 // pred_check
          %p268 = pneg %p140
        $region18: #{tpu_custom_call.1} parent=11 // pred_check_branch
          %270 = sbr.rel (%p268) target = $region20
        $region19: #{tpu_custom_call.1} parent=11 // pred_region
          %272 = vsyncadd [#allocation5], 0
          %s273 = sshll.u32 %s4, 4
          %s274 = int_to_ptr.hbm [resolvable:$true] %s273
          %s275 = sshll.u32 [#allocation4], 4
          %s276 = int_to_ptr.vmem [resolvable:$true] %s275
          %281 = dma.hbm_to_vmem [thread:$0]  %s274, 24832, %s276, [#allocation5], 256, 256, 16
        $region20: #{tpu_custom_call.1} parent=11 // pred_fallthru
          _
        // Predicated region
        $region21: #{tpu_custom_call.1} parent=11 // pred_check
          %p282 = pneg %p161
        $region22: #{tpu_custom_call.1} parent=11 // pred_check_branch
          %284 = sbr.rel (%p282) target = $region24
        $region23: #{tpu_custom_call.1} parent=11 // pred_region
          %286 = vsyncadd [#allocation8], 0
          %s287 = sshll.u32 %s5, 4
          %s288 = int_to_ptr.hbm [resolvable:$true] %s287
          %s289 = sshll.u32 [#allocation7], 4
          %s290 = int_to_ptr.vmem [resolvable:$true] %s289
          %295 = dma.hbm_to_vmem [thread:$0]  %s288, 4096, %s290, [#allocation8], 128, 128, 8
        $region24: #{tpu_custom_call.1} parent=11 // pred_fallthru
          _
        // Predicated region
        $region25: #{tpu_custom_call.1} parent=11 // pred_check
          %p296 = pneg %p182
        $region26: #{tpu_custom_call.1} parent=11 // pred_check_branch
          %298 = sbr.rel (%p296) target = $region28
        $region27: #{tpu_custom_call.1} parent=11 // pred_region
          %300 = vsyncadd [#allocation8], 0
          %s301 = sshll.u32 %s6, 4
          %s302 = int_to_ptr.hbm [resolvable:$true] %s301
          %s303 = sshll.u32 [#allocation9], 4
          %s304 = int_to_ptr.vmem [resolvable:$true] %s303
          %309 = dma.hbm_to_vmem [thread:$0]  %s302, 4096, %s304, [#allocation8], 256, 256, 16
        $region28: #{tpu_custom_call.1} parent=11 // pred_fallthru
          _
        // Predicated region
        $region29: #{tpu_custom_call.1} parent=11 // pred_check
          %p310 = pneg %p203
        $region30: #{tpu_custom_call.1} parent=11 // pred_check_branch
          %312 = sbr.rel (%p310) target = $region32
        $region31: #{tpu_custom_call.1} parent=11 // pred_region
          _
        $region32: #{tpu_custom_call.1} parent=11 // pred_fallthru
          _
        // Predicated region
        $region33: #{tpu_custom_call.1} parent=11 // pred_check
          %p313 = pneg %p224
        $region34: #{tpu_custom_call.1} parent=11 // pred_check_branch
          %315 = sbr.rel (%p313) target = $region36
        $region35: #{tpu_custom_call.1} parent=11 // pred_region
          _
        $region36: #{tpu_custom_call.1} parent=11 // pred_fallthru
          _
      $region12: #{tpu_custom_call.1} parent=5 // pred_fallthru
        _
      %p316 = scmp.lt.s32.totalorder %s20, 2
      // Predicated region
      $region37: #{tpu_custom_call.1} parent=5 // pred_check
        %p317 = pneg %p316
      $region38: #{tpu_custom_call.1} parent=5 // pred_check_branch
        %319 = sbr.rel (%p317) target = $region40
      $region39: #{tpu_custom_call.1} parent=5 // pred_region
        // Predicated region
        $region41: #{tpu_custom_call.1} parent=39 // pred_check
          %p320 = pneg %p40
        $region42: #{tpu_custom_call.1} parent=39 // pred_check_branch
          %322 = sbr.rel (%p320) target = $region44
        $region43: #{tpu_custom_call.1} parent=39 // pred_region
          %p323 = scmp.lt.s32.totalorder %s20, 1
          %s324 = scalar_select %p323, %s20, 1
          %s325 = smul.addr %s324, 2
          %s326 = smul.addr %s325, 8
          %s327 = scalar_lea.vmem %s0, %s326
        $region44: #{tpu_custom_call.1} parent=39 // pred_fallthru
          _
        // Predicated region
        $region45: #{tpu_custom_call.1} parent=39 // pred_check
          %p328 = pneg %p66
        $region46: #{tpu_custom_call.1} parent=39 // pred_check_branch
          %330 = sbr.rel (%p328) target = $region48
        $region47: #{tpu_custom_call.1} parent=39 // pred_region
          %p331 = scmp.lt.s32.totalorder %s20, 1
          %s332 = scalar_select %p331, %s20, 1
          %s333 = smul.addr %s332, 8
          %s334 = scalar_lea.vmem %s1, %s333
        $region48: #{tpu_custom_call.1} parent=39 // pred_fallthru
          _
        // Predicated region
        $region49: #{tpu_custom_call.1} parent=39 // pred_check
          %p335 = pneg %p92
        $region50: #{tpu_custom_call.1} parent=39 // pred_check_branch
          %337 = sbr.rel (%p335) target = $region52
        $region51: #{tpu_custom_call.1} parent=39 // pred_region
          %s338 = sand.u32 %s82, 1
          %s339 = sand.u32 %s82, 1
          %s340 = smul.addr %s339, 32
          %s341 = scalar_lea.vmem [#allocation3], %s340
          %s342 = smul.addr %s20, 8
          %s343 = scalar_lea.vmem %s2, %s342
          // Predicated region
          $region53: #{tpu_custom_call.1} parent=51 // pred_check
            _
          $region54: #{tpu_custom_call.1} parent=51 // pred_check_branch
            %345 = sbr.rel (0) target = $region56
          $region55: #{tpu_custom_call.1} parent=51 // pred_region
            // Predicated region
            $region57: #{tpu_custom_call.1} parent=55 // pred_check
              _
            $region58: #{tpu_custom_call.1} parent=55 // pred_check_branch
              %347 = sbr.rel (0) target = $region60
            $region59: #{tpu_custom_call.1} parent=55 // pred_region
              // Predicated region
              $region72: #{tpu_custom_call.1} parent=59 // pred_check
                _
              $region73: #{tpu_custom_call.1} parent=59 // pred_check_branch
                %369 = sbr.rel (0) target = $region75
              $region74: #{tpu_custom_call.1} parent=59 // pred_region
                loop: start=0, step=1, limit=1
                $region76: #{tpu_custom_call.1} parent=74 // loop_pre_header
                  _
                $region77: #{tpu_custom_call.1} parent=74 // loop_header
                  %s371 = sphi 0, %s375
                  %p372 = scmp.ge.s32.totalorder %s371, 1
                  %s376 = sphi %s343, %s343
                  %s377 = sphi %s341, %s341
                $region78: #{tpu_custom_call.1} parent=74 // loop_header_branch
                  %374 = sbr.rel (%p372) target = $region82
                $region79: #{tpu_custom_call.1} parent=74 // loop_body
                  %v378 = vld [vmem:[%s376] sm:$0xff]
                  %379 = vst [vmem:[%s377] sm:$0xff] %v378
                  %v380 = vld [vmem:[%s376 + $0x10] sm:$0xff]
                  %381 = vst [vmem:[%s377 + $0x8] sm:$0xff] %v380
                  %v382 = vld [vmem:[%s376 + $0x20] sm:$0xff]
                  %383 = vst [vmem:[%s377 + $0x10] sm:$0xff] %v382
                  %v384 = vld [vmem:[%s376 + $0x30] sm:$0xff]
                  %385 = vst [vmem:[%s377 + $0x18] sm:$0xff] %v384
                $region80: #{tpu_custom_call.1} parent=74 // loop_footer
                  %s375 = sadd.s32 1, %s371
                $region81: #{tpu_custom_call.1} parent=74 // loop_footer_branch
                  %370 = sbr.rel target = $region77
                $region82: #{tpu_custom_call.1} parent=74 // loop_exit
                  _
              $region75: #{tpu_custom_call.1} parent=59 // pred_fallthru
                _
              // Predicated region
              $region83: #{tpu_custom_call.1} parent=59 // pred_check
                _
              $region84: #{tpu_custom_call.1} parent=59 // pred_check_branch
                %387 = sbr.rel target = $region86
              $region85: #{tpu_custom_call.1} parent=59 // pred_region
                _
              $region86: #{tpu_custom_call.1} parent=59 // pred_fallthru
                _
            $region60: #{tpu_custom_call.1} parent=55 // pred_fallthru
              _
            // Predicated region
            $region61: #{tpu_custom_call.1} parent=55 // pred_check
              _
            $region62: #{tpu_custom_call.1} parent=55 // pred_check_branch
              %349 = sbr.rel target = $region64
            $region63: #{tpu_custom_call.1} parent=55 // pred_region
              %s351 = ssub.s32 256, 1
              loop: start=0, step=1, limit=1
              $region65: #{tpu_custom_call.1} parent=63 // loop_pre_header
                _
              $region66: #{tpu_custom_call.1} parent=63 // loop_header
                %s353 = sphi 0, %s357
                %p354 = scmp.ge.s32.totalorder %s353, 1
                %s358 = sphi %s343, %s343
                %s359 = sphi %s341, %s341
              $region67: #{tpu_custom_call.1} parent=63 // loop_header_branch
                %356 = sbr.rel (%p354) target = $region71
              $region68: #{tpu_custom_call.1} parent=63 // loop_body
                %v360 = vld [vmem:[%s358] sm:%s351]
                %361 = vst [vmem:[%s359] sm:%s351] %v360
                %v362 = vld [vmem:[%s358 + $0x10] sm:%s351]
                %363 = vst [vmem:[%s359 + $0x8] sm:%s351] %v362
                %v364 = vld [vmem:[%s358 + $0x20] sm:%s351]
                %365 = vst [vmem:[%s359 + $0x10] sm:%s351] %v364
                %v366 = vld [vmem:[%s358 + $0x30] sm:%s351]
                %367 = vst [vmem:[%s359 + $0x18] sm:%s351] %v366
              $region69: #{tpu_custom_call.1} parent=63 // loop_footer
                %s357 = sadd.s32 1, %s353
              $region70: #{tpu_custom_call.1} parent=63 // loop_footer_branch
                %352 = sbr.rel target = $region66
              $region71: #{tpu_custom_call.1} parent=63 // loop_exit
                _
            $region64: #{tpu_custom_call.1} parent=55 // pred_fallthru
              _
          $region56: #{tpu_custom_call.1} parent=51 // pred_fallthru
            _
          %388 = vnop
        $region52: #{tpu_custom_call.1} parent=39 // pred_fallthru
          _
      $region40: #{tpu_custom_call.1} parent=5 // pred_fallthru
        _
      %p389 = scmp.le.s32.totalorder 1, %s20
      %p390 = scmp.lt.s32.totalorder %s20, 3
      %p391 = pnand %p389, %p390
      %p392 = pneg %p391
      // Predicated region
      $region87: #{tpu_custom_call.1} parent=5 // pred_check
        _
      $region88: #{tpu_custom_call.1} parent=5 // pred_check_branch
        %394 = sbr.rel (%p391) target = $region90
      $region89: #{tpu_custom_call.1} parent=5 // pred_region
        %s395 = ssub.s32 %s20, 1
        %s396 = sand.u32 %s85, 1
        %s397 = sand.u32 %s85, 1
        %s398 = smul.addr %s397, 32
        %s399 = scalar_lea.vmem [#allocation3], %s398
        // Predicated region
        $region91: #{tpu_custom_call.1} parent=89 // pred_check
          %p400 = pneg %p98
        $region92: #{tpu_custom_call.1} parent=89 // pred_check_branch
          %402 = sbr.rel (%p400) target = $region94
        $region93: #{tpu_custom_call.1} parent=89 // pred_region
          _
        $region94: #{tpu_custom_call.1} parent=89 // pred_fallthru
          _
        // Predicated region
        $region95: #{tpu_custom_call.1} parent=89 // pred_check
          %p403 = pneg %p140
        $region96: #{tpu_custom_call.1} parent=89 // pred_check_branch
          %405 = sbr.rel (%p403) target = $region98
        $region97: #{tpu_custom_call.1} parent=89 // pred_region
          %407 = dma.done [#allocation5], 24832
        $region98: #{tpu_custom_call.1} parent=89 // pred_fallthru
          _
        // Predicated region
        $region99: #{tpu_custom_call.1} parent=89 // pred_check
          %p408 = pneg %p161
        $region100: #{tpu_custom_call.1} parent=89 // pred_check_branch
          %410 = sbr.rel (%p408) target = $region102
        $region101: #{tpu_custom_call.1} parent=89 // pred_region
          %412 = dma.done [#allocation8], 4096
        $region102: #{tpu_custom_call.1} parent=89 // pred_fallthru
          _
        // Predicated region
        $region103: #{tpu_custom_call.1} parent=89 // pred_check
          %p413 = pneg %p182
        $region104: #{tpu_custom_call.1} parent=89 // pred_check_branch
          %415 = sbr.rel (%p413) target = $region106
        $region105: #{tpu_custom_call.1} parent=89 // pred_region
          %417 = dma.done [#allocation8], 4096
        $region106: #{tpu_custom_call.1} parent=89 // pred_fallthru
          _
        %p418 = scmp.lt.s32.totalorder %s25, 1
        %s419 = scalar_select %p418, %s25, 1
        %s420 = smul.addr %s419, 2
        %s421 = smul.addr %s420, 8
        %s422 = scalar_lea.vmem %s0, %s421
        %p423 = pneg %p46
        %p424 = pneg %p43
        %p425 = scmp.lt.s32.totalorder %s25, 1
        %s426 = scalar_select %p425, %s25, 1
        %s427 = smul.addr %s426, 8
        %s428 = scalar_lea.vmem %s1, %s427
        %p429 = pneg %p72
        %p430 = pneg %p69
        %s431 = sand.u32 %s85, 1
        %s432 = sand.u32 %s85, 1
        %s433 = smul.addr %s432, 32
        %s434 = scalar_lea.vmem [#allocation3], %s433
        %p435 = pneg %p98
        %p436 = pneg %p95
        %p437 = pneg %p119
        %p438 = pneg %p116
        %p439 = pneg %p140
        %p440 = pneg %p137
        %p441 = pneg %p161
        %p442 = pneg %p158
        %p443 = pneg %p182
        %p444 = pneg %p179
        %p445 = pneg %p203
        %p446 = pneg %p200
        %p447 = pneg %p224
        %p448 = pneg %p221
        %p449 = pneg %p250
        %p450 = pneg %p247
        %s451 = sand.u32 %s237, 1
        %s452 = scalar_lea.sflag [#allocation6], %s451
        %s453 = sand.u32 %s237, 1
        %s454 = smul.addr %s453, 8
        %s455 = scalar_lea.vmem [#allocation10], %s454
        %p456 = scmp.lt.s32.totalorder %s25, 1
        %s457 = scalar_select %p456, %s25, 1
        %s458 = smul.addr %s457, 2
        %s459 = smul.addr %s458, 8
        %s460 = scalar_lea.vmem %s0, %s459
        %p461 = scmp.lt.s32.totalorder %s25, 1
        %s462 = scalar_select %p461, %s25, 1
        %s463 = smul.addr %s462, 8
        %s464 = scalar_lea.vmem %s1, %s463
        %v466 = vld [vmem:[%s460] sm:$0xff]
        %v467 = vld [vmem:[%s460 + $0x8] sm:$0xff]
        %v468 = vadd.f32 %v466, 1.0
        %v469 = vadd.f32 %v467, 1.0
        %v470 = vlog2.pop %v468
        %v471 = vmul.f32 %v470, 0.6931472
        %v472 = vlog2.pop %v469
        %v473 = vmul.f32 %v472, 0.6931472
        %v474 = vld [vmem:[%s464] sm:$0xff]
        %v475 = vld [vmem:[#allocation7] sm:$0xff]
        %v476 = vld [vmem:[#allocation7 + $0x8] sm:$0xff]
        %v477 = vld [vmem:[#allocation7 + $0x10] sm:$0xff]
        %v478 = vld [vmem:[#allocation7 + $0x18] sm:$0xff]
        %v479 = vld [vmem:[#allocation7 + $0x20] sm:$0xff]
        %v480 = vld [vmem:[#allocation7 + $0x28] sm:$0xff]
        %v481 = vld [vmem:[#allocation7 + $0x30] sm:$0xff]
        %v482 = vld [vmem:[#allocation7 + $0x38] sm:$0xff]
        %v483 = vld [vmem:[#allocation7 + $0x40] sm:$0xff]
        %v484 = vld [vmem:[#allocation7 + $0x48] sm:$0xff]
        %v485 = vld [vmem:[#allocation7 + $0x50] sm:$0xff]
        %v486 = vld [vmem:[#allocation7 + $0x58] sm:$0xff]
        %v487 = vld [vmem:[#allocation7 + $0x60] sm:$0xff]
        %v488 = vld [vmem:[#allocation7 + $0x68] sm:$0xff]
        %v489 = vld [vmem:[#allocation7 + $0x70] sm:$0xff]
        %v490 = vld [vmem:[#allocation7 + $0x78] sm:$0xff]
        %v491 = vld [vmem:[#allocation7 + $0x80] sm:$0xff]
        %v492 = vld [vmem:[#allocation7 + $0x88] sm:$0xff]
        %v493 = vld [vmem:[#allocation7 + $0x90] sm:$0xff]
        %v494 = vld [vmem:[#allocation7 + $0x98] sm:$0xff]
        %v495 = vld [vmem:[#allocation7 + $0xa0] sm:$0xff]
        %v496 = vld [vmem:[#allocation7 + $0xa8] sm:$0xff]
        %v497 = vld [vmem:[#allocation7 + $0xb0] sm:$0xff]
        %v498 = vld [vmem:[#allocation7 + $0xb8] sm:$0xff]
        %v499 = vld [vmem:[#allocation7 + $0xc0] sm:$0xff]
        %v500 = vld [vmem:[#allocation7 + $0xc8] sm:$0xff]
        %v501 = vld [vmem:[#allocation7 + $0xd0] sm:$0xff]
        %v502 = vld [vmem:[#allocation7 + $0xd8] sm:$0xff]
        %v503 = vld [vmem:[#allocation7 + $0xe0] sm:$0xff]
        %v504 = vld [vmem:[#allocation7 + $0xe8] sm:$0xff]
        %v505 = vld [vmem:[#allocation7 + $0xf0] sm:$0xff]
        %v506 = vld [vmem:[#allocation7 + $0xf8] sm:$0xff]
        %v507 = vpack.c.bf16 %v471, %v471
        %v508 = vpack.c.bf16 %v473, %v473
        %v509 = vld [vmem:[#allocation4] ss:$8 sm:$0x3]
        %v511 = vperm.slane %v509, 0
        %v512 = vperm.slane %v509, 1
        %v547 = vunpack.c.l.b16 %v475
        %v548 = vunpack.c.h.b16 %v475
        %v549 = vunpack.c.l.b16 %v476
        %v550 = vunpack.c.h.b16 %v476
        %v551 = vunpack.c.l.b16 %v477
        %v552 = vunpack.c.h.b16 %v477
        %v553 = vunpack.c.l.b16 %v478
        %v554 = vunpack.c.h.b16 %v478
        %v555 = vunpack.c.l.b16 %v479
        %v556 = vunpack.c.h.b16 %v479
        %v557 = vunpack.c.l.b16 %v480
        %v558 = vunpack.c.h.b16 %v480
        %v559 = vunpack.c.l.b16 %v481
        %v560 = vunpack.c.h.b16 %v481
        %v561 = vunpack.c.l.b16 %v482
        %v562 = vunpack.c.h.b16 %v482
        %v563 = vunpack.c.l.b16 %v483
        %v564 = vunpack.c.h.b16 %v483
        %v565 = vunpack.c.l.b16 %v484
        %v566 = vunpack.c.h.b16 %v484
        %v567 = vunpack.c.l.b16 %v485
        %v568 = vunpack.c.h.b16 %v485
        %v569 = vunpack.c.l.b16 %v486
        %v570 = vunpack.c.h.b16 %v486
        %v571 = vunpack.c.l.b16 %v487
        %v572 = vunpack.c.h.b16 %v487
        %v573 = vunpack.c.l.b16 %v488
        %v574 = vunpack.c.h.b16 %v488
        %v575 = vunpack.c.l.b16 %v489
        %v576 = vunpack.c.h.b16 %v489
        %v577 = vunpack.c.l.b16 %v490
        %v578 = vunpack.c.h.b16 %v490
        %v579 = vunpack.c.l.b16 %v491
        %v580 = vunpack.c.h.b16 %v491
        %v581 = vunpack.c.l.b16 %v492
        %v582 = vunpack.c.h.b16 %v492
        %v583 = vunpack.c.l.b16 %v493
        %v584 = vunpack.c.h.b16 %v493
        %v585 = vunpack.c.l.b16 %v494
        %v586 = vunpack.c.h.b16 %v494
        %v587 = vunpack.c.l.b16 %v495
        %v588 = vunpack.c.h.b16 %v495
        %v589 = vunpack.c.l.b16 %v496
        %v590 = vunpack.c.h.b16 %v496
        %v591 = vunpack.c.l.b16 %v497
        %v592 = vunpack.c.h.b16 %v497
        %v593 = vunpack.c.l.b16 %v498
        %v594 = vunpack.c.h.b16 %v498
        %v595 = vunpack.c.l.b16 %v499
        %v596 = vunpack.c.h.b16 %v499
        %v597 = vunpack.c.l.b16 %v500
        %v598 = vunpack.c.h.b16 %v500
        %v599 = vunpack.c.l.b16 %v501
        %v600 = vunpack.c.h.b16 %v501
        %v601 = vunpack.c.l.b16 %v502
        %v602 = vunpack.c.h.b16 %v502
        %v603 = vunpack.c.l.b16 %v503
        %v604 = vunpack.c.h.b16 %v503
        %v605 = vunpack.c.l.b16 %v504
        %v606 = vunpack.c.h.b16 %v504
        %v607 = vunpack.c.l.b16 %v505
        %v608 = vunpack.c.h.b16 %v505
        %v609 = vunpack.c.l.b16 %v506
        %v610 = vunpack.c.h.b16 %v506
        %v611 = vpack.c.b16 %v549, %v547
        %v612 = vpack.c.b16 %v550, %v548
        %v613 = vpack.c.b16 %v553, %v551
        %v614 = vpack.c.b16 %v554, %v552
        %v615 = vpack.c.b16 %v557, %v555
        %v616 = vpack.c.b16 %v558, %v556
        %v617 = vpack.c.b16 %v561, %v559
        %v618 = vpack.c.b16 %v562, %v560
        %v619 = vpack.c.b16 %v565, %v563
        %v620 = vpack.c.b16 %v566, %v564
        %v621 = vpack.c.b16 %v569, %v567
        %v622 = vpack.c.b16 %v570, %v568
        %v623 = vpack.c.b16 %v573, %v571
        %v624 = vpack.c.b16 %v574, %v572
        %v625 = vpack.c.b16 %v577, %v575
        %v626 = vpack.c.b16 %v578, %v576
        %v627 = vpack.c.b16 %v581, %v579
        %v628 = vpack.c.b16 %v582, %v580
        %v629 = vpack.c.b16 %v585, %v583
        %v630 = vpack.c.b16 %v586, %v584
        %v631 = vpack.c.b16 %v589, %v587
        %v632 = vpack.c.b16 %v590, %v588
        %v633 = vpack.c.b16 %v593, %v591
        %v634 = vpack.c.b16 %v594, %v592
        %v635 = vpack.c.b16 %v597, %v595
        %v636 = vpack.c.b16 %v598, %v596
        %v637 = vpack.c.b16 %v601, %v599
        %v638 = vpack.c.b16 %v602, %v600
        %v639 = vpack.c.b16 %v605, %v603
        %v640 = vpack.c.b16 %v606, %v604
        %v641 = vpack.c.b16 %v609, %v607
        %v642 = vpack.c.b16 %v610, %v608
        %675 = vmatpush.bf16.msra.mxu0 %v625
        %676 = vmatpush.bf16.msra.mxu0 %v623
        %677 = vmatpush.bf16.msra.mxu0 %v621
        %678 = vmatpush.bf16.msra.mxu0 %v619
        %679 = vmatpush.bf16.msra.mxu0 %v617
        %680 = vmatpush.bf16.msra.mxu0 %v615
        %681 = vmatpush.bf16.msra.mxu0 %v613
        %682 = vmatpush.bf16.msra.mxu0 %v611
        %683 = vmatmul.bf16.gmra.mxu0 %v507
        %v684 = vpop.f32.mrf.mxu0
        %v685 = vadd.f32 %v511, %v684
        %v686 = vpop.f32.mrf.mxu0
        %687 = vdwg.mxu0
        %688 = vmatpush.bf16.msra.mxu0 %v641
        %689 = vmatpush.bf16.msra.mxu0 %v639
        %690 = vmatpush.bf16.msra.mxu0 %v637
        %691 = vmatpush.bf16.msra.mxu0 %v635
        %692 = vmatpush.bf16.msra.mxu0 %v633
        %693 = vmatpush.bf16.msra.mxu0 %v631
        %694 = vmatpush.bf16.msra.mxu0 %v629
        %695 = vmatpush.bf16.msra.mxu0 %v627
        %696 = vmatmul.bf16.gmra.mxu0 %v508
        %v697 = vpop.f32.mrf.mxu0
        %v698 = vadd.f32 %v685, %v697
        %v699 = vpop.f32.mrf.mxu0
        %700 = vdwg.mxu0
        %701 = vmatpush.bf16.msra.mxu0 %v626
        %702 = vmatpush.bf16.msra.mxu0 %v624
        %703 = vmatpush.bf16.msra.mxu0 %v622
        %704 = vmatpush.bf16.msra.mxu0 %v620
        %705 = vmatpush.bf16.msra.mxu0 %v618
        %706 = vmatpush.bf16.msra.mxu0 %v616
        %707 = vmatpush.bf16.msra.mxu0 %v614
        %708 = vmatpush.bf16.msra.mxu0 %v612
        %709 = vmatmul.bf16.gmra.mxu0 %v507
        %v710 = vpop.f32.mrf.mxu0
        %v711 = vadd.f32 %v512, %v710
        %v712 = vpop.f32.mrf.mxu0
        %713 = vdwg.mxu0
        %714 = vmatpush.bf16.msra.mxu0 %v642
        %715 = vmatpush.bf16.msra.mxu0 %v640
        %716 = vmatpush.bf16.msra.mxu0 %v638
        %717 = vmatpush.bf16.msra.mxu0 %v636
        %718 = vmatpush.bf16.msra.mxu0 %v634
        %719 = vmatpush.bf16.msra.mxu0 %v632
        %720 = vmatpush.bf16.msra.mxu0 %v630
        %721 = vmatpush.bf16.msra.mxu0 %v628
        %722 = vmatmul.bf16.gmra.mxu0 %v508
        %v723 = vpop.f32.mrf.mxu0
        %v724 = vadd.f32 %v711, %v723
        %v725 = vpop.f32.mrf.mxu0
        %726 = vdwg.mxu0
        %v727 = vmul.f32 %v698, 0.9995004
        %v728 = vmul.f32 %v724, 0.9995004
        %v729 = vmax.f32 %v727, 0.0
        %v730 = vmax.f32 %v728, 0.0
        %v731 = vld [vmem:[#allocation4 + $0x10] sm:$0xff]
        %v732 = vld [vmem:[#allocation4 + $0x20] sm:$0xff]
        %v733 = vld [vmem:[#allocation4 + $0x30] sm:$0xff]
        %v734 = vld [vmem:[#allocation4 + $0x40] sm:$0xff]
        %v735 = vld [vmem:[#allocation4 + $0x50] sm:$0xff]
        %v736 = vld [vmem:[#allocation4 + $0x60] sm:$0xff]
        %v737 = vld [vmem:[#allocation4 + $0x70] sm:$0xff]
        %v738 = vld [vmem:[#allocation4 + $0x80] sm:$0xff]
        %v739 = vld [vmem:[#allocation4 + $0x90] sm:$0xff]
        %v740 = vld [vmem:[#allocation4 + $0xa0] sm:$0xff]
        %v741 = vld [vmem:[#allocation4 + $0xb0] sm:$0xff]
        %v742 = vld [vmem:[#allocation4 + $0xc0] sm:$0xff]
        %v743 = vld [vmem:[#allocation4 + $0xd0] sm:$0xff]
        %v744 = vld [vmem:[#allocation4 + $0xe0] sm:$0xff]
        %v745 = vld [vmem:[#allocation4 + $0xf0] sm:$0xff]
        %v746 = vld [vmem:[#allocation4 + $0x100] sm:$0xff]
        %v747 = vld [vmem:[#allocation4 + $0x110] sm:$0xff]
        %v748 = vld [vmem:[#allocation4 + $0x120] sm:$0xff]
        %v749 = vld [vmem:[#allocation4 + $0x130] sm:$0xff]
        %v750 = vld [vmem:[#allocation4 + $0x140] sm:$0xff]
        %v751 = vld [vmem:[#allocation4 + $0x150] sm:$0xff]
        %v752 = vld [vmem:[#allocation4 + $0x160] sm:$0xff]
        %v753 = vld [vmem:[#allocation4 + $0x170] sm:$0xff]
        %v754 = vld [vmem:[#allocation4 + $0x180] sm:$0xff]
        %v755 = vld [vmem:[#allocation4 + $0x190] sm:$0xff]
        %v756 = vld [vmem:[#allocation4 + $0x1a0] sm:$0xff]
        %v757 = vld [vmem:[#allocation4 + $0x1b0] sm:$0xff]
        %v758 = vld [vmem:[#allocation4 + $0x1c0] sm:$0xff]
        %v759 = vld [vmem:[#allocation4 + $0x1d0] sm:$0xff]
        %v760 = vld [vmem:[#allocation4 + $0x1e0] sm:$0xff]
        %v761 = vld [vmem:[#allocation4 + $0x1f0] sm:$0xff]
        %v762 = vld [vmem:[#allocation4 + $0x200] sm:$0xff]
        %v763 = vpack.c.bf16 %v732, %v731
        %v764 = vpack.c.bf16 %v734, %v733
        %v765 = vpack.c.bf16 %v736, %v735
        %v766 = vpack.c.bf16 %v738, %v737
        %v767 = vpack.c.bf16 %v740, %v739
        %v768 = vpack.c.bf16 %v742, %v741
        %v769 = vpack.c.bf16 %v744, %v743
        %v770 = vpack.c.bf16 %v746, %v745
        %v771 = vpack.c.bf16 %v748, %v747
        %v772 = vpack.c.bf16 %v750, %v749
        %v773 = vpack.c.bf16 %v752, %v751
        %v774 = vpack.c.bf16 %v754, %v753
        %v775 = vpack.c.bf16 %v756, %v755
        %v776 = vpack.c.bf16 %v758, %v757
        %v777 = vpack.c.bf16 %v760, %v759
        %v778 = vpack.c.bf16 %v762, %v761
        %v779 = vpack.c.bf16 %v729, %v729
        %v780 = vpack.c.bf16 %v730, %v730
        %v781 = vld [vmem:[#allocation4 + $0x210] ss:$0 sm:$0xff]
        %782 = vmatpush.bf16.msra.mxu0 %v770
        %783 = vmatpush.bf16.msra.mxu0 %v769
        %784 = vmatpush.bf16.msra.mxu0 %v768
        %785 = vmatpush.bf16.msra.mxu0 %v767
        %786 = vmatpush.bf16.msra.mxu0 %v766
        %787 = vmatpush.bf16.msra.mxu0 %v765
        %788 = vmatpush.bf16.msra.mxu0 %v764
        %789 = vmatpush.bf16.msra.mxu0 %v763
        %790 = vmatmul.bf16.gmra.mxu0 %v779
        %v791 = vpop.f32.mrf.mxu0
        %v792 = vadd.f32 %v781, %v791
        %v793 = vpop.f32.mrf.mxu0
        %794 = vdwg.mxu0
        %795 = vmatpush.bf16.msra.mxu0 %v778
        %796 = vmatpush.bf16.msra.mxu0 %v777
        %797 = vmatpush.bf16.msra.mxu0 %v776
        %798 = vmatpush.bf16.msra.mxu0 %v775
        %799 = vmatpush.bf16.msra.mxu0 %v774
        %800 = vmatpush.bf16.msra.mxu0 %v773
        %801 = vmatpush.bf16.msra.mxu0 %v772
        %802 = vmatpush.bf16.msra.mxu0 %v771
        %803 = vmatmul.bf16.gmra.mxu0 %v780
        %v804 = vpop.f32.mrf.mxu0
        %v805 = vadd.f32 %v792, %v804
        %v806 = vpop.f32.mrf.mxu0
        %807 = vdwg.mxu0
        %v808 = vmul.f32 %v805, 1.442695
        %v809 = vpow.pop %v808
        %v810 = vadd.f32 %v809, 0.0001
        %v811 = vrsqrt.pop %v810
        %v812 = vmul.f32 %v811, %v810
        %v813 = vmul.f32 %v812, %v811
        %v814 = vmul.f32 0.5, %v813
        %v815 = vsub.f32 1.5, %v814
        %v816 = vmul.f32 %v811, %v815
        %v817 = vmul.f32 %v810, %v816
        %vm818 = vcmp.eq.f32.partialorder %v810, inf
        %v819 = vsel %vm818, %v810, %v817
        %vm820 = vcmp.eq.f32.partialorder %v810, 0.0
        %v821 = vand.u32 %v810, 2147483648
        %v822 = vsel %vm820, %v821, %v819
        %824 = vrot.lane.b32.xlu0 %v474, 10
        %v825 = vpop.permute.xlu0 %824
        %v827 = vmul.f32 %v822, %v825
        %829 = vrot.lane.b32.xlu0 %v827, 118
        %v830 = vpop.permute.xlu0 %829
        %v832 = vadd.f32 %v805, %v830
        %833 = vrot.lane.b32.xlu0 %v474, 11
        %v834 = vpop.permute.xlu0 %833
        %v836 = vmul.f32 %v822, %v834
        %838 = vrot.lane.b32.xlu0 %v836, 127
        %v839 = vpop.permute.xlu0 %838
        %v841 = vadd.f32 %v805, %v839
        %v842 = vld [vmem:[#allocation4 + $0x220] sm:$0xff]
        %v843 = vld [vmem:[#allocation4 + $0x228] sm:$0xff]
        %v844 = vld [vmem:[#allocation4 + $0x230] sm:$0x3]
        %v845 = vld [vmem:[#allocation4 + $0x238] sm:$0x3]
        %v846 = vpack.c.bf16 %v844, %v842
        %v847 = vpack.c.bf16 %v845, %v843
        %v848 = vpack.c.bf16 %v832, %v832
        %s849 = scalar_lea.vmem [#allocation4], 576
        %v850 = vld [vmem:[%s849] ss:$8 sm:$0x3]
        %v852 = vperm.slane %v850, 0
        %v853 = vperm.slane %v850, 1
        %vm856 = vcmask 80896
        %v858 = vsel %vm856, %v848, 0
        %vm860 = vcmask 1044480
        %v862 = vsel %vm860, %v846, 0
        %v865 = vsel %vm860, %v847, 0
        %867 = vmatpush.bf16.msra.mxu0 0
        %868 = vmatpush.bf16.msra.mxu0 0
        %869 = vmatpush.bf16.msra.mxu0 0
        %870 = vmatpush.bf16.msra.mxu0 0
        %871 = vmatpush.bf16.msra.mxu0 0
        %872 = vmatpush.bf16.msra.mxu0 0
        %873 = vmatpush.bf16.msra.mxu0 0
        %874 = vmatpush.bf16.msra.mxu0 %v862
        %875 = vmatmul.bf16.gmra.mxu0 %v858
        %v876 = vpop.f32.mrf.mxu0
        %v877 = vadd.f32 %v852, %v876
        %v878 = vpop.f32.mrf.mxu0
        %879 = vdwg.mxu0
        %880 = vmatpush.bf16.msra.mxu0 0
        %881 = vmatpush.bf16.msra.mxu0 0
        %882 = vmatpush.bf16.msra.mxu0 0
        %883 = vmatpush.bf16.msra.mxu0 0
        %884 = vmatpush.bf16.msra.mxu0 0
        %885 = vmatpush.bf16.msra.mxu0 0
        %886 = vmatpush.bf16.msra.mxu0 0
        %887 = vmatpush.bf16.msra.mxu0 %v865
        %888 = vmatmul.bf16.gmra.mxu0 %v858
        %v889 = vpop.f32.mrf.mxu0
        %v890 = vadd.f32 %v853, %v889
        %v891 = vpop.f32.mrf.mxu0
        %892 = vdwg.mxu0
        %v893 = vmul.f32 %v877, 0.9995004
        %v894 = vmul.f32 %v890, 0.9995004
        %v895 = vmax.f32 %v893, 0.0
        %v896 = vmax.f32 %v894, 0.0
        %v897 = vld [vmem:[#allocation4 + $0x250] sm:$0xff]
        %v898 = vld [vmem:[#allocation4 + $0x260] sm:$0xff]
        %v899 = vld [vmem:[#allocation4 + $0x270] sm:$0xff]
        %v900 = vld [vmem:[#allocation4 + $0x280] sm:$0xff]
        %v901 = vld [vmem:[#allocation4 + $0x290] sm:$0xff]
        %v902 = vld [vmem:[#allocation4 + $0x2a0] sm:$0xff]
        %v903 = vld [vmem:[#allocation4 + $0x2b0] sm:$0xff]
        %v904 = vld [vmem:[#allocation4 + $0x2c0] sm:$0xff]
        %v905 = vld [vmem:[#allocation4 + $0x2d0] sm:$0xff]
        %v906 = vld [vmem:[#allocation4 + $0x2e0] sm:$0xff]
        %v907 = vld [vmem:[#allocation4 + $0x2f0] sm:$0xff]
        %v908 = vld [vmem:[#allocation4 + $0x300] sm:$0xff]
        %v909 = vld [vmem:[#allocation4 + $0x310] sm:$0xff]
        %v910 = vld [vmem:[#allocation4 + $0x320] sm:$0xff]
        %v911 = vld [vmem:[#allocation4 + $0x330] sm:$0xff]
        %v912 = vld [vmem:[#allocation4 + $0x340] sm:$0xff]
        %v913 = vpack.c.bf16 %v898, %v897
        %v914 = vpack.c.bf16 %v900, %v899
        %v915 = vpack.c.bf16 %v902, %v901
        %v916 = vpack.c.bf16 %v904, %v903
        %v917 = vpack.c.bf16 %v906, %v905
        %v918 = vpack.c.bf16 %v908, %v907
        %v919 = vpack.c.bf16 %v910, %v909
        %v920 = vpack.c.bf16 %v912, %v911
        %v921 = vpack.c.bf16 %v896, %v896
        %v922 = vld [vmem:[#allocation4 + $0x350] ss:$0 sm:$0xff]
        %923 = vmatpush.bf16.msra.mxu0 %v920
        %924 = vmatpush.bf16.msra.mxu0 %v919
        %925 = vmatpush.bf16.msra.mxu0 %v918
        %926 = vmatpush.bf16.msra.mxu0 %v917
        %927 = vmatpush.bf16.msra.mxu0 %v916
        %928 = vmatpush.bf16.msra.mxu0 %v915
        %929 = vmatpush.bf16.msra.mxu0 %v914
        %930 = vmatpush.bf16.msra.mxu0 %v913
        %931 = vmatmul.bf16.gmra.mxu0 %v921
        %v932 = vpop.f32.mrf.mxu0
        %v933 = vadd.f32 %v922, %v932
        %v934 = vpop.f32.mrf.mxu0
        %935 = vdwg.mxu0
        %vm936 = vcmask 31744
        %v937 = vsel %vm936, %v933, -inf
        %938 = vmax.xlane.f32.xlu0 %v937
        %v939 = vpop.xlane.xlu0 %938
        %v940 = vsub.f32 %v933, %v939
        %v941 = vmul.f32 %v940, 1.442695
        %v942 = vpow.pop %v941
        %v943 = vsel %vm936, %v942, 0.0
        %944 = vadd.xlane.f32.xlu0 %v943
        %v945 = vpop.xlane.xlu0 %944
        %v946 = vrcp.pop %v945
        %v947 = vmul.f32 %v945, %v946
        %v948 = vsub.f32 1.0, %v947
        %v949 = vmul.f32 %v946, %v948
        %v950 = vadd.f32 %v946, %v949
        %vm951 = vweird.f32 %v945
        %vm952 = vweird.f32 %v946
        %vm953 = vmor %vm951, %vm952
        %v954 = vsel %vm953, %v946, %v950
        %v955 = vand.u32 2147483647, %v945
        %vm956 = vcmp.eq.f32.partialorder %v955, 8.507059e+37
        %v957 = vand.u32 %v945, 2147483648
        %v958 = vor.u32 1.1754944e-38, %v957
        %v959 = vsel %vm956, %v958, %v954
        %v960 = vmul.f32 %v942, %v959
        %v961 = vld [vmem:[#allocation9] sm:$0xff]
        %v962 = vld [vmem:[#allocation9 + $0x8] sm:$0xff]
        %v963 = vld [vmem:[#allocation9 + $0x10] sm:$0xff]
        %v964 = vld [vmem:[#allocation9 + $0x18] sm:$0xff]
        %v965 = vld [vmem:[#allocation9 + $0x20] sm:$0xff]
        %v966 = vld [vmem:[#allocation9 + $0x28] sm:$0xff]
        %v967 = vld [vmem:[#allocation9 + $0x30] sm:$0xff]
        %v968 = vld [vmem:[#allocation9 + $0x38] sm:$0xff]
        %v969 = vld [vmem:[#allocation9 + $0x40] sm:$0xff]
        %v970 = vld [vmem:[#allocation9 + $0x48] sm:$0xff]
        %v971 = vld [vmem:[#allocation9 + $0x50] sm:$0xff]
        %v972 = vld [vmem:[#allocation9 + $0x58] sm:$0xff]
        %v973 = vld [vmem:[#allocation9 + $0x60] sm:$0xff]
        %v974 = vld [vmem:[#allocation9 + $0x68] sm:$0xff]
        %v975 = vld [vmem:[#allocation9 + $0x70] sm:$0xff]
        %v976 = vld [vmem:[#allocation9 + $0x78] sm:$0xff]
        %v977 = vld [vmem:[#allocation9 + $0x80] sm:$0xff]
        %v978 = vld [vmem:[#allocation9 + $0x88] sm:$0xff]
        %v979 = vld [vmem:[#allocation9 + $0x90] sm:$0xff]
        %v980 = vld [vmem:[#allocation9 + $0x98] sm:$0xff]
        %v981 = vld [vmem:[#allocation9 + $0xa0] sm:$0xff]
        %v982 = vld [vmem:[#allocation9 + $0xa8] sm:$0xff]
        %v983 = vld [vmem:[#allocation9 + $0xb0] sm:$0xff]
        %v984 = vld [vmem:[#allocation9 + $0xb8] sm:$0xff]
        %v985 = vld [vmem:[#allocation9 + $0xc0] sm:$0xff]
        %v986 = vld [vmem:[#allocation9 + $0xc8] sm:$0xff]
        %v987 = vld [vmem:[#allocation9 + $0xd0] sm:$0xff]
        %v988 = vld [vmem:[#allocation9 + $0xd8] sm:$0xff]
        %v989 = vld [vmem:[#allocation9 + $0xe0] sm:$0xff]
        %v990 = vld [vmem:[#allocation9 + $0xe8] sm:$0xff]
        %v991 = vld [vmem:[#allocation9 + $0xf0] sm:$0xff]
        %v992 = vld [vmem:[#allocation9 + $0xf8] sm:$0xff]
        %v993 = vpack.c.bf16 %v895, %v895
        %v994 = vld [vmem:[%s7] sm:$0xf]
        %v996 = vperm.slane %v994, 0
        %v997 = vperm.slane %v994, 1
        %v998 = vperm.slane %v994, 2
        %v999 = vperm.slane %v994, 3
        %v1036 = vunpack.c.l.b16 %v961
        %v1037 = vunpack.c.h.b16 %v961
        %v1038 = vunpack.c.l.b16 %v962
        %v1039 = vunpack.c.h.b16 %v962
        %v1040 = vunpack.c.l.b16 %v963
        %v1041 = vunpack.c.h.b16 %v963
        %v1042 = vunpack.c.l.b16 %v964
        %v1043 = vunpack.c.h.b16 %v964
        %v1044 = vunpack.c.l.b16 %v965
        %v1045 = vunpack.c.h.b16 %v965
        %v1046 = vunpack.c.l.b16 %v966
        %v1047 = vunpack.c.h.b16 %v966
        %v1048 = vunpack.c.l.b16 %v967
        %v1049 = vunpack.c.h.b16 %v967
        %v1050 = vunpack.c.l.b16 %v968
        %v1051 = vunpack.c.h.b16 %v968
        %v1052 = vunpack.c.l.b16 %v969
        %v1053 = vunpack.c.h.b16 %v969
        %v1054 = vunpack.c.l.b16 %v970
        %v1055 = vunpack.c.h.b16 %v970
        %v1056 = vunpack.c.l.b16 %v971
        %v1057 = vunpack.c.h.b16 %v971
        %v1058 = vunpack.c.l.b16 %v972
        %v1059 = vunpack.c.h.b16 %v972
        %v1060 = vunpack.c.l.b16 %v973
        %v1061 = vunpack.c.h.b16 %v973
        %v1062 = vunpack.c.l.b16 %v974
        %v1063 = vunpack.c.h.b16 %v974
        %v1064 = vunpack.c.l.b16 %v975
        %v1065 = vunpack.c.h.b16 %v975
        %v1066 = vunpack.c.l.b16 %v976
        %v1067 = vunpack.c.h.b16 %v976
        %v1068 = vunpack.c.l.b16 %v977
        %v1069 = vunpack.c.h.b16 %v977
        %v1070 = vunpack.c.l.b16 %v978
        %v1071 = vunpack.c.h.b16 %v978
        %v1072 = vunpack.c.l.b16 %v979
        %v1073 = vunpack.c.h.b16 %v979
        %v1074 = vunpack.c.l.b16 %v980
        %v1075 = vunpack.c.h.b16 %v980
        %v1076 = vunpack.c.l.b16 %v981
        %v1077 = vunpack.c.h.b16 %v981
        %v1078 = vunpack.c.l.b16 %v982
        %v1079 = vunpack.c.h.b16 %v982
        %v1080 = vunpack.c.l.b16 %v983
        %v1081 = vunpack.c.h.b16 %v983
        %v1082 = vunpack.c.l.b16 %v984
        %v1083 = vunpack.c.h.b16 %v984
        %v1084 = vunpack.c.l.b16 %v985
        %v1085 = vunpack.c.h.b16 %v985
        %v1086 = vunpack.c.l.b16 %v986
        %v1087 = vunpack.c.h.b16 %v986
        %v1088 = vunpack.c.l.b16 %v987
        %v1089 = vunpack.c.h.b16 %v987
        %v1090 = vunpack.c.l.b16 %v988
        %v1091 = vunpack.c.h.b16 %v988
        %v1092 = vunpack.c.l.b16 %v989
        %v1093 = vunpack.c.h.b16 %v989
        %v1094 = vunpack.c.l.b16 %v990
        %v1095 = vunpack.c.h.b16 %v990
        %v1096 = vunpack.c.l.b16 %v991
        %v1097 = vunpack.c.h.b16 %v991
        %v1098 = vunpack.c.l.b16 %v992
        %v1099 = vunpack.c.h.b16 %v992
        %v1100 = vpack.c.b16 %v1040, %v1036
        %v1101 = vpack.c.b16 %v1041, %v1037
        %v1102 = vpack.c.b16 %v1042, %v1038
        %v1103 = vpack.c.b16 %v1043, %v1039
        %v1104 = vpack.c.b16 %v1048, %v1044
        %v1105 = vpack.c.b16 %v1049, %v1045
        %v1106 = vpack.c.b16 %v1050, %v1046
        %v1107 = vpack.c.b16 %v1051, %v1047
        %v1108 = vpack.c.b16 %v1056, %v1052
        %v1109 = vpack.c.b16 %v1057, %v1053
        %v1110 = vpack.c.b16 %v1058, %v1054
        %v1111 = vpack.c.b16 %v1059, %v1055
        %v1112 = vpack.c.b16 %v1064, %v1060
        %v1113 = vpack.c.b16 %v1065, %v1061
        %v1114 = vpack.c.b16 %v1066, %v1062
        %v1115 = vpack.c.b16 %v1067, %v1063
        %v1116 = vpack.c.b16 %v1072, %v1068
        %v1117 = vpack.c.b16 %v1073, %v1069
        %v1118 = vpack.c.b16 %v1074, %v1070
        %v1119 = vpack.c.b16 %v1075, %v1071
        %v1120 = vpack.c.b16 %v1080, %v1076
        %v1121 = vpack.c.b16 %v1081, %v1077
        %v1122 = vpack.c.b16 %v1082, %v1078
        %v1123 = vpack.c.b16 %v1083, %v1079
        %v1124 = vpack.c.b16 %v1088, %v1084
        %v1125 = vpack.c.b16 %v1089, %v1085
        %v1126 = vpack.c.b16 %v1090, %v1086
        %v1127 = vpack.c.b16 %v1091, %v1087
        %v1128 = vpack.c.b16 %v1096, %v1092
        %v1129 = vpack.c.b16 %v1097, %v1093
        %v1130 = vpack.c.b16 %v1098, %v1094
        %v1131 = vpack.c.b16 %v1099, %v1095
        %1164 = vmatpush.bf16.msra.mxu0 %v1128
        %1165 = vmatpush.bf16.msra.mxu0 %v1124
        %1166 = vmatpush.bf16.msra.mxu0 %v1120
        %1167 = vmatpush.bf16.msra.mxu0 %v1116
        %1168 = vmatpush.bf16.msra.mxu0 %v1112
        %1169 = vmatpush.bf16.msra.mxu0 %v1108
        %1170 = vmatpush.bf16.msra.mxu0 %v1104
        %1171 = vmatpush.bf16.msra.mxu0 %v1100
        %1172 = vmatmul.bf16.gmra.mxu0 %v993
        %v1173 = vpop.f32.mrf.mxu0
        %v1174 = vadd.f32 %v996, %v1173
        %v1175 = vpop.f32.mrf.mxu0
        %1176 = vdwg.mxu0
        %1177 = vmatpush.bf16.msra.mxu0 %v1129
        %1178 = vmatpush.bf16.msra.mxu0 %v1125
        %1179 = vmatpush.bf16.msra.mxu0 %v1121
        %1180 = vmatpush.bf16.msra.mxu0 %v1117
        %1181 = vmatpush.bf16.msra.mxu0 %v1113
        %1182 = vmatpush.bf16.msra.mxu0 %v1109
        %1183 = vmatpush.bf16.msra.mxu0 %v1105
        %1184 = vmatpush.bf16.msra.mxu0 %v1101
        %1185 = vmatmul.bf16.gmra.mxu0 %v993
        %v1186 = vpop.f32.mrf.mxu0
        %v1187 = vadd.f32 %v997, %v1186
        %v1188 = vpop.f32.mrf.mxu0
        %1189 = vdwg.mxu0
        %1190 = vmatpush.bf16.msra.mxu0 %v1130
        %1191 = vmatpush.bf16.msra.mxu0 %v1126
        %1192 = vmatpush.bf16.msra.mxu0 %v1122
        %1193 = vmatpush.bf16.msra.mxu0 %v1118
        %1194 = vmatpush.bf16.msra.mxu0 %v1114
        %1195 = vmatpush.bf16.msra.mxu0 %v1110
        %1196 = vmatpush.bf16.msra.mxu0 %v1106
        %1197 = vmatpush.bf16.msra.mxu0 %v1102
        %1198 = vmatmul.bf16.gmra.mxu0 %v993
        %v1199 = vpop.f32.mrf.mxu0
        %v1200 = vadd.f32 %v998, %v1199
        %v1201 = vpop.f32.mrf.mxu0
        %1202 = vdwg.mxu0
        %1203 = vmatpush.bf16.msra.mxu0 %v1131
        %1204 = vmatpush.bf16.msra.mxu0 %v1127
        %1205 = vmatpush.bf16.msra.mxu0 %v1123
        %1206 = vmatpush.bf16.msra.mxu0 %v1119
        %1207 = vmatpush.bf16.msra.mxu0 %v1115
        %1208 = vmatpush.bf16.msra.mxu0 %v1111
        %1209 = vmatpush.bf16.msra.mxu0 %v1107
        %1210 = vmatpush.bf16.msra.mxu0 %v1103
        %1211 = vmatmul.bf16.gmra.mxu0 %v993
        %v1212 = vpop.f32.mrf.mxu0
        %v1213 = vadd.f32 %v999, %v1212
        %v1214 = vpop.f32.mrf.mxu0
        %1215 = vdwg.mxu0
        %v1216 = vld [vmem:[%s8] ss:$4 sm:$0x3]
        %s1217 = scalar_lea.vmem %s8, 1
        %v1218 = vld [vmem:[%s1217] ss:$4 sm:$0x3]
        %s1219 = scalar_lea.vmem %s8, 2
        %v1220 = vld [vmem:[%s1219] ss:$4 sm:$0x3]
        %v1221 = vmax.f32 %v1174, %v1187
        %1222 = vmax.xlane.f32.xlu0 %v1221
        %v1223 = vpop.xlane.xlu0 %1222
        %v1224 = vsub.f32 %v1174, %v1223
        %v1225 = vsub.f32 %v1187, %v1223
        %v1226 = vmul.f32 %v1224, 1.442695
        %v1227 = vpow.pop %v1226
        %v1228 = vmul.f32 %v1225, 1.442695
        %v1229 = vpow.pop %v1228
        %v1230 = vadd.f32 %v1227, %v1229
        %1231 = vadd.xlane.f32.xlu0 %v1230
        %v1232 = vpop.xlane.xlu0 %1231
        %v1233 = vlog2.pop %v1232
        %v1234 = vmul.f32 %v1233, 0.6931472
        %v1235 = vadd.f32 %v1223, %v1234
        %v1236 = vsub.f32 %v1174, %v1235
        %v1237 = vsub.f32 %v1187, %v1235
        %1239 = vset.pattern.permute.xlu0 20
        %1240 = vperm.xlu0 %1239, %v841
        %v1241 = vpop.permute.xlu0 %1240
        %v1243 = vadd.f32 %v1241, %v1236
        %v1244 = vadd.f32 %v1241, %v1237
        %v1245 = vmul.f32 %v1243, 1.442695
        %v1246 = vpow.pop %v1245
        %v1247 = vmul.f32 %v1244, 1.442695
        %v1248 = vpow.pop %v1247
        %v1249 = vsub.f32 0.0, %v1200
        %v1250 = vsub.f32 0.0, %v1213
        %v1251 = vmax.f32 %v1249, 0.0
        %v1252 = vmax.f32 %v1250, 0.0
        %v1253 = vand.u32 2147483647, %v1249
        %v1254 = vand.u32 2147483647, %v1250
        %v1255 = vsub.f32 0.0, %v1253
        %v1256 = vsub.f32 0.0, %v1254
        %v1257 = vmul.f32 %v1255, 1.442695
        %v1258 = vpow.pop %v1257
        %v1259 = vmul.f32 %v1256, 1.442695
        %v1260 = vpow.pop %v1259
        %v1261 = vadd.f32 %v1258, 1.0
        %v1262 = vadd.f32 %v1260, 1.0
        %v1263 = vlog2.pop %v1261
        %v1264 = vmul.f32 %v1263, 0.6931472
        %v1265 = vlog2.pop %v1262
        %v1266 = vmul.f32 %v1265, 0.6931472
        %v1267 = vadd.f32 %v1251, %v1264
        %v1268 = vadd.f32 %v1252, %v1266
        %v1270 = vperm.slane %v1216, 0
        %v1271 = vperm.slane %v1216, 1
        %v1274 = vadd.f32 %v1270, %v1246
        %v1275 = vadd.f32 %v1271, %v1248
        %v1276 = vadd.f32 %v1274, 1e-08
        %v1277 = vadd.f32 %v1275, 1e-08
        %v1278 = vlog2.pop %v1276
        %v1279 = vmul.f32 %v1278, 0.6931472
        %v1280 = vlog2.pop %v1277
        %v1281 = vmul.f32 %v1280, 0.6931472
        %v1283 = vperm.slane %v1218, 0
        %v1284 = vperm.slane %v1218, 1
        %v1287 = vsub.f32 %v1283, %v1279
        %v1288 = vsub.f32 %v1284, %v1281
        %v1289 = vmul.f32 %v1270, %v1287
        %v1290 = vmul.f32 %v1271, %v1288
        %v1291 = vadd.f32 %v1249, %v1289
        %v1292 = vadd.f32 %v1250, %v1290
        %v1293 = vmax.f32 %v1291, 0.0
        %v1294 = vmax.f32 %v1292, 0.0
        %v1295 = vand.u32 2147483647, %v1291
        %v1296 = vand.u32 2147483647, %v1292
        %v1297 = vsub.f32 0.0, %v1295
        %v1298 = vsub.f32 0.0, %v1296
        %v1299 = vmul.f32 %v1297, 1.442695
        %v1300 = vpow.pop %v1299
        %v1301 = vmul.f32 %v1298, 1.442695
        %v1302 = vpow.pop %v1301
        %v1303 = vadd.f32 %v1300, 1.0
        %v1304 = vadd.f32 %v1302, 1.0
        %v1305 = vlog2.pop %v1303
        %v1306 = vmul.f32 %v1305, 0.6931472
        %v1307 = vlog2.pop %v1304
        %v1308 = vmul.f32 %v1307, 0.6931472
        %v1309 = vadd.f32 %v1293, %v1306
        %v1310 = vadd.f32 %v1294, %v1308
        %v1311 = vsub.f32 %v1309, %v1267
        %v1312 = vsub.f32 %v1310, %v1268
        %v1313 = vsub.f32 0.0, %v1267
        %v1314 = vsub.f32 0.0, %v1268
        %v1315 = vadd.f32 %v1313, %v1291
        %v1316 = vadd.f32 %v1314, %v1292
        %v1317 = vsub.f32 %v1243, %v1279
        %v1318 = vsub.f32 %v1244, %v1281
        %v1319 = vmul.f32 %v466, %v1317
        %v1320 = vmul.f32 %v467, %v1318
        %v1321 = vadd.f32 %v1315, %v1319
        %v1322 = vadd.f32 %v1316, %v1320
        %v1323 = vadd.f32 %v466, %v1270
        %v1324 = vadd.f32 %v467, %v1271
        %v1325 = vsub.f32 %v1323, 1.0
        %v1326 = vsub.f32 %v1324, 1.0
        %v1327 = vadd.f32 %v1325, 60.458332
        %v1328 = vadd.f32 %v1326, 60.458332
        %v1329 = vadd.f32 %v1325, 36.0
        %v1330 = vadd.f32 %v1326, 36.0
        %v1331 = vmul.f32 %v1327, %v1325
        %v1332 = vmul.f32 %v1328, %v1326
        %v1333 = vadd.f32 %v1331, 1599.0425
        %v1334 = vadd.f32 %v1332, 1599.0425
        %v1335 = vmul.f32 %v1329, %v1325
        %v1336 = vmul.f32 %v1330, %v1326
        %v1337 = vadd.f32 %v1335, 546.0
        %v1338 = vadd.f32 %v1336, 546.0
        %v1339 = vmul.f32 %v1333, %v1325
        %v1340 = vmul.f32 %v1334, %v1326
        %v1341 = vadd.f32 %v1339, 24165.51
        %v1342 = vadd.f32 %v1340, 24165.51
        %v1343 = vmul.f32 %v1337, %v1325
        %v1344 = vmul.f32 %v1338, %v1326
        %v1345 = vadd.f32 %v1343, 4536.0
        %v1346 = vadd.f32 %v1344, 4536.0
        %v1347 = vmul.f32 %v1341, %v1325
        %v1348 = vmul.f32 %v1342, %v1326
        %v1349 = vadd.f32 %v1347, 228235.22
        %v1350 = vadd.f32 %v1348, 228235.22
        %v1351 = vmul.f32 %v1345, %v1325
        %v1352 = vmul.f32 %v1346, %v1326
        %v1353 = vadd.f32 %v1351, 22449.0
        %v1354 = vadd.f32 %v1352, 22449.0
        %v1355 = vmul.f32 %v1349, %v1325
        %v1356 = vmul.f32 %v1350, %v1326
        %v1357 = vadd.f32 %v1355, 1379496.3
        %v1358 = vadd.f32 %v1356, 1379496.3
        %v1359 = vmul.f32 %v1353, %v1325
        %v1360 = vmul.f32 %v1354, %v1326
        %v1361 = vadd.f32 %v1359, 67284.0
        %v1362 = vadd.f32 %v1360, 67284.0
        %v1363 = vmul.f32 %v1357, %v1325
        %v1364 = vmul.f32 %v1358, %v1326
        %v1365 = vadd.f32 %v1363, 5210869.0
        %v1366 = vadd.f32 %v1364, 5210869.0
        %v1367 = vmul.f32 %v1361, %v1325
        %v1368 = vmul.f32 %v1362, %v1326
        %v1369 = vadd.f32 %v1367, 118124.0
        %v1370 = vadd.f32 %v1368, 118124.0
        %v1371 = vmul.f32 %v1365, %v1325
        %v1372 = vmul.f32 %v1366, %v1326
        %v1373 = vadd.f32 %v1371, 11246929.0
        %v1374 = vadd.f32 %v1372, 11246929.0
        %v1375 = vmul.f32 %v1369, %v1325
        %v1376 = vmul.f32 %v1370, %v1326
        %v1377 = vadd.f32 %v1375, 109584.0
        %v1378 = vadd.f32 %v1376, 109584.0
        %v1379 = vmul.f32 %v1373, %v1325
        %v1380 = vmul.f32 %v1374, %v1326
        %v1381 = vadd.f32 %v1379, 10619610.0
        %v1382 = vadd.f32 %v1380, 10619610.0
        %v1383 = vmul.f32 %v1377, %v1325
        %v1384 = vmul.f32 %v1378, %v1326
        %v1385 = vadd.f32 %v1383, 40320.0
        %v1386 = vadd.f32 %v1384, 40320.0
        %v1387 = vadd.f32 %v1325, 7.5
        %v1388 = vadd.f32 %v1326, 7.5
        %v1389 = vadd.f32 %v1325, 0.5
        %v1390 = vadd.f32 %v1326, 0.5
        %v1391 = vlog2.pop %v1387
        %v1392 = vmul.f32 %v1391, 0.6931472
        %v1393 = vlog2.pop %v1388
        %v1394 = vmul.f32 %v1393, 0.6931472
        %v1395 = vmul.f32 %v1389, %v1392
        %v1396 = vmul.f32 %v1390, %v1394
        %v1397 = vadd.f32 %v1395, 0.9189385
        %v1398 = vadd.f32 %v1396, 0.9189385
        %v1399 = vsub.f32 %v1397, %v1387
        %v1400 = vsub.f32 %v1398, %v1388
        %v1401 = vrcp.pop %v1385
        %v1402 = vmul.f32 %v1385, %v1401
        %v1403 = vsub.f32 1.0, %v1402
        %v1404 = vmul.f32 %v1401, %v1403
        %v1405 = vadd.f32 %v1401, %v1404
        %vm1406 = vweird.f32 %v1385
        %vm1407 = vweird.f32 %v1401
        %vm1408 = vmor %vm1406, %vm1407
        %v1409 = vsel %vm1408, %v1401, %v1405
        %v1410 = vand.u32 2147483647, %v1385
        %vm1411 = vcmp.eq.f32.partialorder %v1410, 8.507059e+37
        %v1412 = vand.u32 %v1385, 2147483648
        %v1413 = vor.u32 1.1754944e-38, %v1412
        %v1414 = vsel %vm1411, %v1413, %v1409
        %v1415 = vmul.f32 %v1381, %v1414
        %v1416 = vrcp.pop %v1386
        %v1417 = vmul.f32 %v1386, %v1416
        %v1418 = vsub.f32 1.0, %v1417
        %v1419 = vmul.f32 %v1416, %v1418
        %v1420 = vadd.f32 %v1416, %v1419
        %vm1421 = vweird.f32 %v1386
        %vm1422 = vweird.f32 %v1416
        %vm1423 = vmor %vm1421, %vm1422
        %v1424 = vsel %vm1423, %v1416, %v1420
        %v1425 = vand.u32 2147483647, %v1386
        %vm1426 = vcmp.eq.f32.partialorder %v1425, 8.507059e+37
        %v1427 = vand.u32 %v1386, 2147483648
        %v1428 = vor.u32 1.1754944e-38, %v1427
        %v1429 = vsel %vm1426, %v1428, %v1424
        %v1430 = vmul.f32 %v1382, %v1429
        %v1431 = vlog2.pop %v1415
        %v1432 = vmul.f32 %v1431, 0.6931472
        %v1433 = vlog2.pop %v1430
        %v1434 = vmul.f32 %v1433, 0.6931472
        %v1435 = vadd.f32 %v1399, %v1432
        %v1436 = vadd.f32 %v1400, %v1434
        %v1437 = vadd.f32 %v1321, %v1435
        %v1438 = vadd.f32 %v1322, %v1436
        %v1440 = vperm.slane %v1220, 0
        %v1441 = vperm.slane %v1220, 1
        %v1444 = vsub.f32 %v1437, %v1440
        %v1445 = vsub.f32 %v1438, %v1441
        %v1446 = vsub.f32 %v468, 1.0
        %v1447 = vsub.f32 %v469, 1.0
        %v1448 = vadd.f32 %v1446, 60.458332
        %v1449 = vadd.f32 %v1447, 60.458332
        %v1450 = vadd.f32 %v1446, 36.0
        %v1451 = vadd.f32 %v1447, 36.0
        %v1452 = vmul.f32 %v1448, %v1446
        %v1453 = vmul.f32 %v1449, %v1447
        %v1454 = vadd.f32 %v1452, 1599.0425
        %v1455 = vadd.f32 %v1453, 1599.0425
        %v1456 = vmul.f32 %v1450, %v1446
        %v1457 = vmul.f32 %v1451, %v1447
        %v1458 = vadd.f32 %v1456, 546.0
        %v1459 = vadd.f32 %v1457, 546.0
        %v1460 = vmul.f32 %v1454, %v1446
        %v1461 = vmul.f32 %v1455, %v1447
        %v1462 = vadd.f32 %v1460, 24165.51
        %v1463 = vadd.f32 %v1461, 24165.51
        %v1464 = vmul.f32 %v1458, %v1446
        %v1465 = vmul.f32 %v1459, %v1447
        %v1466 = vadd.f32 %v1464, 4536.0
        %v1467 = vadd.f32 %v1465, 4536.0
        %v1468 = vmul.f32 %v1462, %v1446
        %v1469 = vmul.f32 %v1463, %v1447
        %v1470 = vadd.f32 %v1468, 228235.22
        %v1471 = vadd.f32 %v1469, 228235.22
        %v1472 = vmul.f32 %v1466, %v1446
        %v1473 = vmul.f32 %v1467, %v1447
        %v1474 = vadd.f32 %v1472, 22449.0
        %v1475 = vadd.f32 %v1473, 22449.0
        %v1476 = vmul.f32 %v1470, %v1446
        %v1477 = vmul.f32 %v1471, %v1447
        %v1478 = vadd.f32 %v1476, 1379496.3
        %v1479 = vadd.f32 %v1477, 1379496.3
        %v1480 = vmul.f32 %v1474, %v1446
        %v1481 = vmul.f32 %v1475, %v1447
        %v1482 = vadd.f32 %v1480, 67284.0
        %v1483 = vadd.f32 %v1481, 67284.0
        %v1484 = vmul.f32 %v1478, %v1446
        %v1485 = vmul.f32 %v1479, %v1447
        %v1486 = vadd.f32 %v1484, 5210869.0
        %v1487 = vadd.f32 %v1485, 5210869.0
        %v1488 = vmul.f32 %v1482, %v1446
        %v1489 = vmul.f32 %v1483, %v1447
        %v1490 = vadd.f32 %v1488, 118124.0
        %v1491 = vadd.f32 %v1489, 118124.0
        %v1492 = vmul.f32 %v1486, %v1446
        %v1493 = vmul.f32 %v1487, %v1447
        %v1494 = vadd.f32 %v1492, 11246929.0
        %v1495 = vadd.f32 %v1493, 11246929.0
        %v1496 = vmul.f32 %v1490, %v1446
        %v1497 = vmul.f32 %v1491, %v1447
        %v1498 = vadd.f32 %v1496, 109584.0
        %v1499 = vadd.f32 %v1497, 109584.0
        %v1500 = vmul.f32 %v1494, %v1446
        %v1501 = vmul.f32 %v1495, %v1447
        %v1502 = vadd.f32 %v1500, 10619610.0
        %v1503 = vadd.f32 %v1501, 10619610.0
        %v1504 = vmul.f32 %v1498, %v1446
        %v1505 = vmul.f32 %v1499, %v1447
        %v1506 = vadd.f32 %v1504, 40320.0
        %v1507 = vadd.f32 %v1505, 40320.0
        %v1508 = vadd.f32 %v1446, 7.5
        %v1509 = vadd.f32 %v1447, 7.5
        %v1510 = vadd.f32 %v1446, 0.5
        %v1511 = vadd.f32 %v1447, 0.5
        %v1512 = vlog2.pop %v1508
        %v1513 = vmul.f32 %v1512, 0.6931472
        %v1514 = vlog2.pop %v1509
        %v1515 = vmul.f32 %v1514, 0.6931472
        %v1516 = vmul.f32 %v1510, %v1513
        %v1517 = vmul.f32 %v1511, %v1515
        %v1518 = vadd.f32 %v1516, 0.9189385
        %v1519 = vadd.f32 %v1517, 0.9189385
        %v1520 = vsub.f32 %v1518, %v1508
        %v1521 = vsub.f32 %v1519, %v1509
        %v1522 = vrcp.pop %v1506
        %v1523 = vmul.f32 %v1506, %v1522
        %v1524 = vsub.f32 1.0, %v1523
        %v1525 = vmul.f32 %v1522, %v1524
        %v1526 = vadd.f32 %v1522, %v1525
        %vm1527 = vweird.f32 %v1506
        %vm1528 = vweird.f32 %v1522
        %vm1529 = vmor %vm1527, %vm1528
        %v1530 = vsel %vm1529, %v1522, %v1526
        %v1531 = vand.u32 2147483647, %v1506
        %vm1532 = vcmp.eq.f32.partialorder %v1531, 8.507059e+37
        %v1533 = vand.u32 %v1506, 2147483648
        %v1534 = vor.u32 1.1754944e-38, %v1533
        %v1535 = vsel %vm1532, %v1534, %v1530
        %v1536 = vmul.f32 %v1502, %v1535
        %v1537 = vrcp.pop %v1507
        %v1538 = vmul.f32 %v1507, %v1537
        %v1539 = vsub.f32 1.0, %v1538
        %v1540 = vmul.f32 %v1537, %v1539
        %v1541 = vadd.f32 %v1537, %v1540
        %vm1542 = vweird.f32 %v1507
        %vm1543 = vweird.f32 %v1537
        %vm1544 = vmor %vm1542, %vm1543
        %v1545 = vsel %vm1544, %v1537, %v1541
        %v1546 = vand.u32 2147483647, %v1507
        %vm1547 = vcmp.eq.f32.partialorder %v1546, 8.507059e+37
        %v1548 = vand.u32 %v1507, 2147483648
        %v1549 = vor.u32 1.1754944e-38, %v1548
        %v1550 = vsel %vm1547, %v1549, %v1545
        %v1551 = vmul.f32 %v1503, %v1550
        %v1552 = vlog2.pop %v1536
        %v1553 = vmul.f32 %v1552, 0.6931472
        %v1554 = vlog2.pop %v1551
        %v1555 = vmul.f32 %v1554, 0.6931472
        %v1556 = vadd.f32 %v1520, %v1553
        %v1557 = vadd.f32 %v1521, %v1555
        %v1558 = vsub.f32 %v1444, %v1556
        %v1559 = vsub.f32 %v1445, %v1557
        %vm1560 = vcmp.lt.f32.partialorder %v466, 1e-08
        %vm1561 = vcmp.lt.f32.partialorder %v467, 1e-08
        %v1562 = vsel %vm1560, %v1311, %v1558
        %v1563 = vsel %vm1561, %v1312, %v1559
        %v1564 = vadd.f32 %v1562, %v1563
        %1565 = vadd.xlane.f32.xlu0 %v1564
        %v1566 = vpop.xlane.xlu0 %1565
        %v1567 = vsub.f32 0.0, %v1566
        %v1568 = vld [vmem:[#allocation4 + $0x360] sm:$0xff]
        %v1569 = vld [vmem:[#allocation4 + $0x370] sm:$0x3]
        %v1570 = vpack.c.bf16 %v1569, %v1568
        %v1571 = vld [vmem:[#allocation4 + $0x380] ss:$0 sm:$0xff]
        %v1573 = vsel %vm860, %v1570, 0
        %1575 = vmatpush.bf16.msra.mxu0 0
        %1576 = vmatpush.bf16.msra.mxu0 0
        %1577 = vmatpush.bf16.msra.mxu0 0
        %1578 = vmatpush.bf16.msra.mxu0 0
        %1579 = vmatpush.bf16.msra.mxu0 0
        %1580 = vmatpush.bf16.msra.mxu0 0
        %1581 = vmatpush.bf16.msra.mxu0 0
        %1582 = vmatpush.bf16.msra.mxu0 %v1573
        %1583 = vmatmul.bf16.gmra.mxu0 %v858
        %v1584 = vpop.f32.mrf.mxu0
        %v1585 = vadd.f32 %v1571, %v1584
        %v1586 = vpop.f32.mrf.mxu0
        %1587 = vdwg.mxu0
        %v1588 = vld [vmem:[#allocation4 + $0x390] sm:$0xf]
        %v1589 = vld [vmem:[#allocation4 + $0x4e0] sm:$0xf]
        %v1590 = vperm.slane %v1588, 0
        %v1591 = vperm.slane %v1588, 1
        %v1592 = vperm.slane %v1588, 2
        %v1593 = vperm.slane %v1588, 3
        %v1594 = vperm.slane %v1589, 0
        %v1595 = vperm.slane %v1589, 1
        %v1596 = vperm.slane %v1589, 2
        %v1597 = vperm.slane %v1589, 3
        %v1598 = vld [vmem:[%s399] sm:$0xff]
        %s1599 = scalar_lea.vmem %s399, 8 [#allocation3]
        %v1600 = vld [vmem:[%s1599] sm:$0xff]
        %s1601 = scalar_lea.vmem %s399, 16 [#allocation3]
        %v1602 = vld [vmem:[%s1601] sm:$0xff]
        %s1603 = scalar_lea.vmem %s399, 24 [#allocation3]
        %v1604 = vld [vmem:[%s1603] sm:$0xff]
        %v1605 = vadd.f32 %v1585, %v1590
        %v1606 = vadd.f32 %v1585, %v1591
        %v1607 = vadd.f32 %v1585, %v1592
        %v1608 = vadd.f32 %v1585, %v1593
        %v1609 = vmul.f32 %v1605, 0.9995004
        %v1610 = vmul.f32 %v1606, 0.9995004
        %v1611 = vmul.f32 %v1607, 0.9995004
        %v1612 = vmul.f32 %v1608, 0.9995004
        %v1613 = vmax.f32 %v1609, 0.0
        %v1614 = vmax.f32 %v1610, 0.0
        %v1615 = vmax.f32 %v1611, 0.0
        %v1616 = vmax.f32 %v1612, 0.0
        %v1617 = vld [vmem:[#allocation4 + $0x3a0] sm:$0xff]
        %v1618 = vld [vmem:[#allocation4 + $0x3b0] sm:$0xff]
        %v1619 = vld [vmem:[#allocation4 + $0x3c0] sm:$0xff]
        %v1620 = vld [vmem:[#allocation4 + $0x3d0] sm:$0xff]
        %v1621 = vld [vmem:[#allocation4 + $0x3e0] sm:$0xff]
        %v1622 = vld [vmem:[#allocation4 + $0x3f0] sm:$0xff]
        %v1623 = vld [vmem:[#allocation4 + $0x400] sm:$0xff]
        %v1624 = vld [vmem:[#allocation4 + $0x410] sm:$0xff]
        %v1625 = vld [vmem:[#allocation4 + $0x420] sm:$0xff]
        %v1626 = vld [vmem:[#allocation4 + $0x430] sm:$0xff]
        %v1627 = vld [vmem:[#allocation4 + $0x440] sm:$0xff]
        %v1628 = vld [vmem:[#allocation4 + $0x450] sm:$0xff]
        %v1629 = vld [vmem:[#allocation4 + $0x460] sm:$0xff]
        %v1630 = vld [vmem:[#allocation4 + $0x470] sm:$0xff]
        %v1631 = vld [vmem:[#allocation4 + $0x480] sm:$0xff]
        %v1632 = vld [vmem:[#allocation4 + $0x490] sm:$0xff]
        %v1633 = vpack.c.bf16 %v1618, %v1617
        %v1634 = vpack.c.bf16 %v1620, %v1619
        %v1635 = vpack.c.bf16 %v1622, %v1621
        %v1636 = vpack.c.bf16 %v1624, %v1623
        %v1637 = vpack.c.bf16 %v1626, %v1625
        %v1638 = vpack.c.bf16 %v1628, %v1627
        %v1639 = vpack.c.bf16 %v1630, %v1629
        %v1640 = vpack.c.bf16 %v1632, %v1631
        %v1641 = vpack.c.bf16 %v1614, %v1613
        %v1642 = vpack.c.bf16 %v1616, %v1615
        %v1643 = vld [vmem:[#allocation4 + $0x4a0] ss:$0 sm:$0xff]
        %1644 = vmatpush.bf16.msra.mxu0 %v1640
        %1645 = vmatpush.bf16.msra.mxu0 %v1639
        %1646 = vmatpush.bf16.msra.mxu0 %v1638
        %1647 = vmatpush.bf16.msra.mxu0 %v1637
        %1648 = vmatpush.bf16.msra.mxu0 %v1636
        %1649 = vmatpush.bf16.msra.mxu0 %v1635
        %1650 = vmatpush.bf16.msra.mxu0 %v1634
        %1651 = vmatpush.bf16.msra.mxu0 %v1633
        %1652 = vmatmul.bf16.gmra.mxu0 %v1641
        %v1653 = vpop.f32.mrf.mxu0
        %v1654 = vadd.f32 %v1643, %v1653
        %v1655 = vpop.f32.mrf.mxu0
        %v1656 = vadd.f32 %v1643, %v1655
        %1657 = vmatmul.bf16.gmra.mxu0 %v1642
        %v1658 = vpop.f32.mrf.mxu0
        %v1659 = vadd.f32 %v1643, %v1658
        %v1660 = vpop.f32.mrf.mxu0
        %v1661 = vadd.f32 %v1643, %v1660
        %1662 = vdwg.mxu0
        %v1663 = vmul.f32 %v1654, 1.442695
        %v1664 = vpow.pop %v1663
        %v1665 = vmul.f32 %v1656, 1.442695
        %v1666 = vpow.pop %v1665
        %v1667 = vmul.f32 %v1659, 1.442695
        %v1668 = vpow.pop %v1667
        %v1669 = vmul.f32 %v1661, 1.442695
        %v1670 = vpow.pop %v1669
        %v1671 = vadd.f32 %v1664, 0.0001
        %v1672 = vadd.f32 %v1666, 0.0001
        %v1673 = vadd.f32 %v1668, 0.0001
        %v1674 = vadd.f32 %v1670, 0.0001
        %v1675 = vrsqrt.pop %v1671
        %v1676 = vmul.f32 %v1675, %v1671
        %v1677 = vmul.f32 %v1676, %v1675
        %v1678 = vmul.f32 0.5, %v1677
        %v1679 = vsub.f32 1.5, %v1678
        %v1680 = vmul.f32 %v1675, %v1679
        %v1681 = vmul.f32 %v1671, %v1680
        %vm1682 = vcmp.eq.f32.partialorder %v1671, inf
        %v1683 = vsel %vm1682, %v1671, %v1681
        %vm1684 = vcmp.eq.f32.partialorder %v1671, 0.0
        %v1685 = vand.u32 %v1671, 2147483648
        %v1686 = vsel %vm1684, %v1685, %v1683
        %v1687 = vrsqrt.pop %v1672
        %v1688 = vmul.f32 %v1687, %v1672
        %v1689 = vmul.f32 %v1688, %v1687
        %v1690 = vmul.f32 0.5, %v1689
        %v1691 = vsub.f32 1.5, %v1690
        %v1692 = vmul.f32 %v1687, %v1691
        %v1693 = vmul.f32 %v1672, %v1692
        %vm1694 = vcmp.eq.f32.partialorder %v1672, inf
        %v1695 = vsel %vm1694, %v1672, %v1693
        %vm1696 = vcmp.eq.f32.partialorder %v1672, 0.0
        %v1697 = vand.u32 %v1672, 2147483648
        %v1698 = vsel %vm1696, %v1697, %v1695
        %v1699 = vrsqrt.pop %v1673
        %v1700 = vmul.f32 %v1699, %v1673
        %v1701 = vmul.f32 %v1700, %v1699
        %v1702 = vmul.f32 0.5, %v1701
        %v1703 = vsub.f32 1.5, %v1702
        %v1704 = vmul.f32 %v1699, %v1703
        %v1705 = vmul.f32 %v1673, %v1704
        %vm1706 = vcmp.eq.f32.partialorder %v1673, inf
        %v1707 = vsel %vm1706, %v1673, %v1705
        %vm1708 = vcmp.eq.f32.partialorder %v1673, 0.0
        %v1709 = vand.u32 %v1673, 2147483648
        %v1710 = vsel %vm1708, %v1709, %v1707
        %v1711 = vrsqrt.pop %v1674
        %v1712 = vmul.f32 %v1711, %v1674
        %v1713 = vmul.f32 %v1712, %v1711
        %v1714 = vmul.f32 0.5, %v1713
        %v1715 = vsub.f32 1.5, %v1714
        %v1716 = vmul.f32 %v1711, %v1715
        %v1717 = vmul.f32 %v1674, %v1716
        %vm1718 = vcmp.eq.f32.partialorder %v1674, inf
        %v1719 = vsel %vm1718, %v1674, %v1717
        %vm1720 = vcmp.eq.f32.partialorder %v1674, 0.0
        %v1721 = vand.u32 %v1674, 2147483648
        %v1722 = vsel %vm1720, %v1721, %v1719
        %1727 = vrot.lane.b32.xlu0 %v1598, 10
        %v1728 = vpop.permute.xlu0 %1727
        %1729 = vrot.lane.b32.xlu0 %v1600, 10
        %v1730 = vpop.permute.xlu0 %1729
        %1731 = vrot.lane.b32.xlu0 %v1602, 10
        %v1732 = vpop.permute.xlu0 %1731
        %1733 = vrot.lane.b32.xlu0 %v1604, 10
        %v1734 = vpop.permute.xlu0 %1733
        %v1739 = vmul.f32 %v1686, %v1728
        %v1740 = vmul.f32 %v1698, %v1730
        %v1741 = vmul.f32 %v1710, %v1732
        %v1742 = vmul.f32 %v1722, %v1734
        %1747 = vrot.lane.b32.xlu0 %v1739, 118
        %v1748 = vpop.permute.xlu0 %1747
        %1749 = vrot.lane.b32.xlu0 %v1740, 118
        %v1750 = vpop.permute.xlu0 %1749
        %1751 = vrot.lane.b32.xlu0 %v1741, 118
        %v1752 = vpop.permute.xlu0 %1751
        %1753 = vrot.lane.b32.xlu0 %v1742, 118
        %v1754 = vpop.permute.xlu0 %1753
        %v1759 = vadd.f32 %v1654, %v1748
        %v1760 = vadd.f32 %v1656, %v1750
        %v1761 = vadd.f32 %v1659, %v1752
        %v1762 = vadd.f32 %v1661, %v1754
        %v1763 = vld [vmem:[#allocation4 + $0x4b0] sm:$0xff]
        %v1764 = vld [vmem:[#allocation4 + $0x4c0] sm:$0x3]
        %v1765 = vpack.c.bf16 %v1764, %v1763
        %v1766 = vpack.c.bf16 %v1760, %v1759
        %v1767 = vpack.c.bf16 %v1762, %v1761
        %v1768 = vld [vmem:[#allocation4 + $0x4d0] ss:$0 sm:$0xff]
        %v1770 = vsel %vm856, %v1766, 0
        %v1773 = vsel %vm856, %v1767, 0
        %v1776 = vsel %vm860, %v1765, 0
        %1778 = vmatpush.bf16.msra.mxu0 0
        %1779 = vmatpush.bf16.msra.mxu0 0
        %1780 = vmatpush.bf16.msra.mxu0 0
        %1781 = vmatpush.bf16.msra.mxu0 0
        %1782 = vmatpush.bf16.msra.mxu0 0
        %1783 = vmatpush.bf16.msra.mxu0 0
        %1784 = vmatpush.bf16.msra.mxu0 0
        %1785 = vmatpush.bf16.msra.mxu0 %v1776
        %1786 = vmatmul.bf16.gmra.mxu0 %v1770
        %v1787 = vpop.f32.mrf.mxu0
        %v1788 = vadd.f32 %v1768, %v1787
        %v1789 = vpop.f32.mrf.mxu0
        %v1790 = vadd.f32 %v1768, %v1789
        %1791 = vmatmul.bf16.gmra.mxu0 %v1773
        %v1792 = vpop.f32.mrf.mxu0
        %v1793 = vadd.f32 %v1768, %v1792
        %v1794 = vpop.f32.mrf.mxu0
        %v1795 = vadd.f32 %v1768, %v1794
        %1796 = vdwg.mxu0
        %v1797 = vadd.f32 %v1788, %v1594
        %v1798 = vadd.f32 %v1790, %v1595
        %v1799 = vadd.f32 %v1793, %v1596
        %v1800 = vadd.f32 %v1795, %v1597
        %v1801 = vmul.f32 %v1797, 0.9995004
        %v1802 = vmul.f32 %v1798, 0.9995004
        %v1803 = vmul.f32 %v1799, 0.9995004
        %v1804 = vmul.f32 %v1800, 0.9995004
        %v1805 = vmax.f32 %v1801, 0.0
        %v1806 = vmax.f32 %v1802, 0.0
        %v1807 = vmax.f32 %v1803, 0.0
        %v1808 = vmax.f32 %v1804, 0.0
        %v1809 = vld [vmem:[#allocation4 + $0x4f0] sm:$0xff]
        %v1810 = vld [vmem:[#allocation4 + $0x500] sm:$0xff]
        %v1811 = vld [vmem:[#allocation4 + $0x510] sm:$0xff]
        %v1812 = vld [vmem:[#allocation4 + $0x520] sm:$0xff]
        %v1813 = vld [vmem:[#allocation4 + $0x530] sm:$0xff]
        %v1814 = vld [vmem:[#allocation4 + $0x540] sm:$0xff]
        %v1815 = vld [vmem:[#allocation4 + $0x550] sm:$0xff]
        %v1816 = vld [vmem:[#allocation4 + $0x560] sm:$0xff]
        %v1817 = vld [vmem:[#allocation4 + $0x570] sm:$0xff]
        %v1818 = vld [vmem:[#allocation4 + $0x580] sm:$0xff]
        %v1819 = vld [vmem:[#allocation4 + $0x590] sm:$0xff]
        %v1820 = vld [vmem:[#allocation4 + $0x5a0] sm:$0xff]
        %v1821 = vld [vmem:[#allocation4 + $0x5b0] sm:$0xff]
        %v1822 = vld [vmem:[#allocation4 + $0x5c0] sm:$0xff]
        %v1823 = vld [vmem:[#allocation4 + $0x5d0] sm:$0xff]
        %v1824 = vld [vmem:[#allocation4 + $0x5e0] sm:$0xff]
        %v1825 = vpack.c.bf16 %v1810, %v1809
        %v1826 = vpack.c.bf16 %v1812, %v1811
        %v1827 = vpack.c.bf16 %v1814, %v1813
        %v1828 = vpack.c.bf16 %v1816, %v1815
        %v1829 = vpack.c.bf16 %v1818, %v1817
        %v1830 = vpack.c.bf16 %v1820, %v1819
        %v1831 = vpack.c.bf16 %v1822, %v1821
        %v1832 = vpack.c.bf16 %v1824, %v1823
        %v1833 = vpack.c.bf16 %v1806, %v1805
        %v1834 = vpack.c.bf16 %v1808, %v1807
        %v1835 = vld [vmem:[#allocation4 + $0x5f0] ss:$0 sm:$0xff]
        %1836 = vmatpush.bf16.msra.mxu0 %v1832
        %1837 = vmatpush.bf16.msra.mxu0 %v1831
        %1838 = vmatpush.bf16.msra.mxu0 %v1830
        %1839 = vmatpush.bf16.msra.mxu0 %v1829
        %1840 = vmatpush.bf16.msra.mxu0 %v1828
        %1841 = vmatpush.bf16.msra.mxu0 %v1827
        %1842 = vmatpush.bf16.msra.mxu0 %v1826
        %1843 = vmatpush.bf16.msra.mxu0 %v1825
        %1844 = vmatmul.bf16.gmra.mxu0 %v1833
        %v1845 = vpop.f32.mrf.mxu0
        %v1846 = vadd.f32 %v1835, %v1845
        %v1847 = vpop.f32.mrf.mxu0
        %v1848 = vadd.f32 %v1835, %v1847
        %1849 = vmatmul.bf16.gmra.mxu0 %v1834
        %v1850 = vpop.f32.mrf.mxu0
        %v1851 = vadd.f32 %v1835, %v1850
        %v1852 = vpop.f32.mrf.mxu0
        %v1853 = vadd.f32 %v1835, %v1852
        %1854 = vdwg.mxu0
        %v1855 = vmul.f32 %v1846, 1.442695
        %v1856 = vpow.pop %v1855
        %v1857 = vmul.f32 %v1848, 1.442695
        %v1858 = vpow.pop %v1857
        %v1859 = vmul.f32 %v1851, 1.442695
        %v1860 = vpow.pop %v1859
        %v1861 = vmul.f32 %v1853, 1.442695
        %v1862 = vpow.pop %v1861
        %v1863 = vlog2.pop %v1856
        %v1864 = vmul.f32 %v1863, 0.6931472
        %v1865 = vlog2.pop %v1858
        %v1866 = vmul.f32 %v1865, 0.6931472
        %v1867 = vlog2.pop %v1860
        %v1868 = vmul.f32 %v1867, 0.6931472
        %v1869 = vlog2.pop %v1862
        %v1870 = vmul.f32 %v1869, 0.6931472
        %v1871 = vadd.f32 %v1864, 1.837877
        %v1872 = vadd.f32 %v1866, 1.837877
        %v1873 = vadd.f32 %v1868, 1.837877
        %v1874 = vadd.f32 %v1870, 1.837877
        %v1875 = vmul.f32 %v1871, -0.5
        %v1876 = vmul.f32 %v1872, -0.5
        %v1877 = vmul.f32 %v1873, -0.5
        %v1878 = vmul.f32 %v1874, -0.5
        %v1879 = vsub.f32 %v832, %v1846
        %v1880 = vsub.f32 %v832, %v1848
        %v1881 = vsub.f32 %v832, %v1851
        %v1882 = vsub.f32 %v832, %v1853
        %v1883 = vmul.f32 %v1879, %v1879
        %v1884 = vmul.f32 %v1880, %v1880
        %v1885 = vmul.f32 %v1881, %v1881
        %v1886 = vmul.f32 %v1882, %v1882
        %v1887 = vmul.f32 %v1856, 2.0
        %v1888 = vmul.f32 %v1858, 2.0
        %v1889 = vmul.f32 %v1860, 2.0
        %v1890 = vmul.f32 %v1862, 2.0
        %1895 = vrot.lane.b32.xlu0 %v1887, 118
        %v1896 = vpop.permute.xlu0 %1895
        %1897 = vrot.lane.b32.xlu0 %v1888, 118
        %v1898 = vpop.permute.xlu0 %1897
        %1899 = vrot.lane.b32.xlu0 %v1889, 118
        %v1900 = vpop.permute.xlu0 %1899
        %1901 = vrot.lane.b32.xlu0 %v1890, 118
        %v1902 = vpop.permute.xlu0 %1901
        %v1907 = vrcp.pop %v1896
        %v1908 = vmul.f32 %v1896, %v1907
        %v1909 = vsub.f32 1.0, %v1908
        %v1910 = vmul.f32 %v1907, %v1909
        %v1911 = vadd.f32 %v1907, %v1910
        %vm1912 = vweird.f32 %v1896
        %vm1913 = vweird.f32 %v1907
        %vm1914 = vmor %vm1912, %vm1913
        %v1915 = vsel %vm1914, %v1907, %v1911
        %v1916 = vand.u32 2147483647, %v1896
        %vm1917 = vcmp.eq.f32.partialorder %v1916, 8.507059e+37
        %v1918 = vand.u32 %v1896, 2147483648
        %v1919 = vor.u32 1.1754944e-38, %v1918
        %v1920 = vsel %vm1917, %v1919, %v1915
        %v1921 = vmul.f32 %v1883, %v1920
        %v1922 = vrcp.pop %v1898
        %v1923 = vmul.f32 %v1898, %v1922
        %v1924 = vsub.f32 1.0, %v1923
        %v1925 = vmul.f32 %v1922, %v1924
        %v1926 = vadd.f32 %v1922, %v1925
        %vm1927 = vweird.f32 %v1898
        %vm1928 = vweird.f32 %v1922
        %vm1929 = vmor %vm1927, %vm1928
        %v1930 = vsel %vm1929, %v1922, %v1926
        %v1931 = vand.u32 2147483647, %v1898
        %vm1932 = vcmp.eq.f32.partialorder %v1931, 8.507059e+37
        %v1933 = vand.u32 %v1898, 2147483648
        %v1934 = vor.u32 1.1754944e-38, %v1933
        %v1935 = vsel %vm1932, %v1934, %v1930
        %v1936 = vmul.f32 %v1884, %v1935
        %v1937 = vrcp.pop %v1900
        %v1938 = vmul.f32 %v1900, %v1937
        %v1939 = vsub.f32 1.0, %v1938
        %v1940 = vmul.f32 %v1937, %v1939
        %v1941 = vadd.f32 %v1937, %v1940
        %vm1942 = vweird.f32 %v1900
        %vm1943 = vweird.f32 %v1937
        %vm1944 = vmor %vm1942, %vm1943
        %v1945 = vsel %vm1944, %v1937, %v1941
        %v1946 = vand.u32 2147483647, %v1900
        %vm1947 = vcmp.eq.f32.partialorder %v1946, 8.507059e+37
        %v1948 = vand.u32 %v1900, 2147483648
        %v1949 = vor.u32 1.1754944e-38, %v1948
        %v1950 = vsel %vm1947, %v1949, %v1945
        %v1951 = vmul.f32 %v1885, %v1950
        %v1952 = vrcp.pop %v1902
        %v1953 = vmul.f32 %v1902, %v1952
        %v1954 = vsub.f32 1.0, %v1953
        %v1955 = vmul.f32 %v1952, %v1954
        %v1956 = vadd.f32 %v1952, %v1955
        %vm1957 = vweird.f32 %v1902
        %vm1958 = vweird.f32 %v1952
        %vm1959 = vmor %vm1957, %vm1958
        %v1960 = vsel %vm1959, %v1952, %v1956
        %v1961 = vand.u32 2147483647, %v1902
        %vm1962 = vcmp.eq.f32.partialorder %v1961, 8.507059e+37
        %v1963 = vand.u32 %v1902, 2147483648
        %v1964 = vor.u32 1.1754944e-38, %v1963
        %v1965 = vsel %vm1962, %v1964, %v1960
        %v1966 = vmul.f32 %v1886, %v1965
        %1971 = vrot.lane.b32.xlu0 %v1921, 10
        %v1972 = vpop.permute.xlu0 %1971
        %1973 = vrot.lane.b32.xlu0 %v1936, 10
        %v1974 = vpop.permute.xlu0 %1973
        %1975 = vrot.lane.b32.xlu0 %v1951, 10
        %v1976 = vpop.permute.xlu0 %1975
        %1977 = vrot.lane.b32.xlu0 %v1966, 10
        %v1978 = vpop.permute.xlu0 %1977
        %v1983 = vsub.f32 %v1875, %v1972
        %v1984 = vsub.f32 %v1876, %v1974
        %v1985 = vsub.f32 %v1877, %v1976
        %v1986 = vsub.f32 %v1878, %v1978
        %1991 = vrot.lane.b32.xlu0 %v1983, 118
        %v1992 = vpop.permute.xlu0 %1991
        %1993 = vrot.lane.b32.xlu0 %v1984, 118
        %v1994 = vpop.permute.xlu0 %1993
        %1995 = vrot.lane.b32.xlu0 %v1985, 118
        %v1996 = vpop.permute.xlu0 %1995
        %1997 = vrot.lane.b32.xlu0 %v1986, 118
        %v1998 = vpop.permute.xlu0 %1997
        %v2003 = vsel %vm856, %v1992, 0.0
        %2004 = vadd.xlane.f32.xlu0 %v2003
        %v2005 = vpop.xlane.xlu0 %2004
        %v2006 = vsel %vm856, %v1994, 0.0
        %2007 = vadd.xlane.f32.xlu0 %v2006
        %v2008 = vpop.xlane.xlu0 %2007
        %v2009 = vsel %vm856, %v1996, 0.0
        %2010 = vadd.xlane.f32.xlu0 %v2009
        %v2011 = vpop.xlane.xlu0 %2010
        %v2012 = vsel %vm856, %v1998, 0.0
        %2013 = vadd.xlane.f32.xlu0 %v2012
        %v2014 = vpop.xlane.xlu0 %2013
        %v2015 = vsub.f32 0.0, %v2005
        %v2016 = vsub.f32 0.0, %v2008
        %v2017 = vsub.f32 0.0, %v2011
        %v2018 = vsub.f32 0.0, %v2014
        %v2019 = vmul.f32 %v960, %v2015
        %v2020 = vadd.f32 %v2019, 0.0
        %v2021 = vmul.f32 %v960, %v2016
        %2023 = vrot.lane.b32.xlu0 %v2021, 127
        %v2024 = vpop.permute.xlu0 %2023
        %v2026 = vadd.f32 %v2020, %v2024
        %v2027 = vmul.f32 %v960, %v2017
        %2029 = vrot.lane.b32.xlu0 %v2027, 126
        %v2030 = vpop.permute.xlu0 %2029
        %v2032 = vadd.f32 %v2026, %v2030
        %v2033 = vmul.f32 %v960, %v2018
        %2035 = vrot.lane.b32.xlu0 %v2033, 125
        %v2036 = vpop.permute.xlu0 %2035
        %v2038 = vadd.f32 %v2032, %v2036
        %v2039 = vlog2.pop %v810
        %v2040 = vmul.f32 %v2039, 0.6931472
        %v2041 = vadd.f32 %v2040, 1.837877
        %v2042 = vmul.f32 %v2041, -0.5
        %v2043 = vsub.f32 %v832, %v805
        %v2044 = vmul.f32 %v2043, %v2043
        %v2045 = vmul.f32 %v810, 2.0
        %2047 = vrot.lane.b32.xlu0 %v2045, 118
        %v2048 = vpop.permute.xlu0 %2047
        %v2050 = vrcp.pop %v2048
        %v2051 = vmul.f32 %v2048, %v2050
        %v2052 = vsub.f32 1.0, %v2051
        %v2053 = vmul.f32 %v2050, %v2052
        %v2054 = vadd.f32 %v2050, %v2053
        %vm2055 = vweird.f32 %v2048
        %vm2056 = vweird.f32 %v2050
        %vm2057 = vmor %vm2055, %vm2056
        %v2058 = vsel %vm2057, %v2050, %v2054
        %v2059 = vand.u32 2147483647, %v2048
        %vm2060 = vcmp.eq.f32.partialorder %v2059, 8.507059e+37
        %v2061 = vand.u32 %v2048, 2147483648
        %v2062 = vor.u32 1.1754944e-38, %v2061
        %v2063 = vsel %vm2060, %v2062, %v2058
        %v2064 = vmul.f32 %v2044, %v2063
        %2066 = vrot.lane.b32.xlu0 %v2064, 10
        %v2067 = vpop.permute.xlu0 %2066
        %v2069 = vsub.f32 %v2042, %v2067
        %2071 = vrot.lane.b32.xlu0 %v2069, 118
        %v2072 = vpop.permute.xlu0 %2071
        %v2074 = vsel %vm856, %v2072, 0.0
        %2075 = vadd.xlane.f32.xlu0 %v2074
        %v2076 = vpop.xlane.xlu0 %2075
        %v2077 = vadd.f32 %v1567, %v2076
        %v2078 = vadd.f32 %v2077, %v2038
        %v2079 = vlaneseq
        %v2080 = vand.u32 %v2079, 127
        %vm2081 = vcmp.eq.s32.totalorder %v2080, 0
        %2083 = vset.pattern.permute.xlu0 0
        %2084 = vperm.xlu0 %2083, %v2078
        %v2085 = vpop.permute.xlu0 %2084
        %v2087 = vsel %vm2081, %v2085, 0.0
        %2088 = vst [vmem:[%s455] sm:$0xff] %v2087
        %s2089 = smul.u32 %s25, 8
        %s2090 = scalar_lea.vmem [#allocation2], %s2089
        %2091 = vst.msk [vmem:[%s2090] sm:$0xff] %vm856, %v832
        %p2092 = scmp.eq.s32.totalorder %s25, 1
        // Predicated region
        $region107: #{tpu_custom_call.1} parent=89 // pred_check
          %p2093 = pneg %p2092
        $region108: #{tpu_custom_call.1} parent=89 // pred_check_branch
          %2095 = sbr.rel (%p2093) target = $region110
        $region109: #{tpu_custom_call.1} parent=89 // pred_region
          %v2096 = vld [vmem:[#allocation2] sm:$0xff]
          %v2097 = vld [vmem:[#allocation2 + $0x8] sm:$0xff]
          %v2098 = vld [vmem:[%s3] sm:$0xff]
          %v2099 = vld [vmem:[%s3 + $0x8] sm:$0xff]
          %v2100 = vmul.f32 %v2096, %v2096
          %v2101 = vmul.f32 %v2097, %v2097
          %v2102 = vmul.f32 %v2098, %v2098
          %v2103 = vmul.f32 %v2099, %v2099
          %v2104 = vsel %vm856, %v2100, 0.0
          %2105 = vadd.xlane.f32.xlu0 %v2104
          %v2106 = vpop.xlane.xlu0 %2105
          %v2107 = vsel %vm856, %v2101, 0.0
          %2108 = vadd.xlane.f32.xlu0 %v2107
          %v2109 = vpop.xlane.xlu0 %2108
          %v2110 = vsel %vm856, %v2102, 0.0
          %2111 = vadd.xlane.f32.xlu0 %v2110
          %v2112 = vpop.xlane.xlu0 %2111
          %v2113 = vsel %vm856, %v2103, 0.0
          %2114 = vadd.xlane.f32.xlu0 %v2113
          %v2115 = vpop.xlane.xlu0 %2114
          %v2117 = vsel %vm856, 1.0, 0
          %v2120 = vsel %vm856, %v2100, 0
          %v2123 = vsel %vm856, %v2101, 0
          %2125 = vmatpush.xpose.msra.mxu0 0.0
          %2126 = vmatpush.xpose.msra.mxu0 0.0
          %2127 = vmatpush.xpose.msra.mxu0 0.0
          %2128 = vmatpush.xpose.msra.mxu0 0.0
          %2129 = vmatpush.xpose.msra.mxu0 0.0
          %2130 = vmatpush.xpose.msra.mxu0 0.0
          %2131 = vmatpush.xpose.msra.mxu0 0.0
          %2132 = vmatpush.xpose.msra.mxu0 0.0
          %2133 = vmatpush.xpose.msra.mxu0 0.0
          %2134 = vmatpush.xpose.msra.mxu0 0.0
          %2135 = vmatpush.xpose.msra.mxu0 0.0
          %2136 = vmatpush.xpose.msra.mxu0 0.0
          %2137 = vmatpush.xpose.msra.mxu0 0.0
          %2138 = vmatpush.xpose.msra.mxu0 0.0
          %2139 = vmatpush.xpose.msra.mxu0 %v2123
          %2140 = vmatpush.xpose.msra.mxu0 %v2120
          %2141 = vmatmul.f32.gmra.mxu0 %v2117
          %v2142 = vpop.f32.mrf.mxu0
          %v2143 = vadd.f32 0.0, %v2142
          %2144 = vmatmul.f32.gmra.mxu0 %v2117
          %v2145 = vpop.f32.mrf.mxu0
          %v2146 = vadd.f32 0.0, %v2145
          %2147 = vdwg.mxu0
          %v2149 = vsel %vm856, %v2102, 0
          %v2152 = vsel %vm856, %v2103, 0
          %2154 = vmatpush.xpose.msra.mxu0 0.0
          %2155 = vmatpush.xpose.msra.mxu0 0.0
          %2156 = vmatpush.xpose.msra.mxu0 0.0
          %2157 = vmatpush.xpose.msra.mxu0 0.0
          %2158 = vmatpush.xpose.msra.mxu0 0.0
          %2159 = vmatpush.xpose.msra.mxu0 0.0
          %2160 = vmatpush.xpose.msra.mxu0 0.0
          %2161 = vmatpush.xpose.msra.mxu0 0.0
          %2162 = vmatpush.xpose.msra.mxu0 0.0
          %2163 = vmatpush.xpose.msra.mxu0 0.0
          %2164 = vmatpush.xpose.msra.mxu0 0.0
          %2165 = vmatpush.xpose.msra.mxu0 0.0
          %2166 = vmatpush.xpose.msra.mxu0 0.0
          %2167 = vmatpush.xpose.msra.mxu0 0.0
          %2168 = vmatpush.xpose.msra.mxu0 %v2152
          %2169 = vmatpush.xpose.msra.mxu0 %v2149
          %2170 = vmatmul.f32.gmra.mxu0 %v2117
          %v2171 = vpop.f32.mrf.mxu0
          %v2172 = vadd.f32 0.0, %v2171
          %2173 = vmatmul.f32.gmra.mxu0 %v2117
          %v2174 = vpop.f32.mrf.mxu0
          %v2175 = vadd.f32 0.0, %v2174
          %2176 = vdwg.mxu0
          %v2177 = vsel %vm856, %v2096, 0.0
          %2178 = vadd.xlane.f32.xlu0 %v2177
          %v2179 = vpop.xlane.xlu0 %2178
          %v2180 = vsel %vm856, %v2097, 0.0
          %2181 = vadd.xlane.f32.xlu0 %v2180
          %v2182 = vpop.xlane.xlu0 %2181
          %v2183 = vmul.f32 %v2179, %v2179
          %v2184 = vmul.f32 %v2182, %v2182
          %v2185 = vadd.f32 %v2183, 0.0
          %v2186 = vadd.f32 %v2184, 0.0
          %v2187 = vadd.f32 %v2185, %v2186
          %v2188 = vrot.slane %v2187, 4
          %v2189 = vadd.f32 %v2187, %v2188
          %v2190 = vrot.slane %v2189, 2
          %v2191 = vadd.f32 %v2189, %v2190
          %v2192 = vrot.slane %v2191, 1
          %v2193 = vadd.f32 %v2191, %v2192
          %v2194 = vadd.f32 %v2106, %v2143
          %v2195 = vadd.f32 %v2109, %v2146
          %v2196 = vmul.f32 %v2193, 2.0
          %v2197 = vsub.f32 %v2194, %v2196
          %v2198 = vsub.f32 %v2195, %v2196
          %v2199 = vadd.f32 %v2112, %v2172
          %v2200 = vadd.f32 %v2115, %v2175
          %v2201 = vsub.f32 %v2199, %v2196
          %v2202 = vsub.f32 %v2200, %v2196
          %v2203 = vadd.f32 %v2112, %v2143
          %v2204 = vadd.f32 %v2115, %v2146
          %v2205 = vsub.f32 %v2203, %v2196
          %v2206 = vsub.f32 %v2204, %v2196
          %v2207 = vlaneseq
          %v2208 = vshrl.u32 %v2207, 7
          %v2209 = vadd.s32 %v2208, 8
          %vm2210 = vcmp.ne.s32.totalorder %v2208, %v2080
          %vm2211 = vcmp.ne.s32.totalorder %v2209, %v2080
          %v2212 = vsel %vm2210, 1, 0
          %v2213 = vsel %vm2211, 1, 0
          %v2214 = vcvt.s32.f32 %v2212
          %v2215 = vcvt.s32.f32 %v2213
          %v2216 = vadd.f32 %v2197, 2.0
          %v2217 = vadd.f32 %v2198, 2.0
          %v2218 = vrcp.pop %v2216
          %v2219 = vmul.f32 %v2216, %v2218
          %v2220 = vsub.f32 1.0, %v2219
          %v2221 = vmul.f32 %v2218, %v2220
          %v2222 = vadd.f32 %v2218, %v2221
          %vm2223 = vweird.f32 %v2216
          %vm2224 = vweird.f32 %v2218
          %vm2225 = vmor %vm2223, %vm2224
          %v2226 = vsel %vm2225, %v2218, %v2222
          %v2227 = vand.u32 2147483647, %v2216
          %vm2228 = vcmp.eq.f32.partialorder %v2227, 8.507059e+37
          %v2229 = vand.u32 %v2216, 2147483648
          %v2230 = vor.u32 1.1754944e-38, %v2229
          %v2231 = vsel %vm2228, %v2230, %v2226
          %v2232 = vmul.f32 2.0, %v2231
          %v2233 = vrcp.pop %v2217
          %v2234 = vmul.f32 %v2217, %v2233
          %v2235 = vsub.f32 1.0, %v2234
          %v2236 = vmul.f32 %v2233, %v2235
          %v2237 = vadd.f32 %v2233, %v2236
          %vm2238 = vweird.f32 %v2217
          %vm2239 = vweird.f32 %v2233
          %vm2240 = vmor %vm2238, %vm2239
          %v2241 = vsel %vm2240, %v2233, %v2237
          %v2242 = vand.u32 2147483647, %v2217
          %vm2243 = vcmp.eq.f32.partialorder %v2242, 8.507059e+37
          %v2244 = vand.u32 %v2217, 2147483648
          %v2245 = vor.u32 1.1754944e-38, %v2244
          %v2246 = vsel %vm2243, %v2245, %v2241
          %v2247 = vmul.f32 2.0, %v2246
          %v2248 = vadd.f32 %v2201, 2.0
          %v2249 = vadd.f32 %v2202, 2.0
          %v2250 = vrcp.pop %v2248
          %v2251 = vmul.f32 %v2248, %v2250
          %v2252 = vsub.f32 1.0, %v2251
          %v2253 = vmul.f32 %v2250, %v2252
          %v2254 = vadd.f32 %v2250, %v2253
          %vm2255 = vweird.f32 %v2248
          %vm2256 = vweird.f32 %v2250
          %vm2257 = vmor %vm2255, %vm2256
          %v2258 = vsel %vm2257, %v2250, %v2254
          %v2259 = vand.u32 2147483647, %v2248
          %vm2260 = vcmp.eq.f32.partialorder %v2259, 8.507059e+37
          %v2261 = vand.u32 %v2248, 2147483648
          %v2262 = vor.u32 1.1754944e-38, %v2261
          %v2263 = vsel %vm2260, %v2262, %v2258
          %v2264 = vmul.f32 2.0, %v2263
          %v2265 = vrcp.pop %v2249
          %v2266 = vmul.f32 %v2249, %v2265
          %v2267 = vsub.f32 1.0, %v2266
          %v2268 = vmul.f32 %v2265, %v2267
          %v2269 = vadd.f32 %v2265, %v2268
          %vm2270 = vweird.f32 %v2249
          %vm2271 = vweird.f32 %v2265
          %vm2272 = vmor %vm2270, %vm2271
          %v2273 = vsel %vm2272, %v2265, %v2269
          %v2274 = vand.u32 2147483647, %v2249
          %vm2275 = vcmp.eq.f32.partialorder %v2274, 8.507059e+37
          %v2276 = vand.u32 %v2249, 2147483648
          %v2277 = vor.u32 1.1754944e-38, %v2276
          %v2278 = vsel %vm2275, %v2277, %v2273
          %v2279 = vmul.f32 2.0, %v2278
          %v2280 = vadd.f32 %v2232, %v2264
          %v2281 = vadd.f32 %v2247, %v2279
          %v2282 = vmul.f32 %v2214, %v2280
          %v2283 = vmul.f32 %v2215, %v2281
          %v2284 = vadd.f32 %v2205, 2.0
          %v2285 = vadd.f32 %v2206, 2.0
          %v2286 = vrcp.pop %v2284
          %v2287 = vmul.f32 %v2284, %v2286
          %v2288 = vsub.f32 1.0, %v2287
          %v2289 = vmul.f32 %v2286, %v2288
          %v2290 = vadd.f32 %v2286, %v2289
          %vm2291 = vweird.f32 %v2284
          %vm2292 = vweird.f32 %v2286
          %vm2293 = vmor %vm2291, %vm2292
          %v2294 = vsel %vm2293, %v2286, %v2290
          %v2295 = vand.u32 2147483647, %v2284
          %vm2296 = vcmp.eq.f32.partialorder %v2295, 8.507059e+37
          %v2297 = vand.u32 %v2284, 2147483648
          %v2298 = vor.u32 1.1754944e-38, %v2297
          %v2299 = vsel %vm2296, %v2298, %v2294
          %v2300 = vmul.f32 2.0, %v2299
          %v2301 = vrcp.pop %v2285
          %v2302 = vmul.f32 %v2285, %v2301
          %v2303 = vsub.f32 1.0, %v2302
          %v2304 = vmul.f32 %v2301, %v2303
          %v2305 = vadd.f32 %v2301, %v2304
          %vm2306 = vweird.f32 %v2285
          %vm2307 = vweird.f32 %v2301
          %vm2308 = vmor %vm2306, %vm2307
          %v2309 = vsel %vm2308, %v2301, %v2305
          %v2310 = vand.u32 2147483647, %v2285
          %vm2311 = vcmp.eq.f32.partialorder %v2310, 8.507059e+37
          %v2312 = vand.u32 %v2285, 2147483648
          %v2313 = vor.u32 1.1754944e-38, %v2312
          %v2314 = vsel %vm2311, %v2313, %v2309
          %v2315 = vmul.f32 2.0, %v2314
          %vm2316 = vcmask 130048
          %v2317 = vsel %vm2316, %v2282, 0.0
          %2318 = vadd.xlane.f32.xlu0 %v2317
          %v2319 = vpop.xlane.xlu0 %2318
          %v2320 = vsel %vm2316, %v2283, 0.0
          %2321 = vadd.xlane.f32.xlu0 %v2320
          %v2322 = vpop.xlane.xlu0 %2321
          %v2323 = vadd.f32 %v2319, %v2322
          %v2324 = vrot.slane %v2323, 4
          %v2325 = vadd.f32 %v2323, %v2324
          %v2326 = vrot.slane %v2325, 2
          %v2327 = vadd.f32 %v2325, %v2326
          %v2328 = vrot.slane %v2327, 1
          %v2329 = vadd.f32 %v2327, %v2328
          %v2330 = vmul.f32 %v2329, 0.06666667
          %v2331 = vadd.f32 %v2330, 0.0
          %v2332 = vsel %vm2316, %v2300, 0.0
          %2333 = vadd.xlane.f32.xlu0 %v2332
          %v2334 = vpop.xlane.xlu0 %2333
          %v2335 = vsel %vm2316, %v2315, 0.0
          %2336 = vadd.xlane.f32.xlu0 %v2335
          %v2337 = vpop.xlane.xlu0 %2336
          %v2338 = vadd.f32 %v2334, %v2337
          %v2339 = vrot.slane %v2338, 4
          %v2340 = vadd.f32 %v2338, %v2339
          %v2341 = vrot.slane %v2340, 2
          %v2342 = vadd.f32 %v2340, %v2341
          %v2343 = vrot.slane %v2342, 1
          %v2344 = vadd.f32 %v2342, %v2343
          %v2345 = vmul.f32 %v2344, 0.125
          %v2346 = vsub.f32 %v2331, %v2345
          %v2347 = vadd.f32 %v2197, 4.0
          %v2348 = vadd.f32 %v2198, 4.0
          %v2349 = vrcp.pop %v2347
          %v2350 = vmul.f32 %v2347, %v2349
          %v2351 = vsub.f32 1.0, %v2350
          %v2352 = vmul.f32 %v2349, %v2351
          %v2353 = vadd.f32 %v2349, %v2352
          %vm2354 = vweird.f32 %v2347
          %vm2355 = vweird.f32 %v2349
          %vm2356 = vmor %vm2354, %vm2355
          %v2357 = vsel %vm2356, %v2349, %v2353
          %v2358 = vand.u32 2147483647, %v2347
          %vm2359 = vcmp.eq.f32.partialorder %v2358, 8.507059e+37
          %v2360 = vand.u32 %v2347, 2147483648
          %v2361 = vor.u32 1.1754944e-38, %v2360
          %v2362 = vsel %vm2359, %v2361, %v2357
          %v2363 = vmul.f32 4.0, %v2362
          %v2364 = vrcp.pop %v2348
          %v2365 = vmul.f32 %v2348, %v2364
          %v2366 = vsub.f32 1.0, %v2365
          %v2367 = vmul.f32 %v2364, %v2366
          %v2368 = vadd.f32 %v2364, %v2367
          %vm2369 = vweird.f32 %v2348
          %vm2370 = vweird.f32 %v2364
          %vm2371 = vmor %vm2369, %vm2370
          %v2372 = vsel %vm2371, %v2364, %v2368
          %v2373 = vand.u32 2147483647, %v2348
          %vm2374 = vcmp.eq.f32.partialorder %v2373, 8.507059e+37
          %v2375 = vand.u32 %v2348, 2147483648
          %v2376 = vor.u32 1.1754944e-38, %v2375
          %v2377 = vsel %vm2374, %v2376, %v2372
          %v2378 = vmul.f32 4.0, %v2377
          %v2379 = vadd.f32 %v2201, 4.0
          %v2380 = vadd.f32 %v2202, 4.0
          %v2381 = vrcp.pop %v2379
          %v2382 = vmul.f32 %v2379, %v2381
          %v2383 = vsub.f32 1.0, %v2382
          %v2384 = vmul.f32 %v2381, %v2383
          %v2385 = vadd.f32 %v2381, %v2384
          %vm2386 = vweird.f32 %v2379
          %vm2387 = vweird.f32 %v2381
          %vm2388 = vmor %vm2386, %vm2387
          %v2389 = vsel %vm2388, %v2381, %v2385
          %v2390 = vand.u32 2147483647, %v2379
          %vm2391 = vcmp.eq.f32.partialorder %v2390, 8.507059e+37
          %v2392 = vand.u32 %v2379, 2147483648
          %v2393 = vor.u32 1.1754944e-38, %v2392
          %v2394 = vsel %vm2391, %v2393, %v2389
          %v2395 = vmul.f32 4.0, %v2394
          %v2396 = vrcp.pop %v2380
          %v2397 = vmul.f32 %v2380, %v2396
          %v2398 = vsub.f32 1.0, %v2397
          %v2399 = vmul.f32 %v2396, %v2398
          %v2400 = vadd.f32 %v2396, %v2399
          %vm2401 = vweird.f32 %v2380
          %vm2402 = vweird.f32 %v2396
          %vm2403 = vmor %vm2401, %vm2402
          %v2404 = vsel %vm2403, %v2396, %v2400
          %v2405 = vand.u32 2147483647, %v2380
          %vm2406 = vcmp.eq.f32.partialorder %v2405, 8.507059e+37
          %v2407 = vand.u32 %v2380, 2147483648
          %v2408 = vor.u32 1.1754944e-38, %v2407
          %v2409 = vsel %vm2406, %v2408, %v2404
          %v2410 = vmul.f32 4.0, %v2409
          %v2411 = vadd.f32 %v2363, %v2395
          %v2412 = vadd.f32 %v2378, %v2410
          %v2413 = vmul.f32 %v2214, %v2411
          %v2414 = vmul.f32 %v2215, %v2412
          %v2415 = vadd.f32 %v2205, 4.0
          %v2416 = vadd.f32 %v2206, 4.0
          %v2417 = vrcp.pop %v2415
          %v2418 = vmul.f32 %v2415, %v2417
          %v2419 = vsub.f32 1.0, %v2418
          %v2420 = vmul.f32 %v2417, %v2419
          %v2421 = vadd.f32 %v2417, %v2420
          %vm2422 = vweird.f32 %v2415
          %vm2423 = vweird.f32 %v2417
          %vm2424 = vmor %vm2422, %vm2423
          %v2425 = vsel %vm2424, %v2417, %v2421
          %v2426 = vand.u32 2147483647, %v2415
          %vm2427 = vcmp.eq.f32.partialorder %v2426, 8.507059e+37
          %v2428 = vand.u32 %v2415, 2147483648
          %v2429 = vor.u32 1.1754944e-38, %v2428
          %v2430 = vsel %vm2427, %v2429, %v2425
          %v2431 = vmul.f32 4.0, %v2430
          %v2432 = vrcp.pop %v2416
          %v2433 = vmul.f32 %v2416, %v2432
          %v2434 = vsub.f32 1.0, %v2433
          %v2435 = vmul.f32 %v2432, %v2434
          %v2436 = vadd.f32 %v2432, %v2435
          %vm2437 = vweird.f32 %v2416
          %vm2438 = vweird.f32 %v2432
          %vm2439 = vmor %vm2437, %vm2438
          %v2440 = vsel %vm2439, %v2432, %v2436
          %v2441 = vand.u32 2147483647, %v2416
          %vm2442 = vcmp.eq.f32.partialorder %v2441, 8.507059e+37
          %v2443 = vand.u32 %v2416, 2147483648
          %v2444 = vor.u32 1.1754944e-38, %v2443
          %v2445 = vsel %vm2442, %v2444, %v2440
          %v2446 = vmul.f32 4.0, %v2445
          %v2447 = vsel %vm2316, %v2413, 0.0
          %2448 = vadd.xlane.f32.xlu0 %v2447
          %v2449 = vpop.xlane.xlu0 %2448
          %v2450 = vsel %vm2316, %v2414, 0.0
          %2451 = vadd.xlane.f32.xlu0 %v2450
          %v2452 = vpop.xlane.xlu0 %2451
          %v2453 = vadd.f32 %v2449, %v2452
          %v2454 = vrot.slane %v2453, 4
          %v2455 = vadd.f32 %v2453, %v2454
          %v2456 = vrot.slane %v2455, 2
          %v2457 = vadd.f32 %v2455, %v2456
          %v2458 = vrot.slane %v2457, 1
          %v2459 = vadd.f32 %v2457, %v2458
          %v2460 = vmul.f32 %v2459, 0.06666667
          %v2461 = vadd.f32 %v2346, %v2460
          %v2462 = vsel %vm2316, %v2431, 0.0
          %2463 = vadd.xlane.f32.xlu0 %v2462
          %v2464 = vpop.xlane.xlu0 %2463
          %v2465 = vsel %vm2316, %v2446, 0.0
          %2466 = vadd.xlane.f32.xlu0 %v2465
          %v2467 = vpop.xlane.xlu0 %2466
          %v2468 = vadd.f32 %v2464, %v2467
          %v2469 = vrot.slane %v2468, 4
          %v2470 = vadd.f32 %v2468, %v2469
          %v2471 = vrot.slane %v2470, 2
          %v2472 = vadd.f32 %v2470, %v2471
          %v2473 = vrot.slane %v2472, 1
          %v2474 = vadd.f32 %v2472, %v2473
          %v2475 = vmul.f32 %v2474, 0.125
          %v2476 = vsub.f32 %v2461, %v2475
          %v2477 = vadd.f32 %v2197, 10.0
          %v2478 = vadd.f32 %v2198, 10.0
          %v2479 = vrcp.pop %v2477
          %v2480 = vmul.f32 %v2477, %v2479
          %v2481 = vsub.f32 1.0, %v2480
          %v2482 = vmul.f32 %v2479, %v2481
          %v2483 = vadd.f32 %v2479, %v2482
          %vm2484 = vweird.f32 %v2477
          %vm2485 = vweird.f32 %v2479
          %vm2486 = vmor %vm2484, %vm2485
          %v2487 = vsel %vm2486, %v2479, %v2483
          %v2488 = vand.u32 2147483647, %v2477
          %vm2489 = vcmp.eq.f32.partialorder %v2488, 8.507059e+37
          %v2490 = vand.u32 %v2477, 2147483648
          %v2491 = vor.u32 1.1754944e-38, %v2490
          %v2492 = vsel %vm2489, %v2491, %v2487
          %v2493 = vmul.f32 10.0, %v2492
          %v2494 = vrcp.pop %v2478
          %v2495 = vmul.f32 %v2478, %v2494
          %v2496 = vsub.f32 1.0, %v2495
          %v2497 = vmul.f32 %v2494, %v2496
          %v2498 = vadd.f32 %v2494, %v2497
          %vm2499 = vweird.f32 %v2478
          %vm2500 = vweird.f32 %v2494
          %vm2501 = vmor %vm2499, %vm2500
          %v2502 = vsel %vm2501, %v2494, %v2498
          %v2503 = vand.u32 2147483647, %v2478
          %vm2504 = vcmp.eq.f32.partialorder %v2503, 8.507059e+37
          %v2505 = vand.u32 %v2478, 2147483648
          %v2506 = vor.u32 1.1754944e-38, %v2505
          %v2507 = vsel %vm2504, %v2506, %v2502
          %v2508 = vmul.f32 10.0, %v2507
          %v2509 = vadd.f32 %v2201, 10.0
          %v2510 = vadd.f32 %v2202, 10.0
          %v2511 = vrcp.pop %v2509
          %v2512 = vmul.f32 %v2509, %v2511
          %v2513 = vsub.f32 1.0, %v2512
          %v2514 = vmul.f32 %v2511, %v2513
          %v2515 = vadd.f32 %v2511, %v2514
          %vm2516 = vweird.f32 %v2509
          %vm2517 = vweird.f32 %v2511
          %vm2518 = vmor %vm2516, %vm2517
          %v2519 = vsel %vm2518, %v2511, %v2515
          %v2520 = vand.u32 2147483647, %v2509
          %vm2521 = vcmp.eq.f32.partialorder %v2520, 8.507059e+37
          %v2522 = vand.u32 %v2509, 2147483648
          %v2523 = vor.u32 1.1754944e-38, %v2522
          %v2524 = vsel %vm2521, %v2523, %v2519
          %v2525 = vmul.f32 10.0, %v2524
          %v2526 = vrcp.pop %v2510
          %v2527 = vmul.f32 %v2510, %v2526
          %v2528 = vsub.f32 1.0, %v2527
          %v2529 = vmul.f32 %v2526, %v2528
          %v2530 = vadd.f32 %v2526, %v2529
          %vm2531 = vweird.f32 %v2510
          %vm2532 = vweird.f32 %v2526
          %vm2533 = vmor %vm2531, %vm2532
          %v2534 = vsel %vm2533, %v2526, %v2530
          %v2535 = vand.u32 2147483647, %v2510
          %vm2536 = vcmp.eq.f32.partialorder %v2535, 8.507059e+37
          %v2537 = vand.u32 %v2510, 2147483648
          %v2538 = vor.u32 1.1754944e-38, %v2537
          %v2539 = vsel %vm2536, %v2538, %v2534
          %v2540 = vmul.f32 10.0, %v2539
          %v2541 = vadd.f32 %v2493, %v2525
          %v2542 = vadd.f32 %v2508, %v2540
          %v2543 = vmul.f32 %v2214, %v2541
          %v2544 = vmul.f32 %v2215, %v2542
          %v2545 = vadd.f32 %v2205, 10.0
          %v2546 = vadd.f32 %v2206, 10.0
          %v2547 = vrcp.pop %v2545
          %v2548 = vmul.f32 %v2545, %v2547
          %v2549 = vsub.f32 1.0, %v2548
          %v2550 = vmul.f32 %v2547, %v2549
          %v2551 = vadd.f32 %v2547, %v2550
          %vm2552 = vweird.f32 %v2545
          %vm2553 = vweird.f32 %v2547
          %vm2554 = vmor %vm2552, %vm2553
          %v2555 = vsel %vm2554, %v2547, %v2551
          %v2556 = vand.u32 2147483647, %v2545
          %vm2557 = vcmp.eq.f32.partialorder %v2556, 8.507059e+37
          %v2558 = vand.u32 %v2545, 2147483648
          %v2559 = vor.u32 1.1754944e-38, %v2558
          %v2560 = vsel %vm2557, %v2559, %v2555
          %v2561 = vmul.f32 10.0, %v2560
          %v2562 = vrcp.pop %v2546
          %v2563 = vmul.f32 %v2546, %v2562
          %v2564 = vsub.f32 1.0, %v2563
          %v2565 = vmul.f32 %v2562, %v2564
          %v2566 = vadd.f32 %v2562, %v2565
          %vm2567 = vweird.f32 %v2546
          %vm2568 = vweird.f32 %v2562
          %vm2569 = vmor %vm2567, %vm2568
          %v2570 = vsel %vm2569, %v2562, %v2566
          %v2571 = vand.u32 2147483647, %v2546
          %vm2572 = vcmp.eq.f32.partialorder %v2571, 8.507059e+37
          %v2573 = vand.u32 %v2546, 2147483648
          %v2574 = vor.u32 1.1754944e-38, %v2573
          %v2575 = vsel %vm2572, %v2574, %v2570
          %v2576 = vmul.f32 10.0, %v2575
          %v2577 = vsel %vm2316, %v2543, 0.0
          %2578 = vadd.xlane.f32.xlu0 %v2577
          %v2579 = vpop.xlane.xlu0 %2578
          %v2580 = vsel %vm2316, %v2544, 0.0
          %2581 = vadd.xlane.f32.xlu0 %v2580
          %v2582 = vpop.xlane.xlu0 %2581
          %v2583 = vadd.f32 %v2579, %v2582
          %v2584 = vrot.slane %v2583, 4
          %v2585 = vadd.f32 %v2583, %v2584
          %v2586 = vrot.slane %v2585, 2
          %v2587 = vadd.f32 %v2585, %v2586
          %v2588 = vrot.slane %v2587, 1
          %v2589 = vadd.f32 %v2587, %v2588
          %v2590 = vmul.f32 %v2589, 0.06666667
          %v2591 = vadd.f32 %v2476, %v2590
          %v2592 = vsel %vm2316, %v2561, 0.0
          %2593 = vadd.xlane.f32.xlu0 %v2592
          %v2594 = vpop.xlane.xlu0 %2593
          %v2595 = vsel %vm2316, %v2576, 0.0
          %2596 = vadd.xlane.f32.xlu0 %v2595
          %v2597 = vpop.xlane.xlu0 %2596
          %v2598 = vadd.f32 %v2594, %v2597
          %v2599 = vrot.slane %v2598, 4
          %v2600 = vadd.f32 %v2598, %v2599
          %v2601 = vrot.slane %v2600, 2
          %v2602 = vadd.f32 %v2600, %v2601
          %v2603 = vrot.slane %v2602, 1
          %v2604 = vadd.f32 %v2602, %v2603
          %v2605 = vmul.f32 %v2604, 0.125
          %v2606 = vsub.f32 %v2591, %v2605
          %v2607 = vadd.f32 %v2197, 20.0
          %v2608 = vadd.f32 %v2198, 20.0
          %v2609 = vrcp.pop %v2607
          %v2610 = vmul.f32 %v2607, %v2609
          %v2611 = vsub.f32 1.0, %v2610
          %v2612 = vmul.f32 %v2609, %v2611
          %v2613 = vadd.f32 %v2609, %v2612
          %vm2614 = vweird.f32 %v2607
          %vm2615 = vweird.f32 %v2609
          %vm2616 = vmor %vm2614, %vm2615
          %v2617 = vsel %vm2616, %v2609, %v2613
          %v2618 = vand.u32 2147483647, %v2607
          %vm2619 = vcmp.eq.f32.partialorder %v2618, 8.507059e+37
          %v2620 = vand.u32 %v2607, 2147483648
          %v2621 = vor.u32 1.1754944e-38, %v2620
          %v2622 = vsel %vm2619, %v2621, %v2617
          %v2623 = vmul.f32 20.0, %v2622
          %v2624 = vrcp.pop %v2608
          %v2625 = vmul.f32 %v2608, %v2624
          %v2626 = vsub.f32 1.0, %v2625
          %v2627 = vmul.f32 %v2624, %v2626
          %v2628 = vadd.f32 %v2624, %v2627
          %vm2629 = vweird.f32 %v2608
          %vm2630 = vweird.f32 %v2624
          %vm2631 = vmor %vm2629, %vm2630
          %v2632 = vsel %vm2631, %v2624, %v2628
          %v2633 = vand.u32 2147483647, %v2608
          %vm2634 = vcmp.eq.f32.partialorder %v2633, 8.507059e+37
          %v2635 = vand.u32 %v2608, 2147483648
          %v2636 = vor.u32 1.1754944e-38, %v2635
          %v2637 = vsel %vm2634, %v2636, %v2632
          %v2638 = vmul.f32 20.0, %v2637
          %v2639 = vadd.f32 %v2201, 20.0
          %v2640 = vadd.f32 %v2202, 20.0
          %v2641 = vrcp.pop %v2639
          %v2642 = vmul.f32 %v2639, %v2641
          %v2643 = vsub.f32 1.0, %v2642
          %v2644 = vmul.f32 %v2641, %v2643
          %v2645 = vadd.f32 %v2641, %v2644
          %vm2646 = vweird.f32 %v2639
          %vm2647 = vweird.f32 %v2641
          %vm2648 = vmor %vm2646, %vm2647
          %v2649 = vsel %vm2648, %v2641, %v2645
          %v2650 = vand.u32 2147483647, %v2639
          %vm2651 = vcmp.eq.f32.partialorder %v2650, 8.507059e+37
          %v2652 = vand.u32 %v2639, 2147483648
          %v2653 = vor.u32 1.1754944e-38, %v2652
          %v2654 = vsel %vm2651, %v2653, %v2649
          %v2655 = vmul.f32 20.0, %v2654
          %v2656 = vrcp.pop %v2640
          %v2657 = vmul.f32 %v2640, %v2656
          %v2658 = vsub.f32 1.0, %v2657
          %v2659 = vmul.f32 %v2656, %v2658
          %v2660 = vadd.f32 %v2656, %v2659
          %vm2661 = vweird.f32 %v2640
          %vm2662 = vweird.f32 %v2656
          %vm2663 = vmor %vm2661, %vm2662
          %v2664 = vsel %vm2663, %v2656, %v2660
          %v2665 = vand.u32 2147483647, %v2640
          %vm2666 = vcmp.eq.f32.partialorder %v2665, 8.507059e+37
          %v2667 = vand.u32 %v2640, 2147483648
          %v2668 = vor.u32 1.1754944e-38, %v2667
          %v2669 = vsel %vm2666, %v2668, %v2664
          %v2670 = vmul.f32 20.0, %v2669
          %v2671 = vadd.f32 %v2623, %v2655
          %v2672 = vadd.f32 %v2638, %v2670
          %v2673 = vmul.f32 %v2214, %v2671
          %v2674 = vmul.f32 %v2215, %v2672
          %v2675 = vadd.f32 %v2205, 20.0
          %v2676 = vadd.f32 %v2206, 20.0
          %v2677 = vrcp.pop %v2675
          %v2678 = vmul.f32 %v2675, %v2677
          %v2679 = vsub.f32 1.0, %v2678
          %v2680 = vmul.f32 %v2677, %v2679
          %v2681 = vadd.f32 %v2677, %v2680
          %vm2682 = vweird.f32 %v2675
          %vm2683 = vweird.f32 %v2677
          %vm2684 = vmor %vm2682, %vm2683
          %v2685 = vsel %vm2684, %v2677, %v2681
          %v2686 = vand.u32 2147483647, %v2675
          %vm2687 = vcmp.eq.f32.partialorder %v2686, 8.507059e+37
          %v2688 = vand.u32 %v2675, 2147483648
          %v2689 = vor.u32 1.1754944e-38, %v2688
          %v2690 = vsel %vm2687, %v2689, %v2685
          %v2691 = vmul.f32 20.0, %v2690
          %v2692 = vrcp.pop %v2676
          %v2693 = vmul.f32 %v2676, %v2692
          %v2694 = vsub.f32 1.0, %v2693
          %v2695 = vmul.f32 %v2692, %v2694
          %v2696 = vadd.f32 %v2692, %v2695
          %vm2697 = vweird.f32 %v2676
          %vm2698 = vweird.f32 %v2692
          %vm2699 = vmor %vm2697, %vm2698
          %v2700 = vsel %vm2699, %v2692, %v2696
          %v2701 = vand.u32 2147483647, %v2676
          %vm2702 = vcmp.eq.f32.partialorder %v2701, 8.507059e+37
          %v2703 = vand.u32 %v2676, 2147483648
          %v2704 = vor.u32 1.1754944e-38, %v2703
          %v2705 = vsel %vm2702, %v2704, %v2700
          %v2706 = vmul.f32 20.0, %v2705
          %v2707 = vsel %vm2316, %v2673, 0.0
          %2708 = vadd.xlane.f32.xlu0 %v2707
          %v2709 = vpop.xlane.xlu0 %2708
          %v2710 = vsel %vm2316, %v2674, 0.0
          %2711 = vadd.xlane.f32.xlu0 %v2710
          %v2712 = vpop.xlane.xlu0 %2711
          %v2713 = vadd.f32 %v2709, %v2712
          %v2714 = vrot.slane %v2713, 4
          %v2715 = vadd.f32 %v2713, %v2714
          %v2716 = vrot.slane %v2715, 2
          %v2717 = vadd.f32 %v2715, %v2716
          %v2718 = vrot.slane %v2717, 1
          %v2719 = vadd.f32 %v2717, %v2718
          %v2720 = vmul.f32 %v2719, 0.06666667
          %v2721 = vadd.f32 %v2606, %v2720
          %v2722 = vsel %vm2316, %v2691, 0.0
          %2723 = vadd.xlane.f32.xlu0 %v2722
          %v2724 = vpop.xlane.xlu0 %2723
          %v2725 = vsel %vm2316, %v2706, 0.0
          %2726 = vadd.xlane.f32.xlu0 %v2725
          %v2727 = vpop.xlane.xlu0 %2726
          %v2728 = vadd.f32 %v2724, %v2727
          %v2729 = vrot.slane %v2728, 4
          %v2730 = vadd.f32 %v2728, %v2729
          %v2731 = vrot.slane %v2730, 2
          %v2732 = vadd.f32 %v2730, %v2731
          %v2733 = vrot.slane %v2732, 1
          %v2734 = vadd.f32 %v2732, %v2733
          %v2735 = vmul.f32 %v2734, 0.125
          %v2736 = vsub.f32 %v2721, %v2735
          %v2737 = vadd.f32 %v2197, 40.0
          %v2738 = vadd.f32 %v2198, 40.0
          %v2739 = vrcp.pop %v2737
          %v2740 = vmul.f32 %v2737, %v2739
          %v2741 = vsub.f32 1.0, %v2740
          %v2742 = vmul.f32 %v2739, %v2741
          %v2743 = vadd.f32 %v2739, %v2742
          %vm2744 = vweird.f32 %v2737
          %vm2745 = vweird.f32 %v2739
          %vm2746 = vmor %vm2744, %vm2745
          %v2747 = vsel %vm2746, %v2739, %v2743
          %v2748 = vand.u32 2147483647, %v2737
          %vm2749 = vcmp.eq.f32.partialorder %v2748, 8.507059e+37
          %v2750 = vand.u32 %v2737, 2147483648
          %v2751 = vor.u32 1.1754944e-38, %v2750
          %v2752 = vsel %vm2749, %v2751, %v2747
          %v2753 = vmul.f32 40.0, %v2752
          %v2754 = vrcp.pop %v2738
          %v2755 = vmul.f32 %v2738, %v2754
          %v2756 = vsub.f32 1.0, %v2755
          %v2757 = vmul.f32 %v2754, %v2756
          %v2758 = vadd.f32 %v2754, %v2757
          %vm2759 = vweird.f32 %v2738
          %vm2760 = vweird.f32 %v2754
          %vm2761 = vmor %vm2759, %vm2760
          %v2762 = vsel %vm2761, %v2754, %v2758
          %v2763 = vand.u32 2147483647, %v2738
          %vm2764 = vcmp.eq.f32.partialorder %v2763, 8.507059e+37
          %v2765 = vand.u32 %v2738, 2147483648
          %v2766 = vor.u32 1.1754944e-38, %v2765
          %v2767 = vsel %vm2764, %v2766, %v2762
          %v2768 = vmul.f32 40.0, %v2767
          %v2769 = vadd.f32 %v2201, 40.0
          %v2770 = vadd.f32 %v2202, 40.0
          %v2771 = vrcp.pop %v2769
          %v2772 = vmul.f32 %v2769, %v2771
          %v2773 = vsub.f32 1.0, %v2772
          %v2774 = vmul.f32 %v2771, %v2773
          %v2775 = vadd.f32 %v2771, %v2774
          %vm2776 = vweird.f32 %v2769
          %vm2777 = vweird.f32 %v2771
          %vm2778 = vmor %vm2776, %vm2777
          %v2779 = vsel %vm2778, %v2771, %v2775
          %v2780 = vand.u32 2147483647, %v2769
          %vm2781 = vcmp.eq.f32.partialorder %v2780, 8.507059e+37
          %v2782 = vand.u32 %v2769, 2147483648
          %v2783 = vor.u32 1.1754944e-38, %v2782
          %v2784 = vsel %vm2781, %v2783, %v2779
          %v2785 = vmul.f32 40.0, %v2784
          %v2786 = vrcp.pop %v2770
          %v2787 = vmul.f32 %v2770, %v2786
          %v2788 = vsub.f32 1.0, %v2787
          %v2789 = vmul.f32 %v2786, %v2788
          %v2790 = vadd.f32 %v2786, %v2789
          %vm2791 = vweird.f32 %v2770
          %vm2792 = vweird.f32 %v2786
          %vm2793 = vmor %vm2791, %vm2792
          %v2794 = vsel %vm2793, %v2786, %v2790
          %v2795 = vand.u32 2147483647, %v2770
          %vm2796 = vcmp.eq.f32.partialorder %v2795, 8.507059e+37
          %v2797 = vand.u32 %v2770, 2147483648
          %v2798 = vor.u32 1.1754944e-38, %v2797
          %v2799 = vsel %vm2796, %v2798, %v2794
          %v2800 = vmul.f32 40.0, %v2799
          %v2801 = vadd.f32 %v2753, %v2785
          %v2802 = vadd.f32 %v2768, %v2800
          %v2803 = vmul.f32 %v2214, %v2801
          %v2804 = vmul.f32 %v2215, %v2802
          %v2805 = vadd.f32 %v2205, 40.0
          %v2806 = vadd.f32 %v2206, 40.0
          %v2807 = vrcp.pop %v2805
          %v2808 = vmul.f32 %v2805, %v2807
          %v2809 = vsub.f32 1.0, %v2808
          %v2810 = vmul.f32 %v2807, %v2809
          %v2811 = vadd.f32 %v2807, %v2810
          %vm2812 = vweird.f32 %v2805
          %vm2813 = vweird.f32 %v2807
          %vm2814 = vmor %vm2812, %vm2813
          %v2815 = vsel %vm2814, %v2807, %v2811
          %v2816 = vand.u32 2147483647, %v2805
          %vm2817 = vcmp.eq.f32.partialorder %v2816, 8.507059e+37
          %v2818 = vand.u32 %v2805, 2147483648
          %v2819 = vor.u32 1.1754944e-38, %v2818
          %v2820 = vsel %vm2817, %v2819, %v2815
          %v2821 = vmul.f32 40.0, %v2820
          %v2822 = vrcp.pop %v2806
          %v2823 = vmul.f32 %v2806, %v2822
          %v2824 = vsub.f32 1.0, %v2823
          %v2825 = vmul.f32 %v2822, %v2824
          %v2826 = vadd.f32 %v2822, %v2825
          %vm2827 = vweird.f32 %v2806
          %vm2828 = vweird.f32 %v2822
          %vm2829 = vmor %vm2827, %vm2828
          %v2830 = vsel %vm2829, %v2822, %v2826
          %v2831 = vand.u32 2147483647, %v2806
          %vm2832 = vcmp.eq.f32.partialorder %v2831, 8.507059e+37
          %v2833 = vand.u32 %v2806, 2147483648
          %v2834 = vor.u32 1.1754944e-38, %v2833
          %v2835 = vsel %vm2832, %v2834, %v2830
          %v2836 = vmul.f32 40.0, %v2835
          %v2837 = vsel %vm2316, %v2803, 0.0
          %2838 = vadd.xlane.f32.xlu0 %v2837
          %v2839 = vpop.xlane.xlu0 %2838
          %v2840 = vsel %vm2316, %v2804, 0.0
          %2841 = vadd.xlane.f32.xlu0 %v2840
          %v2842 = vpop.xlane.xlu0 %2841
          %v2843 = vadd.f32 %v2839, %v2842
          %v2844 = vrot.slane %v2843, 4
          %v2845 = vadd.f32 %v2843, %v2844
          %v2846 = vrot.slane %v2845, 2
          %v2847 = vadd.f32 %v2845, %v2846
          %v2848 = vrot.slane %v2847, 1
          %v2849 = vadd.f32 %v2847, %v2848
          %v2850 = vmul.f32 %v2849, 0.06666667
          %v2851 = vadd.f32 %v2736, %v2850
          %v2852 = vsel %vm2316, %v2821, 0.0
          %2853 = vadd.xlane.f32.xlu0 %v2852
          %v2854 = vpop.xlane.xlu0 %2853
          %v2855 = vsel %vm2316, %v2836, 0.0
          %2856 = vadd.xlane.f32.xlu0 %v2855
          %v2857 = vpop.xlane.xlu0 %2856
          %v2858 = vadd.f32 %v2854, %v2857
          %v2859 = vrot.slane %v2858, 4
          %v2860 = vadd.f32 %v2858, %v2859
          %v2861 = vrot.slane %v2860, 2
          %v2862 = vadd.f32 %v2860, %v2861
          %v2863 = vrot.slane %v2862, 1
          %v2864 = vadd.f32 %v2862, %v2863
          %v2865 = vmul.f32 %v2864, 0.125
          %v2866 = vsub.f32 %v2851, %v2865
          %v2867 = vadd.f32 %v2197, 100.0
          %v2868 = vadd.f32 %v2198, 100.0
          %v2869 = vrcp.pop %v2867
          %v2870 = vmul.f32 %v2867, %v2869
          %v2871 = vsub.f32 1.0, %v2870
          %v2872 = vmul.f32 %v2869, %v2871
          %v2873 = vadd.f32 %v2869, %v2872
          %vm2874 = vweird.f32 %v2867
          %vm2875 = vweird.f32 %v2869
          %vm2876 = vmor %vm2874, %vm2875
          %v2877 = vsel %vm2876, %v2869, %v2873
          %v2878 = vand.u32 2147483647, %v2867
          %vm2879 = vcmp.eq.f32.partialorder %v2878, 8.507059e+37
          %v2880 = vand.u32 %v2867, 2147483648
          %v2881 = vor.u32 1.1754944e-38, %v2880
          %v2882 = vsel %vm2879, %v2881, %v2877
          %v2883 = vmul.f32 100.0, %v2882
          %v2884 = vrcp.pop %v2868
          %v2885 = vmul.f32 %v2868, %v2884
          %v2886 = vsub.f32 1.0, %v2885
          %v2887 = vmul.f32 %v2884, %v2886
          %v2888 = vadd.f32 %v2884, %v2887
          %vm2889 = vweird.f32 %v2868
          %vm2890 = vweird.f32 %v2884
          %vm2891 = vmor %vm2889, %vm2890
          %v2892 = vsel %vm2891, %v2884, %v2888
          %v2893 = vand.u32 2147483647, %v2868
          %vm2894 = vcmp.eq.f32.partialorder %v2893, 8.507059e+37
          %v2895 = vand.u32 %v2868, 2147483648
          %v2896 = vor.u32 1.1754944e-38, %v2895
          %v2897 = vsel %vm2894, %v2896, %v2892
          %v2898 = vmul.f32 100.0, %v2897
          %v2899 = vadd.f32 %v2201, 100.0
          %v2900 = vadd.f32 %v2202, 100.0
          %v2901 = vrcp.pop %v2899
          %v2902 = vmul.f32 %v2899, %v2901
          %v2903 = vsub.f32 1.0, %v2902
          %v2904 = vmul.f32 %v2901, %v2903
          %v2905 = vadd.f32 %v2901, %v2904
          %vm2906 = vweird.f32 %v2899
          %vm2907 = vweird.f32 %v2901
          %vm2908 = vmor %vm2906, %vm2907
          %v2909 = vsel %vm2908, %v2901, %v2905
          %v2910 = vand.u32 2147483647, %v2899
          %vm2911 = vcmp.eq.f32.partialorder %v2910, 8.507059e+37
          %v2912 = vand.u32 %v2899, 2147483648
          %v2913 = vor.u32 1.1754944e-38, %v2912
          %v2914 = vsel %vm2911, %v2913, %v2909
          %v2915 = vmul.f32 100.0, %v2914
          %v2916 = vrcp.pop %v2900
          %v2917 = vmul.f32 %v2900, %v2916
          %v2918 = vsub.f32 1.0, %v2917
          %v2919 = vmul.f32 %v2916, %v2918
          %v2920 = vadd.f32 %v2916, %v2919
          %vm2921 = vweird.f32 %v2900
          %vm2922 = vweird.f32 %v2916
          %vm2923 = vmor %vm2921, %vm2922
          %v2924 = vsel %vm2923, %v2916, %v2920
          %v2925 = vand.u32 2147483647, %v2900
          %vm2926 = vcmp.eq.f32.partialorder %v2925, 8.507059e+37
          %v2927 = vand.u32 %v2900, 2147483648
          %v2928 = vor.u32 1.1754944e-38, %v2927
          %v2929 = vsel %vm2926, %v2928, %v2924
          %v2930 = vmul.f32 100.0, %v2929
          %v2931 = vadd.f32 %v2883, %v2915
          %v2932 = vadd.f32 %v2898, %v2930
          %v2933 = vmul.f32 %v2214, %v2931
          %v2934 = vmul.f32 %v2215, %v2932
          %v2935 = vadd.f32 %v2205, 100.0
          %v2936 = vadd.f32 %v2206, 100.0
          %v2937 = vrcp.pop %v2935
          %v2938 = vmul.f32 %v2935, %v2937
          %v2939 = vsub.f32 1.0, %v2938
          %v2940 = vmul.f32 %v2937, %v2939
          %v2941 = vadd.f32 %v2937, %v2940
          %vm2942 = vweird.f32 %v2935
          %vm2943 = vweird.f32 %v2937
          %vm2944 = vmor %vm2942, %vm2943
          %v2945 = vsel %vm2944, %v2937, %v2941
          %v2946 = vand.u32 2147483647, %v2935
          %vm2947 = vcmp.eq.f32.partialorder %v2946, 8.507059e+37
          %v2948 = vand.u32 %v2935, 2147483648
          %v2949 = vor.u32 1.1754944e-38, %v2948
          %v2950 = vsel %vm2947, %v2949, %v2945
          %v2951 = vmul.f32 100.0, %v2950
          %v2952 = vrcp.pop %v2936
          %v2953 = vmul.f32 %v2936, %v2952
          %v2954 = vsub.f32 1.0, %v2953
          %v2955 = vmul.f32 %v2952, %v2954
          %v2956 = vadd.f32 %v2952, %v2955
          %vm2957 = vweird.f32 %v2936
          %vm2958 = vweird.f32 %v2952
          %vm2959 = vmor %vm2957, %vm2958
          %v2960 = vsel %vm2959, %v2952, %v2956
          %v2961 = vand.u32 2147483647, %v2936
          %vm2962 = vcmp.eq.f32.partialorder %v2961, 8.507059e+37
          %v2963 = vand.u32 %v2936, 2147483648
          %v2964 = vor.u32 1.1754944e-38, %v2963
          %v2965 = vsel %vm2962, %v2964, %v2960
          %v2966 = vmul.f32 100.0, %v2965
          %v2967 = vsel %vm2316, %v2933, 0.0
          %2968 = vadd.xlane.f32.xlu0 %v2967
          %v2969 = vpop.xlane.xlu0 %2968
          %v2970 = vsel %vm2316, %v2934, 0.0
          %2971 = vadd.xlane.f32.xlu0 %v2970
          %v2972 = vpop.xlane.xlu0 %2971
          %v2973 = vadd.f32 %v2969, %v2972
          %v2974 = vrot.slane %v2973, 4
          %v2975 = vadd.f32 %v2973, %v2974
          %v2976 = vrot.slane %v2975, 2
          %v2977 = vadd.f32 %v2975, %v2976
          %v2978 = vrot.slane %v2977, 1
          %v2979 = vadd.f32 %v2977, %v2978
          %v2980 = vmul.f32 %v2979, 0.06666667
          %v2981 = vadd.f32 %v2866, %v2980
          %v2982 = vsel %vm2316, %v2951, 0.0
          %2983 = vadd.xlane.f32.xlu0 %v2982
          %v2984 = vpop.xlane.xlu0 %2983
          %v2985 = vsel %vm2316, %v2966, 0.0
          %2986 = vadd.xlane.f32.xlu0 %v2985
          %v2987 = vpop.xlane.xlu0 %2986
          %v2988 = vadd.f32 %v2984, %v2987
          %v2989 = vrot.slane %v2988, 4
          %v2990 = vadd.f32 %v2988, %v2989
          %v2991 = vrot.slane %v2990, 2
          %v2992 = vadd.f32 %v2990, %v2991
          %v2993 = vrot.slane %v2992, 1
          %v2994 = vadd.f32 %v2992, %v2993
          %v2995 = vmul.f32 %v2994, 0.125
          %v2996 = vsub.f32 %v2981, %v2995
          %v2997 = vadd.f32 %v2197, 200.0
          %v2998 = vadd.f32 %v2198, 200.0
          %v2999 = vrcp.pop %v2997
          %v3000 = vmul.f32 %v2997, %v2999
          %v3001 = vsub.f32 1.0, %v3000
          %v3002 = vmul.f32 %v2999, %v3001
          %v3003 = vadd.f32 %v2999, %v3002
          %vm3004 = vweird.f32 %v2997
          %vm3005 = vweird.f32 %v2999
          %vm3006 = vmor %vm3004, %vm3005
          %v3007 = vsel %vm3006, %v2999, %v3003
          %v3008 = vand.u32 2147483647, %v2997
          %vm3009 = vcmp.eq.f32.partialorder %v3008, 8.507059e+37
          %v3010 = vand.u32 %v2997, 2147483648
          %v3011 = vor.u32 1.1754944e-38, %v3010
          %v3012 = vsel %vm3009, %v3011, %v3007
          %v3013 = vmul.f32 200.0, %v3012
          %v3014 = vrcp.pop %v2998
          %v3015 = vmul.f32 %v2998, %v3014
          %v3016 = vsub.f32 1.0, %v3015
          %v3017 = vmul.f32 %v3014, %v3016
          %v3018 = vadd.f32 %v3014, %v3017
          %vm3019 = vweird.f32 %v2998
          %vm3020 = vweird.f32 %v3014
          %vm3021 = vmor %vm3019, %vm3020
          %v3022 = vsel %vm3021, %v3014, %v3018
          %v3023 = vand.u32 2147483647, %v2998
          %vm3024 = vcmp.eq.f32.partialorder %v3023, 8.507059e+37
          %v3025 = vand.u32 %v2998, 2147483648
          %v3026 = vor.u32 1.1754944e-38, %v3025
          %v3027 = vsel %vm3024, %v3026, %v3022
          %v3028 = vmul.f32 200.0, %v3027
          %v3029 = vadd.f32 %v2201, 200.0
          %v3030 = vadd.f32 %v2202, 200.0
          %v3031 = vrcp.pop %v3029
          %v3032 = vmul.f32 %v3029, %v3031
          %v3033 = vsub.f32 1.0, %v3032
          %v3034 = vmul.f32 %v3031, %v3033
          %v3035 = vadd.f32 %v3031, %v3034
          %vm3036 = vweird.f32 %v3029
          %vm3037 = vweird.f32 %v3031
          %vm3038 = vmor %vm3036, %vm3037
          %v3039 = vsel %vm3038, %v3031, %v3035
          %v3040 = vand.u32 2147483647, %v3029
          %vm3041 = vcmp.eq.f32.partialorder %v3040, 8.507059e+37
          %v3042 = vand.u32 %v3029, 2147483648
          %v3043 = vor.u32 1.1754944e-38, %v3042
          %v3044 = vsel %vm3041, %v3043, %v3039
          %v3045 = vmul.f32 200.0, %v3044
          %v3046 = vrcp.pop %v3030
          %v3047 = vmul.f32 %v3030, %v3046
          %v3048 = vsub.f32 1.0, %v3047
          %v3049 = vmul.f32 %v3046, %v3048
          %v3050 = vadd.f32 %v3046, %v3049
          %vm3051 = vweird.f32 %v3030
          %vm3052 = vweird.f32 %v3046
          %vm3053 = vmor %vm3051, %vm3052
          %v3054 = vsel %vm3053, %v3046, %v3050
          %v3055 = vand.u32 2147483647, %v3030
          %vm3056 = vcmp.eq.f32.partialorder %v3055, 8.507059e+37
          %v3057 = vand.u32 %v3030, 2147483648
          %v3058 = vor.u32 1.1754944e-38, %v3057
          %v3059 = vsel %vm3056, %v3058, %v3054
          %v3060 = vmul.f32 200.0, %v3059
          %v3061 = vadd.f32 %v3013, %v3045
          %v3062 = vadd.f32 %v3028, %v3060
          %v3063 = vmul.f32 %v2214, %v3061
          %v3064 = vmul.f32 %v2215, %v3062
          %v3065 = vadd.f32 %v2205, 200.0
          %v3066 = vadd.f32 %v2206, 200.0
          %v3067 = vrcp.pop %v3065
          %v3068 = vmul.f32 %v3065, %v3067
          %v3069 = vsub.f32 1.0, %v3068
          %v3070 = vmul.f32 %v3067, %v3069
          %v3071 = vadd.f32 %v3067, %v3070
          %vm3072 = vweird.f32 %v3065
          %vm3073 = vweird.f32 %v3067
          %vm3074 = vmor %vm3072, %vm3073
          %v3075 = vsel %vm3074, %v3067, %v3071
          %v3076 = vand.u32 2147483647, %v3065
          %vm3077 = vcmp.eq.f32.partialorder %v3076, 8.507059e+37
          %v3078 = vand.u32 %v3065, 2147483648
          %v3079 = vor.u32 1.1754944e-38, %v3078
          %v3080 = vsel %vm3077, %v3079, %v3075
          %v3081 = vmul.f32 200.0, %v3080
          %v3082 = vrcp.pop %v3066
          %v3083 = vmul.f32 %v3066, %v3082
          %v3084 = vsub.f32 1.0, %v3083
          %v3085 = vmul.f32 %v3082, %v3084
          %v3086 = vadd.f32 %v3082, %v3085
          %vm3087 = vweird.f32 %v3066
          %vm3088 = vweird.f32 %v3082
          %vm3089 = vmor %vm3087, %vm3088
          %v3090 = vsel %vm3089, %v3082, %v3086
          %v3091 = vand.u32 2147483647, %v3066
          %vm3092 = vcmp.eq.f32.partialorder %v3091, 8.507059e+37
          %v3093 = vand.u32 %v3066, 2147483648
          %v3094 = vor.u32 1.1754944e-38, %v3093
          %v3095 = vsel %vm3092, %v3094, %v3090
          %v3096 = vmul.f32 200.0, %v3095
          %v3097 = vsel %vm2316, %v3063, 0.0
          %3098 = vadd.xlane.f32.xlu0 %v3097
          %v3099 = vpop.xlane.xlu0 %3098
          %v3100 = vsel %vm2316, %v3064, 0.0
          %3101 = vadd.xlane.f32.xlu0 %v3100
          %v3102 = vpop.xlane.xlu0 %3101
          %v3103 = vadd.f32 %v3099, %v3102
          %v3104 = vrot.slane %v3103, 4
          %v3105 = vadd.f32 %v3103, %v3104
          %v3106 = vrot.slane %v3105, 2
          %v3107 = vadd.f32 %v3105, %v3106
          %v3108 = vrot.slane %v3107, 1
          %v3109 = vadd.f32 %v3107, %v3108
          %v3110 = vmul.f32 %v3109, 0.06666667
          %v3111 = vadd.f32 %v2996, %v3110
          %v3112 = vsel %vm2316, %v3081, 0.0
          %3113 = vadd.xlane.f32.xlu0 %v3112
          %v3114 = vpop.xlane.xlu0 %3113
          %v3115 = vsel %vm2316, %v3096, 0.0
          %3116 = vadd.xlane.f32.xlu0 %v3115
          %v3117 = vpop.xlane.xlu0 %3116
          %v3118 = vadd.f32 %v3114, %v3117
          %v3119 = vrot.slane %v3118, 4
          %v3120 = vadd.f32 %v3118, %v3119
          %v3121 = vrot.slane %v3120, 2
          %v3122 = vadd.f32 %v3120, %v3121
          %v3123 = vrot.slane %v3122, 1
          %v3124 = vadd.f32 %v3122, %v3123
          %v3125 = vmul.f32 %v3124, 0.125
          %v3126 = vsub.f32 %v3111, %v3125
          %vm3127 = vcmp.eq.s32.totalorder %v2080, 1
          %v3128 = vld [vmem:[%s455] sm:$0xff]
          %v3129 = vsel %vm3127, %v3126, %v3128
          %3130 = vst [vmem:[%s455] sm:$0xff] %v3129
        $region110: #{tpu_custom_call.1} parent=89 // pred_fallthru
          _
        %s3131 = sand.u32 %s237, 1
        %s3132 = scalar_lea.sflag [#allocation6], %s3131
        %s3133 = sand.u32 %s237, 1
        %s3134 = smul.addr %s3133, 8
        %s3135 = scalar_lea.vmem [#allocation10], %s3134
        // Predicated region
        $region111: #{tpu_custom_call.1} parent=89 // pred_check
          %p3136 = pneg %p247
        $region112: #{tpu_custom_call.1} parent=89 // pred_check_branch
          %3138 = sbr.rel (%p3136) target = $region114
        $region113: #{tpu_custom_call.1} parent=89 // pred_region
          %3140 = vsyncadd %s3132, 0
          %s3141 = smul.addr %s25, 8
          %s3142 = scalar_lea.hbm %s9, %s3141
          %s3144 = sshll.u32 %s3135, 4
          %s3145 = int_to_ptr.vmem [resolvable:$true] %s3144
          %s3146 = sshll.u32 %s3142, 4
          %s3147 = int_to_ptr.hbm [resolvable:$true] %s3146
          %3149 = dma.vmem_to_hbm [thread:$0]  %s3145, 128, %s3147, %s3132
        $region114: #{tpu_custom_call.1} parent=89 // pred_fallthru
          _
      $region90: #{tpu_custom_call.1} parent=5 // pred_fallthru
        _
      %p3150 = scmp.le.s32.totalorder 2, %s20
      // Predicated region
      $region115: #{tpu_custom_call.1} parent=5 // pred_check
        %p3151 = pneg %p3150
      $region116: #{tpu_custom_call.1} parent=5 // pred_check_branch
        %3153 = sbr.rel (%p3151) target = $region118
      $region117: #{tpu_custom_call.1} parent=5 // pred_region
        %s3154 = ssub.s32 %s20, 2
        // Predicated region
        $region119: #{tpu_custom_call.1} parent=117 // pred_check
          %p3155 = pneg %p253
        $region120: #{tpu_custom_call.1} parent=117 // pred_check_branch
          %3157 = sbr.rel (%p3155) target = $region122
        $region121: #{tpu_custom_call.1} parent=117 // pred_region
          %s3158 = sand.u32 %s238, 1
          %s3159 = scalar_lea.sflag [#allocation6], %s3158
          %s3160 = sand.u32 %s238, 1
          %s3161 = smul.addr %s3160, 8
          %s3162 = scalar_lea.vmem [#allocation10], %s3161
          %3164 = dma.done %s3159, 128
        $region122: #{tpu_custom_call.1} parent=117 // pred_fallthru
          _
      $region118: #{tpu_custom_call.1} parent=5 // pred_fallthru
        _
    $region6: #{tpu_custom_call.1} parent=1 // loop_footer
      %s24 = sadd.s32 1, %s20
    $region7: #{tpu_custom_call.1} parent=1 // loop_footer_branch
      %19 = sbr.rel target = $region3
    $region8: #{tpu_custom_call.1} parent=1 // loop_exit
      _
    %3165 = vsyncpa [#allocation5], 1
    %s3166 = scalar_lea.sflag [#allocation5], 1
    %3167 = vsyncpa %s3166, 1
    %3168 = vsyncpa [#allocation8], 1
    %3169 = vsyncpa [#allocation6], 1
    %s3170 = scalar_lea.sflag [#allocation6], 1
    %3171 = vsyncpa %s3170, 1

</llo_original>
